<compile_context>
chip_gen: v6e
topology: v6e:2x2x1
jax: 0.10.0
libtpu: 0.0.40
codegen_flags: <defaults>
</compile_context>

<pallas_src>
import jax
import jax.numpy as jnp
from jax import lax
from jax.experimental import pallas as pl
from jax.experimental.pallas import tpu as pltpu


# Which rows/cols of the 3x3 kernel collapse onto each 2x2 tap, per output phase.
#   phase 0: tap 0 <- kernel row 0        ; tap 1 <- kernel rows 1, 2
#   phase 1: tap 0 <- kernel rows 0, 1    ; tap 1 <- kernel row 2
_GROUPS = {(0, 0): (0,), (0, 1): (1, 2), (1, 0): (0, 1), (1, 1): (2,)}


def _phase_weights(weight_oihw):
    """PyTorch (Cout, Cin, 3, 3) -> (4, 4, Cin, Cout), indexed [py*2+px, r*2+c]."""
    w = jnp.transpose(weight_oihw, (2, 3, 1, 0)).astype(jnp.float32)  # (ky, kx, Cin, Cout)
    phases = []
    for py in range(2):
        for px in range(2):
            taps = []
            for r in range(2):
                for c in range(2):
                    acc = None
                    for ky in _GROUPS[(py, r)]:
                        for kx in _GROUPS[(px, c)]:
                            acc = w[ky, kx] if acc is None else acc + w[ky, kx]
                    taps.append(acc)
            phases.append(jnp.stack(taps))
    return jnp.stack(phases)  # (4, 4, Cin, Cout)


def _vmem_limit_bytes():
    """Explicit scoped-VMEM limit: above the 16/32 MiB defaults, but <= 3/4 of
    physical VMEM so it is also safe on v7x (64 MiB physical)."""
    cap = 64 * 1024 * 1024
    try:
        cap = int(pltpu.get_tpu_info().vmem_capacity_bytes)
    except Exception:
        pass
    return min(48 * 1024 * 1024, (3 * cap) // 4)


def _pick_tile_h(H, W, C, budget_bytes):
    """Largest divisor of H whose double-buffered in/out row bands fit the budget
    (accounts for (8,128) lane/sublane padding of the small minor dims)."""
    lanes, subl = 128, 8
    cpad = -(-C // lanes) * lanes
    wp_rows = -(-(W + 2) // subl) * subl
    w_rows = -(-W // subl) * subl

    def per_step(th):
        in_b = th * wp_rows * cpad * 4          # main input band block
        out_b = 4 * th * w_rows * cpad * 4      # 4-phase output band block
        band = (th + 2) * wp_rows * cpad * 4    # VMEM scratch halo band (1 copy)
        return 2 * (in_b + out_b) + band        # x2: double-buffered pipeline

    divisors = [d for d in range(1, H + 1) if H % d == 0]
    fitting = [d for d in divisors if per_step(d) <= budget_bytes]
    return max(fitting) if fitting else divisors[0]


def _upsample_conv_kernel(x_ref, h0_ref, h1_ref, w_ref, b_ref, o_ref, band_ref):
    """One (batch, row-tile) step.

    x_ref:    (1, TH, W+2, C)  main band of the zero-padded low-res NHWC input
    h0_ref:   (1, 1,  W+2, C)  halo row TH   (first row below the main band)
    h1_ref:   (1, 1,  W+2, C)  halo row TH+1
    w_ref:    (4, 4, C, C)     pre-combined phase weights [py*2+px, r*2+c, Cin, Cout]
    b_ref:    (1, C)           conv bias
    o_ref:    (4, TH, W, C)    the four phase outputs of this band
    band_ref: (TH+2, W+2, C)   VMEM scratch: main band + bottom halo rows
    """
    TH = x_ref.shape[1]
    Wp = x_ref.shape[2]
    C = x_ref.shape[3]
    W = Wp - 2

    # Assemble the halo band once in VMEM scratch so every tap below is a cheap
    # static-offset slice of one contiguous band.
    band_ref[0:TH] = x_ref[0]
    band_ref[TH:TH + 1] = h0_ref[0]
    band_ref[TH + 1:TH + 2] = h1_ref[0]

    bias = b_ref[...]  # (1, C)

    # Phase (sub-pixel) decomposition of conv3x3(nearest_2x(x)):
    #   out[2a+py, 2b+px] = sum_{r,c in {0,1}} band[a+py+r, b+px+c] @ Weff[py,px,r,c]
    # i.e. 4 taps per output on the low-res input instead of 9 on the 4x image.
    for py in range(2):
        for px in range(2):
            acc = jnp.zeros((TH * W, C), jnp.float32)
            for r in range(2):
                for c in range(2):
                    patch = band_ref[py + r:py + r + TH, px + c:px + c + W, :]
                    acc = acc + jnp.dot(
                        patch.reshape(TH * W, C),
                        w_ref[2 * py + px, 2 * r + c],
                        preferred_element_type=jnp.float32,
                    )
            acc = acc + bias
            o_ref[2 * py + px] = acc.reshape(TH, W, C).astype(o_ref.dtype)


def upsample_forward(x_nchw, weight_oihw, bias, *, tile_h=None):
    """Forward pass matching the PyTorch module.

    x_nchw:      (B, C, H, W)   float32
    weight_oihw: (C, C, 3, 3)   PyTorch Conv2d weight layout
    bias:        (C,)
    returns:     (B, C, 2H, 2W)
    """
    B, C, H, W = x_nchw.shape
    Ho, Wo = 2 * H, 2 * W
    Wp = W + 2

    vmem_limit = _vmem_limit_bytes()
    if tile_h is None:
        tile_h = _pick_tile_h(H, W, C, budget_bytes=(2 * vmem_limit) // 3)
    assert H % tile_h == 0, (H, tile_h)
    TH = int(tile_h)

    # NCHW -> NHWC (channels on lanes) and zero-pad the *low-res* image by 1.
    # (The conv padding is the only thing materialized; the 2x upsample is not.)
    x = jnp.transpose(x_nchw, (0, 2, 3, 1))
    xp = jnp.pad(x, ((0, 0), (1, 1), (1, 1), (0, 0)))        # (B, H+2, W+2, C)

    w_eff = _phase_weights(weight_oihw)                       # (4, 4, Cin, Cout)
    b2 = bias.reshape(1, C).astype(jnp.float32)

    grid = (B, H // TH)

    out_k = pl.pallas_call(
        _upsample_conv_kernel,
        out_shape=jax.ShapeDtypeStruct((B * 4, H, W, C), x_nchw.dtype),
        grid=grid,
        in_specs=[
            # main band: padded low-res rows [t*TH, t*TH + TH)
            pl.BlockSpec((1, TH, Wp, C), lambda b, t: (b, t, 0, 0)),
            # bottom halo rows t*TH + TH and t*TH + TH + 1 (same array, 1-row blocks)
            pl.BlockSpec((1, 1, Wp, C), lambda b, t: (b, t * TH + TH, 0, 0)),
            pl.BlockSpec((1, 1, Wp, C), lambda b, t: (b, t * TH + TH + 1, 0, 0)),
            pl.BlockSpec((4, 4, C, C), lambda b, t: (0, 0, 0, 0)),
            pl.BlockSpec((1, C), lambda b, t: (0, 0)),
        ],
        out_specs=pl.BlockSpec((4, TH, W, C), lambda b, t: (b, t, 0, 0)),
        scratch_shapes=[pltpu.VMEM((TH + 2, Wp, C), xp.dtype)],
        compiler_params=pltpu.CompilerParams(
            dimension_semantics=("parallel", "parallel"),
            vmem_limit_bytes=vmem_limit,
        ),
    )(xp, xp, xp, w_eff, b2)

    # (B*4, H, W, C) -> NCHW (B, C, 2H, 2W): interleave the four phases.
    out = out_k.reshape(B, 2, 2, H, W, C)              # [b, py, px, a, w, co]
    out = jnp.transpose(out, (0, 5, 3, 1, 4, 2))        # [b, co, a, py, w, px]
    return out.reshape(B, C, Ho, Wo)


def _reference(x_nchw, weight_oihw, bias):
    """Pure-JAX reference (nearest 2x + conv) for verification."""
    x = jnp.repeat(jnp.repeat(x_nchw, 2, axis=2), 2, axis=3)
    y = lax.conv_general_dilated(
        x, weight_oihw,
        window_strides=(1, 1), padding=((1, 1), (1, 1)),
        dimension_numbers=("NCHW", "OIHW", "NCHW"),
        precision=lax.Precision.HIGHEST,
    )
    return y + bias[None, :, None, None]


if __name__ == "__main__":
    key = jax.random.PRNGKey(0)
    kx, kw, kb = jax.random.split(key, 3)

    B, C, H, W = 2, 4, 16, 16
    x = jax.random.normal(kx, (B, C, H, W), dtype=jnp.float32)

    # Deterministic synthetic Conv2d(C, C, 3) parameters (PyTorch OIHW layout).
    fan_in = C * 3 * 3
    bound = 1.0 / (fan_in ** 0.5)
    weight = jax.random.uniform(kw, (C, C, 3, 3), jnp.float32, -bound, bound)
    bias = jax.random.uniform(kb, (C,), jnp.float32, -bound, bound)

    # tile_h=8 -> grid (B=2, row_tiles=2): exercises the halo band and both grid axes.
    y = jax.block_until_ready(upsample_forward(x, weight, bias, tile_h=8))
    assert y.shape == (B, C, 2 * H, 2 * W), y.shape

    y_ref = jax.block_until_ready(_reference(x, weight, bias))
    err = float(jnp.max(jnp.abs(y - y_ref)))
    assert jnp.allclose(y, y_ref, atol=1e-4, rtol=1e-4), err

    print("KERNEL_OK")
</pallas_src>

<mosaic_0001>
module attributes {stable_mosaic.version = 11 : i64} {
  func.func @_upsample_conv_kernel(%arg0: i32, %arg1: i32, %arg2: memref<1x8x18x4xf32, #tpu.memory_space<vmem>>, %arg3: memref<1x1x18x4xf32, #tpu.memory_space<vmem>>, %arg4: memref<1x1x18x4xf32, #tpu.memory_space<vmem>>, %arg5: memref<4x4x4x4xf32, #tpu.memory_space<vmem>>, %arg6: memref<1x4xf32, #tpu.memory_space<vmem>>, %arg7: memref<4x8x16x4xf32, #tpu.memory_space<vmem>>, %arg8: memref<10x18x4xf32, #tpu.memory_space<vmem>>) attributes {dimension_semantics = [#tpu.dimension_semantics<parallel>, #tpu.dimension_semantics<parallel>], iteration_bounds = array<i64: 2, 2>, scalar_prefetch = 0 : i64, scratch_operands = 1 : i64, tpu.core_type = #tpu.core_type<tc>, window_params = [{transform_indices = @transform_0, window_bounds = array<i64: 1, 8, 18, 4>}, {transform_indices = @transform_1, window_bounds = array<i64: 1, 1, 18, 4>}, {transform_indices = @transform_2, window_bounds = array<i64: 1, 1, 18, 4>}, {pipeline_mode = #tpu.pipeline_mode<synchronous>, transform_indices = @transform_3, window_bounds = array<i64: 4, 4, 4, 4>}, {pipeline_mode = #tpu.pipeline_mode<synchronous>, transform_indices = @transform_4, window_bounds = array<i64: 1, 4>}, {transform_indices = @transform_5, window_bounds = array<i64: 4, 8, 16, 4>}]} {
    %c0 = arith.constant 0 : index
    %c0_0 = arith.constant 0 : index
    %c0_1 = arith.constant 0 : index
    %c0_2 = arith.constant 0 : index
    %0 = vector.load %arg2[%c0, %c0_0, %c0_1, %c0_2] : memref<1x8x18x4xf32, #tpu.memory_space<vmem>>, vector<1x8x18x4xf32>
    %1 = vector.shape_cast %0 : vector<1x8x18x4xf32> to vector<8x18x4xf32>
    %c0_3 = arith.constant 0 : index
    %c0_4 = arith.constant 0 : index
    %c0_5 = arith.constant 0 : index
    %2 = vector.load %arg8[%c0_3, %c0_4, %c0_5] : memref<10x18x4xf32, #tpu.memory_space<vmem>>, vector<8x18x4xf32>
    tpu.vector_store %arg8[%c0_3, %c0_4, %c0_5], %1 {strides = array<i32>} : memref<10x18x4xf32, #tpu.memory_space<vmem>>, vector<8x18x4xf32>,
    %c0_6 = arith.constant 0 : index
    %c0_7 = arith.constant 0 : index
    %c0_8 = arith.constant 0 : index
    %c0_9 = arith.constant 0 : index
    %3 = vector.load %arg3[%c0_6, %c0_7, %c0_8, %c0_9] : memref<1x1x18x4xf32, #tpu.memory_space<vmem>>, vector<1x1x18x4xf32>
    %4 = vector.shape_cast %3 : vector<1x1x18x4xf32> to vector<1x18x4xf32>
    %c8 = arith.constant 8 : index
    %c0_10 = arith.constant 0 : index
    %c0_11 = arith.constant 0 : index
    %5 = vector.load %arg8[%c8, %c0_10, %c0_11] : memref<10x18x4xf32, #tpu.memory_space<vmem>>, vector<1x18x4xf32>
    tpu.vector_store %arg8[%c8, %c0_10, %c0_11], %4 {strides = array<i32>} : memref<10x18x4xf32, #tpu.memory_space<vmem>>, vector<1x18x4xf32>,
    %c0_12 = arith.constant 0 : index
    %c0_13 = arith.constant 0 : index
    %c0_14 = arith.constant 0 : index
    %c0_15 = arith.constant 0 : index
    %6 = vector.load %arg4[%c0_12, %c0_13, %c0_14, %c0_15] : memref<1x1x18x4xf32, #tpu.memory_space<vmem>>, vector<1x1x18x4xf32>
    %7 = vector.shape_cast %6 : vector<1x1x18x4xf32> to vector<1x18x4xf32>
    %c9 = arith.constant 9 : index
    %c0_16 = arith.constant 0 : index
    %c0_17 = arith.constant 0 : index
    %8 = vector.load %arg8[%c9, %c0_16, %c0_17] : memref<10x18x4xf32, #tpu.memory_space<vmem>>, vector<1x18x4xf32>
    tpu.vector_store %arg8[%c9, %c0_16, %c0_17], %7 {strides = array<i32>} : memref<10x18x4xf32, #tpu.memory_space<vmem>>, vector<1x18x4xf32>,
    %c0_18 = arith.constant 0 : index
    %c0_19 = arith.constant 0 : index
    %9 = vector.load %arg6[%c0_18, %c0_19] : memref<1x4xf32, #tpu.memory_space<vmem>>, vector<1x4xf32>
    %cst = arith.constant 0.000000e+00 : f32
    %10 = vector.broadcast %cst : f32 to vector<128x4xf32>
    %c0_20 = arith.constant 0 : index
    %c0_21 = arith.constant 0 : index
    %c0_22 = arith.constant 0 : index
    %11 = vector.load %arg8[%c0_20, %c0_21, %c0_22] : memref<10x18x4xf32, #tpu.memory_space<vmem>>, vector<8x16x4xf32>
    %12 = vector.shape_cast %11 : vector<8x16x4xf32> to vector<128x4xf32>
    %c0_23 = arith.constant 0 : index
    %c0_24 = arith.constant 0 : index
    %c0_25 = arith.constant 0 : index
    %c0_26 = arith.constant 0 : index
    %13 = vector.load %arg5[%c0_23, %c0_24, %c0_25, %c0_26] : memref<4x4x4x4xf32, #tpu.memory_space<vmem>>, vector<1x1x4x4xf32>
    %14 = vector.shape_cast %13 : vector<1x1x4x4xf32> to vector<4x4xf32>
    %cst_27 = arith.constant dense<0.000000e+00> : vector<128x4xf32>
    %15 = tpu.matmul %12, %14, %cst_27 {dimension_numbers = #tpu.dot_dimension_numbers<[1], [0], [0], [1], [0, 0, 1, 1], [], []>} : vector<128x4xf32>, vector<4x4xf32>, vector<128x4xf32> -> vector<128x4xf32>
    %16 = arith.addf %10, %15 : vector<128x4xf32>
    %c0_28 = arith.constant 0 : index
    %c1 = arith.constant 1 : index
    %c0_29 = arith.constant 0 : index
    %17 = vector.load %arg8[%c0_28, %c1, %c0_29] : memref<10x18x4xf32, #tpu.memory_space<vmem>>, vector<8x16x4xf32>
    %18 = vector.shape_cast %17 : vector<8x16x4xf32> to vector<128x4xf32>
    %c0_30 = arith.constant 0 : index
    %c1_31 = arith.constant 1 : index
    %c0_32 = arith.constant 0 : index
    %c0_33 = arith.constant 0 : index
    %19 = vector.load %arg5[%c0_30, %c1_31, %c0_32, %c0_33] : memref<4x4x4x4xf32, #tpu.memory_space<vmem>>, vector<1x1x4x4xf32>
    %20 = vector.shape_cast %19 : vector<1x1x4x4xf32> to vector<4x4xf32>
    %cst_34 = arith.constant dense<0.000000e+00> : vector<128x4xf32>
    %21 = tpu.matmul %18, %20, %cst_34 {dimension_numbers = #tpu.dot_dimension_numbers<[1], [0], [0], [1], [0, 0, 1, 1], [], []>} : vector<128x4xf32>, vector<4x4xf32>, vector<128x4xf32> -> vector<128x4xf32>
    %22 = arith.addf %16, %21 : vector<128x4xf32>
    %c1_35 = arith.constant 1 : index
    %c0_36 = arith.constant 0 : index
    %c0_37 = arith.constant 0 : index
    %23 = vector.load %arg8[%c1_35, %c0_36, %c0_37] : memref<10x18x4xf32, #tpu.memory_space<vmem>>, vector<8x16x4xf32>
    %24 = vector.shape_cast %23 : vector<8x16x4xf32> to vector<128x4xf32>
    %c0_38 = arith.constant 0 : index
    %c2 = arith.constant 2 : index
    %c0_39 = arith.constant 0 : index
    %c0_40 = arith.constant 0 : index
    %25 = vector.load %arg5[%c0_38, %c2, %c0_39, %c0_40] : memref<4x4x4x4xf32, #tpu.memory_space<vmem>>, vector<1x1x4x4xf32>
    %26 = vector.shape_cast %25 : vector<1x1x4x4xf32> to vector<4x4xf32>
    %cst_41 = arith.constant dense<0.000000e+00> : vector<128x4xf32>
    %27 = tpu.matmul %24, %26, %cst_41 {dimension_numbers = #tpu.dot_dimension_numbers<[1], [0], [0], [1], [0, 0, 1, 1], [], []>} : vector<128x4xf32>, vector<4x4xf32>, vector<128x4xf32> -> vector<128x4xf32>
    %28 = arith.addf %22, %27 : vector<128x4xf32>
    %c1_42 = arith.constant 1 : index
    %c1_43 = arith.constant 1 : index
    %c0_44 = arith.constant 0 : index
    %29 = vector.load %arg8[%c1_42, %c1_43, %c0_44] : memref<10x18x4xf32, #tpu.memory_space<vmem>>, vector<8x16x4xf32>
    %30 = vector.shape_cast %29 : vector<8x16x4xf32> to vector<128x4xf32>
    %c0_45 = arith.constant 0 : index
    %c3 = arith.constant 3 : index
    %c0_46 = arith.constant 0 : index
    %c0_47 = arith.constant 0 : index
    %31 = vector.load %arg5[%c0_45, %c3, %c0_46, %c0_47] : memref<4x4x4x4xf32, #tpu.memory_space<vmem>>, vector<1x1x4x4xf32>
    %32 = vector.shape_cast %31 : vector<1x1x4x4xf32> to vector<4x4xf32>
    %cst_48 = arith.constant dense<0.000000e+00> : vector<128x4xf32>
    %33 = tpu.matmul %30, %32, %cst_48 {dimension_numbers = #tpu.dot_dimension_numbers<[1], [0], [0], [1], [0, 0, 1, 1], [], []>} : vector<128x4xf32>, vector<4x4xf32>, vector<128x4xf32> -> vector<128x4xf32>
    %34 = arith.addf %28, %33 : vector<128x4xf32>
    %35 = vector.broadcast %9 : vector<1x4xf32> to vector<128x4xf32>
    %36 = arith.addf %34, %35 : vector<128x4xf32>
    %37 = vector.shape_cast %36 : vector<128x4xf32> to vector<8x16x4xf32>
    %c0_49 = arith.constant 0 : index
    %c0_50 = arith.constant 0 : index
    %c0_51 = arith.constant 0 : index
    %c0_52 = arith.constant 0 : index
    %38 = vector.load %arg7[%c0_49, %c0_50, %c0_51, %c0_52] : memref<4x8x16x4xf32, #tpu.memory_space<vmem>>, vector<1x8x16x4xf32>
    %39 = vector.shape_cast %38 : vector<1x8x16x4xf32> to vector<8x16x4xf32>
    %40 = vector.shape_cast %37 : vector<8x16x4xf32> to vector<1x8x16x4xf32>
    tpu.vector_store %arg7[%c0_49, %c0_50, %c0_51, %c0_52], %40 {strides = array<i32>} : memref<4x8x16x4xf32, #tpu.memory_space<vmem>>, vector<1x8x16x4xf32>,
    %cst_53 = arith.constant 0.000000e+00 : f32
    %41 = vector.broadcast %cst_53 : f32 to vector<128x4xf32>
    %c0_54 = arith.constant 0 : index
    %c1_55 = arith.constant 1 : index
    %c0_56 = arith.constant 0 : index
    %42 = vector.load %arg8[%c0_54, %c1_55, %c0_56] : memref<10x18x4xf32, #tpu.memory_space<vmem>>, vector<8x16x4xf32>
    %43 = vector.shape_cast %42 : vector<8x16x4xf32> to vector<128x4xf32>
    %c1_57 = arith.constant 1 : index
    %c0_58 = arith.constant 0 : index
    %c0_59 = arith.constant 0 : index
    %c0_60 = arith.constant 0 : index
    %44 = vector.load %arg5[%c1_57, %c0_58, %c0_59, %c0_60] : memref<4x4x4x4xf32, #tpu.memory_space<vmem>>, vector<1x1x4x4xf32>
    %45 = vector.shape_cast %44 : vector<1x1x4x4xf32> to vector<4x4xf32>
    %cst_61 = arith.constant dense<0.000000e+00> : vector<128x4xf32>
    %46 = tpu.matmul %43, %45, %cst_61 {dimension_numbers = #tpu.dot_dimension_numbers<[1], [0], [0], [1], [0, 0, 1, 1], [], []>} : vector<128x4xf32>, vector<4x4xf32>, vector<128x4xf32> -> vector<128x4xf32>
    %47 = arith.addf %41, %46 : vector<128x4xf32>
    %c0_62 = arith.constant 0 : index
    %c2_63 = arith.constant 2 : index
    %c0_64 = arith.constant 0 : index
    %48 = vector.load %arg8[%c0_62, %c2_63, %c0_64] : memref<10x18x4xf32, #tpu.memory_space<vmem>>, vector<8x16x4xf32>
    %49 = vector.shape_cast %48 : vector<8x16x4xf32> to vector<128x4xf32>
    %c1_65 = arith.constant 1 : index
    %c1_66 = arith.constant 1 : index
    %c0_67 = arith.constant 0 : index
    %c0_68 = arith.constant 0 : index
    %50 = vector.load %arg5[%c1_65, %c1_66, %c0_67, %c0_68] : memref<4x4x4x4xf32, #tpu.memory_space<vmem>>, vector<1x1x4x4xf32>
    %51 = vector.shape_cast %50 : vector<1x1x4x4xf32> to vector<4x4xf32>
    %cst_69 = arith.constant dense<0.000000e+00> : vector<128x4xf32>
    %52 = tpu.matmul %49, %51, %cst_69 {dimension_numbers = #tpu.dot_dimension_numbers<[1], [0], [0], [1], [0, 0, 1, 1], [], []>} : vector<128x4xf32>, vector<4x4xf32>, vector<128x4xf32> -> vector<128x4xf32>
    %53 = arith.addf %47, %52 : vector<128x4xf32>
    %c1_70 = arith.constant 1 : index
    %c1_71 = arith.constant 1 : index
    %c0_72 = arith.constant 0 : index
    %54 = vector.load %arg8[%c1_70, %c1_71, %c0_72] : memref<10x18x4xf32, #tpu.memory_space<vmem>>, vector<8x16x4xf32>
    %55 = vector.shape_cast %54 : vector<8x16x4xf32> to vector<128x4xf32>
    %c1_73 = arith.constant 1 : index
    %c2_74 = arith.constant 2 : index
    %c0_75 = arith.constant 0 : index
    %c0_76 = arith.constant 0 : index
    %56 = vector.load %arg5[%c1_73, %c2_74, %c0_75, %c0_76] : memref<4x4x4x4xf32, #tpu.memory_space<vmem>>, vector<1x1x4x4xf32>
    %57 = vector.shape_cast %56 : vector<1x1x4x4xf32> to vector<4x4xf32>
    %cst_77 = arith.constant dense<0.000000e+00> : vector<128x4xf32>
    %58 = tpu.matmul %55, %57, %cst_77 {dimension_numbers = #tpu.dot_dimension_numbers<[1], [0], [0], [1], [0, 0, 1, 1], [], []>} : vector<128x4xf32>, vector<4x4xf32>, vector<128x4xf32> -> vector<128x4xf32>
    %59 = arith.addf %53, %58 : vector<128x4xf32>
    %c1_78 = arith.constant 1 : index
    %c2_79 = arith.constant 2 : index
    %c0_80 = arith.constant 0 : index
    %60 = vector.load %arg8[%c1_78, %c2_79, %c0_80] : memref<10x18x4xf32, #tpu.memory_space<vmem>>, vector<8x16x4xf32>
    %61 = vector.shape_cast %60 : vector<8x16x4xf32> to vector<128x4xf32>
    %c1_81 = arith.constant 1 : index
    %c3_82 = arith.constant 3 : index
    %c0_83 = arith.constant 0 : index
    %c0_84 = arith.constant 0 : index
    %62 = vector.load %arg5[%c1_81, %c3_82, %c0_83, %c0_84] : memref<4x4x4x4xf32, #tpu.memory_space<vmem>>, vector<1x1x4x4xf32>
    %63 = vector.shape_cast %62 : vector<1x1x4x4xf32> to vector<4x4xf32>
    %cst_85 = arith.constant dense<0.000000e+00> : vector<128x4xf32>
    %64 = tpu.matmul %61, %63, %cst_85 {dimension_numbers = #tpu.dot_dimension_numbers<[1], [0], [0], [1], [0, 0, 1, 1], [], []>} : vector<128x4xf32>, vector<4x4xf32>, vector<128x4xf32> -> vector<128x4xf32>
    %65 = arith.addf %59, %64 : vector<128x4xf32>
    %66 = vector.broadcast %9 : vector<1x4xf32> to vector<128x4xf32>
    %67 = arith.addf %65, %66 : vector<128x4xf32>
    %68 = vector.shape_cast %67 : vector<128x4xf32> to vector<8x16x4xf32>
    %c1_86 = arith.constant 1 : index
    %c0_87 = arith.constant 0 : index
    %c0_88 = arith.constant 0 : index
    %c0_89 = arith.constant 0 : index
    %69 = vector.load %arg7[%c1_86, %c0_87, %c0_88, %c0_89] : memref<4x8x16x4xf32, #tpu.memory_space<vmem>>, vector<1x8x16x4xf32>
    %70 = vector.shape_cast %69 : vector<1x8x16x4xf32> to vector<8x16x4xf32>
    %71 = vector.shape_cast %68 : vector<8x16x4xf32> to vector<1x8x16x4xf32>
    tpu.vector_store %arg7[%c1_86, %c0_87, %c0_88, %c0_89], %71 {strides = array<i32>} : memref<4x8x16x4xf32, #tpu.memory_space<vmem>>, vector<1x8x16x4xf32>,
    %cst_90 = arith.constant 0.000000e+00 : f32
    %72 = vector.broadcast %cst_90 : f32 to vector<128x4xf32>
    %c1_91 = arith.constant 1 : index
    %c0_92 = arith.constant 0 : index
    %c0_93 = arith.constant 0 : index
    %73 = vector.load %arg8[%c1_91, %c0_92, %c0_93] : memref<10x18x4xf32, #tpu.memory_space<vmem>>, vector<8x16x4xf32>
    %74 = vector.shape_cast %73 : vector<8x16x4xf32> to vector<128x4xf32>
    %c2_94 = arith.constant 2 : index
    %c0_95 = arith.constant 0 : index
    %c0_96 = arith.constant 0 : index
    %c0_97 = arith.constant 0 : index
    %75 = vector.load %arg5[%c2_94, %c0_95, %c0_96, %c0_97] : memref<4x4x4x4xf32, #tpu.memory_space<vmem>>, vector<1x1x4x4xf32>
    %76 = vector.shape_cast %75 : vector<1x1x4x4xf32> to vector<4x4xf32>
    %cst_98 = arith.constant dense<0.000000e+00> : vector<128x4xf32>
    %77 = tpu.matmul %74, %76, %cst_98 {dimension_numbers = #tpu.dot_dimension_numbers<[1], [0], [0], [1], [0, 0, 1, 1], [], []>} : vector<128x4xf32>, vector<4x4xf32>, vector<128x4xf32> -> vector<128x4xf32>
    %78 = arith.addf %72, %77 : vector<128x4xf32>
    %c1_99 = arith.constant 1 : index
    %c1_100 = arith.constant 1 : index
    %c0_101 = arith.constant 0 : index
    %79 = vector.load %arg8[%c1_99, %c1_100, %c0_101] : memref<10x18x4xf32, #tpu.memory_space<vmem>>, vector<8x16x4xf32>
    %80 = vector.shape_cast %79 : vector<8x16x4xf32> to vector<128x4xf32>
    %c2_102 = arith.constant 2 : index
    %c1_103 = arith.constant 1 : index
    %c0_104 = arith.constant 0 : index
    %c0_105 = arith.constant 0 : index
    %81 = vector.load %arg5[%c2_102, %c1_103, %c0_104, %c0_105] : memref<4x4x4x4xf32, #tpu.memory_space<vmem>>, vector<1x1x4x4xf32>
    %82 = vector.shape_cast %81 : vector<1x1x4x4xf32> to vector<4x4xf32>
    %cst_106 = arith.constant dense<0.000000e+00> : vector<128x4xf32>
    %83 = tpu.matmul %80, %82, %cst_106 {dimension_numbers = #tpu.dot_dimension_numbers<[1], [0], [0], [1], [0, 0, 1, 1], [], []>} : vector<128x4xf32>, vector<4x4xf32>, vector<128x4xf32> -> vector<128x4xf32>
    %84 = arith.addf %78, %83 : vector<128x4xf32>
    %c2_107 = arith.constant 2 : index
    %c0_108 = arith.constant 0 : index
    %c0_109 = arith.constant 0 : index
    %85 = vector.load %arg8[%c2_107, %c0_108, %c0_109] : memref<10x18x4xf32, #tpu.memory_space<vmem>>, vector<8x16x4xf32>
    %86 = vector.shape_cast %85 : vector<8x16x4xf32> to vector<128x4xf32>
    %c2_110 = arith.constant 2 : index
    %c2_111 = arith.constant 2 : index
    %c0_112 = arith.constant 0 : index
    %c0_113 = arith.constant 0 : index
    %87 = vector.load %arg5[%c2_110, %c2_111, %c0_112, %c0_113] : memref<4x4x4x4xf32, #tpu.memory_space<vmem>>, vector<1x1x4x4xf32>
    %88 = vector.shape_cast %87 : vector<1x1x4x4xf32> to vector<4x4xf32>
    %cst_114 = arith.constant dense<0.000000e+00> : vector<128x4xf32>
    %89 = tpu.matmul %86, %88, %cst_114 {dimension_numbers = #tpu.dot_dimension_numbers<[1], [0], [0], [1], [0, 0, 1, 1], [], []>} : vector<128x4xf32>, vector<4x4xf32>, vector<128x4xf32> -> vector<128x4xf32>
    %90 = arith.addf %84, %89 : vector<128x4xf32>
    %c2_115 = arith.constant 2 : index
    %c1_116 = arith.constant 1 : index
    %c0_117 = arith.constant 0 : index
    %91 = vector.load %arg8[%c2_115, %c1_116, %c0_117] : memref<10x18x4xf32, #tpu.memory_space<vmem>>, vector<8x16x4xf32>
    %92 = vector.shape_cast %91 : vector<8x16x4xf32> to vector<128x4xf32>
    %c2_118 = arith.constant 2 : index
    %c3_119 = arith.constant 3 : index
    %c0_120 = arith.constant 0 : index
    %c0_121 = arith.constant 0 : index
    %93 = vector.load %arg5[%c2_118, %c3_119, %c0_120, %c0_121] : memref<4x4x4x4xf32, #tpu.memory_space<vmem>>, vector<1x1x4x4xf32>
    %94 = vector.shape_cast %93 : vector<1x1x4x4xf32> to vector<4x4xf32>
    %cst_122 = arith.constant dense<0.000000e+00> : vector<128x4xf32>
    %95 = tpu.matmul %92, %94, %cst_122 {dimension_numbers = #tpu.dot_dimension_numbers<[1], [0], [0], [1], [0, 0, 1, 1], [], []>} : vector<128x4xf32>, vector<4x4xf32>, vector<128x4xf32> -> vector<128x4xf32>
    %96 = arith.addf %90, %95 : vector<128x4xf32>
    %97 = vector.broadcast %9 : vector<1x4xf32> to vector<128x4xf32>
    %98 = arith.addf %96, %97 : vector<128x4xf32>
    %99 = vector.shape_cast %98 : vector<128x4xf32> to vector<8x16x4xf32>
    %c2_123 = arith.constant 2 : index
    %c0_124 = arith.constant 0 : index
    %c0_125 = arith.constant 0 : index
    %c0_126 = arith.constant 0 : index
    %100 = vector.load %arg7[%c2_123, %c0_124, %c0_125, %c0_126] : memref<4x8x16x4xf32, #tpu.memory_space<vmem>>, vector<1x8x16x4xf32>
    %101 = vector.shape_cast %100 : vector<1x8x16x4xf32> to vector<8x16x4xf32>
    %102 = vector.shape_cast %99 : vector<8x16x4xf32> to vector<1x8x16x4xf32>
    tpu.vector_store %arg7[%c2_123, %c0_124, %c0_125, %c0_126], %102 {strides = array<i32>} : memref<4x8x16x4xf32, #tpu.memory_space<vmem>>, vector<1x8x16x4xf32>,
    %cst_127 = arith.constant 0.000000e+00 : f32
    %103 = vector.broadcast %cst_127 : f32 to vector<128x4xf32>
    %c1_128 = arith.constant 1 : index
    %c1_129 = arith.constant 1 : index
    %c0_130 = arith.constant 0 : index
    %104 = vector.load %arg8[%c1_128, %c1_129, %c0_130] : memref<10x18x4xf32, #tpu.memory_space<vmem>>, vector<8x16x4xf32>
    %105 = vector.shape_cast %104 : vector<8x16x4xf32> to vector<128x4xf32>
    %c3_131 = arith.constant 3 : index
    %c0_132 = arith.constant 0 : index
    %c0_133 = arith.constant 0 : index
    %c0_134 = arith.constant 0 : index
    %106 = vector.load %arg5[%c3_131, %c0_132, %c0_133, %c0_134] : memref<4x4x4x4xf32, #tpu.memory_space<vmem>>, vector<1x1x4x4xf32>
    %107 = vector.shape_cast %106 : vector<1x1x4x4xf32> to vector<4x4xf32>
    %cst_135 = arith.constant dense<0.000000e+00> : vector<128x4xf32>
    %108 = tpu.matmul %105, %107, %cst_135 {dimension_numbers = #tpu.dot_dimension_numbers<[1], [0], [0], [1], [0, 0, 1, 1], [], []>} : vector<128x4xf32>, vector<4x4xf32>, vector<128x4xf32> -> vector<128x4xf32>
    %109 = arith.addf %103, %108 : vector<128x4xf32>
    %c1_136 = arith.constant 1 : index
    %c2_137 = arith.constant 2 : index
    %c0_138 = arith.constant 0 : index
    %110 = vector.load %arg8[%c1_136, %c2_137, %c0_138] : memref<10x18x4xf32, #tpu.memory_space<vmem>>, vector<8x16x4xf32>
    %111 = vector.shape_cast %110 : vector<8x16x4xf32> to vector<128x4xf32>
    %c3_139 = arith.constant 3 : index
    %c1_140 = arith.constant 1 : index
    %c0_141 = arith.constant 0 : index
    %c0_142 = arith.constant 0 : index
    %112 = vector.load %arg5[%c3_139, %c1_140, %c0_141, %c0_142] : memref<4x4x4x4xf32, #tpu.memory_space<vmem>>, vector<1x1x4x4xf32>
    %113 = vector.shape_cast %112 : vector<1x1x4x4xf32> to vector<4x4xf32>
    %cst_143 = arith.constant dense<0.000000e+00> : vector<128x4xf32>
    %114 = tpu.matmul %111, %113, %cst_143 {dimension_numbers = #tpu.dot_dimension_numbers<[1], [0], [0], [1], [0, 0, 1, 1], [], []>} : vector<128x4xf32>, vector<4x4xf32>, vector<128x4xf32> -> vector<128x4xf32>
    %115 = arith.addf %109, %114 : vector<128x4xf32>
    %c2_144 = arith.constant 2 : index
    %c1_145 = arith.constant 1 : index
    %c0_146 = arith.constant 0 : index
    %116 = vector.load %arg8[%c2_144, %c1_145, %c0_146] : memref<10x18x4xf32, #tpu.memory_space<vmem>>, vector<8x16x4xf32>
    %117 = vector.shape_cast %116 : vector<8x16x4xf32> to vector<128x4xf32>
    %c3_147 = arith.constant 3 : index
    %c2_148 = arith.constant 2 : index
    %c0_149 = arith.constant 0 : index
    %c0_150 = arith.constant 0 : index
    %118 = vector.load %arg5[%c3_147, %c2_148, %c0_149, %c0_150] : memref<4x4x4x4xf32, #tpu.memory_space<vmem>>, vector<1x1x4x4xf32>
    %119 = vector.shape_cast %118 : vector<1x1x4x4xf32> to vector<4x4xf32>
    %cst_151 = arith.constant dense<0.000000e+00> : vector<128x4xf32>
    %120 = tpu.matmul %117, %119, %cst_151 {dimension_numbers = #tpu.dot_dimension_numbers<[1], [0], [0], [1], [0, 0, 1, 1], [], []>} : vector<128x4xf32>, vector<4x4xf32>, vector<128x4xf32> -> vector<128x4xf32>
    %121 = arith.addf %115, %120 : vector<128x4xf32>
    %c2_152 = arith.constant 2 : index
    %c2_153 = arith.constant 2 : index
    %c0_154 = arith.constant 0 : index
    %122 = vector.load %arg8[%c2_152, %c2_153, %c0_154] : memref<10x18x4xf32, #tpu.memory_space<vmem>>, vector<8x16x4xf32>
    %123 = vector.shape_cast %122 : vector<8x16x4xf32> to vector<128x4xf32>
    %c3_155 = arith.constant 3 : index
    %c3_156 = arith.constant 3 : index
    %c0_157 = arith.constant 0 : index
    %c0_158 = arith.constant 0 : index
    %124 = vector.load %arg5[%c3_155, %c3_156, %c0_157, %c0_158] : memref<4x4x4x4xf32, #tpu.memory_space<vmem>>, vector<1x1x4x4xf32>
    %125 = vector.shape_cast %124 : vector<1x1x4x4xf32> to vector<4x4xf32>
    %cst_159 = arith.constant dense<0.000000e+00> : vector<128x4xf32>
    %126 = tpu.matmul %123, %125, %cst_159 {dimension_numbers = #tpu.dot_dimension_numbers<[1], [0], [0], [1], [0, 0, 1, 1], [], []>} : vector<128x4xf32>, vector<4x4xf32>, vector<128x4xf32> -> vector<128x4xf32>
    %127 = arith.addf %121, %126 : vector<128x4xf32>
    %128 = vector.broadcast %9 : vector<1x4xf32> to vector<128x4xf32>
    %129 = arith.addf %127, %128 : vector<128x4xf32>
    %130 = vector.shape_cast %129 : vector<128x4xf32> to vector<8x16x4xf32>
    %c3_160 = arith.constant 3 : index
    %c0_161 = arith.constant 0 : index
    %c0_162 = arith.constant 0 : index
    %c0_163 = arith.constant 0 : index
    %131 = vector.load %arg7[%c3_160, %c0_161, %c0_162, %c0_163] : memref<4x8x16x4xf32, #tpu.memory_space<vmem>>, vector<1x8x16x4xf32>
    %132 = vector.shape_cast %131 : vector<1x8x16x4xf32> to vector<8x16x4xf32>
    %133 = vector.shape_cast %130 : vector<8x16x4xf32> to vector<1x8x16x4xf32>
    tpu.vector_store %arg7[%c3_160, %c0_161, %c0_162, %c0_163], %133 {strides = array<i32>} : memref<4x8x16x4xf32, #tpu.memory_space<vmem>>, vector<1x8x16x4xf32>,
    return
  }
  func.func @transform_0(%arg0: i32, %arg1: i32) -> (i32, i32, i32, i32) {
    %c0_i32 = arith.constant 0 : i32
    %c0_i32_0 = arith.constant 0 : i32
    %c0_i32_1 = arith.constant 0 : i32
    return %arg0, %arg1, %c0_i32, %c0_i32_0 : i32, i32, i32, i32
  }
  func.func @transform_1(%arg0: i32, %arg1: i32) -> (i32, i32, i32, i32) {
    %c8_i32 = arith.constant 8 : i32
    %0 = arith.muli %arg1, %c8_i32 : i32
    %c8_i32_0 = arith.constant 8 : i32
    %1 = arith.addi %0, %c8_i32_0 : i32
    %c0_i32 = arith.constant 0 : i32
    %c0_i32_1 = arith.constant 0 : i32
    %c0_i32_2 = arith.constant 0 : i32
    return %arg0, %1, %c0_i32, %c0_i32_1 : i32, i32, i32, i32
  }
  func.func @transform_2(%arg0: i32, %arg1: i32) -> (i32, i32, i32, i32) {
    %c8_i32 = arith.constant 8 : i32
    %0 = arith.muli %arg1, %c8_i32 : i32
    %c8_i32_0 = arith.constant 8 : i32
    %1 = arith.addi %0, %c8_i32_0 : i32
    %c1_i32 = arith.constant 1 : i32
    %2 = arith.addi %1, %c1_i32 : i32
    %c0_i32 = arith.constant 0 : i32
    %c0_i32_1 = arith.constant 0 : i32
    %c0_i32_2 = arith.constant 0 : i32
    return %arg0, %2, %c0_i32, %c0_i32_1 : i32, i32, i32, i32
  }
  func.func @transform_3(%arg0: i32, %arg1: i32) -> (i32, i32, i32, i32) {
    %c0_i32 = arith.constant 0 : i32
    %c0_i32_0 = arith.constant 0 : i32
    %c0_i32_1 = arith.constant 0 : i32
    %c0_i32_2 = arith.constant 0 : i32
    %c0_i32_3 = arith.constant 0 : i32
    return %c0_i32, %c0_i32_0, %c0_i32_1, %c0_i32_2 : i32, i32, i32, i32
  }
  func.func @transform_4(%arg0: i32, %arg1: i32) -> (i32, i32) {
    %c0_i32 = arith.constant 0 : i32
    %c0_i32_0 = arith.constant 0 : i32
    %c0_i32_1 = arith.constant 0 : i32
    return %c0_i32, %c0_i32_0 : i32, i32
  }
  func.func @transform_5(%arg0: i32, %arg1: i32) -> (i32, i32, i32, i32) {
    %c0_i32 = arith.constant 0 : i32
    %c0_i32_0 = arith.constant 0 : i32
    %c0_i32_1 = arith.constant 0 : i32
    return %arg0, %arg1, %c0_i32, %c0_i32_0 : i32, i32, i32, i32
  }
}

</mosaic_0001>

<llo_original>
// kernel: tpu_custom_call.1
$region0: #{tpu_custom_call.1}
  #allocation0 [shape = 'u32[]', space=smem, size = 0x4, offset = 0x4, fixed_abs, tag = 'smem constant byte address 0x4 - core index']
  #allocation1 [shape = 'u32[144,128]{1,0:T(1,128)}', space=vmem, size = 0x12000, scoped, tag = 'internal scratch']
  #allocation2 [shape = 'f32[10,18,4]{2,1,0:T(8,128)}', space=vmem, size = 0x1e000, scoped, tag = 'scratch operand']
  %s0 = inlined_call_operand.vmem [shape: f32[2,18,18,4], index: 0, kind: input, shape index: {}]
  %s1 = inlined_call_operand.vmem [shape: f32[2,18,18,4], index: 1, kind: input, shape index: {}]
  %s2 = inlined_call_operand.vmem [shape: f32[2,18,18,4], index: 2, kind: input, shape index: {}]
  %s3 = inlined_call_operand.vmem [shape: f32[4,4,4,4], index: 3, kind: input, shape index: {}]
  %s4 = inlined_call_operand.vmem [shape: f32[1,4], index: 4, kind: input, shape index: {}]
  %s5 = inlined_call_operand.vmem [shape: f32[8,16,16,4], index: 5, kind: output, shape index: {}]
  %s6 = sld [smem:[#allocation0]]
  $region87: #{tpu_custom_call.1} parent=0
    _
  %s8 = ssub.s32 1, %s6
  %s9 = scalar_select 0, %s8, %s6
  $region1: #{tpu_custom_call.1} parent=0
    #allocation3 [shape = 'u8[524288]{0}', space=vmem, size = 0x80000, scoped, tag = 'output window, operand 0']
    loop: start=0, step=1, limit=6
    $region2: #{tpu_custom_call.1} parent=1 // loop_pre_header
      _
    $region3: #{tpu_custom_call.1} parent=1 // loop_header
      %s11 = sphi 0, %s15
      %p12 = scmp.ge.s32.totalorder %s11, 6
      %s18 = sphi 0, %s30
      %s19 = sphi 0, %s26
      %s20 = sphi 0, %s18
      %s21 = sphi 0, %s19
      %s22 = sphi 0, %s20
      %s23 = sphi 0, %s21
      %s35 = sphi 0, %s37
      %s38 = sphi 0, %s35
      %s39 = sphi 0, %s38
      %s55 = sphi 0, %s39
      %s67 = sphi 0, %s69
      %s70 = sphi 0, %s67
      %s71 = sphi 0, %s70
      %s87 = sphi 0, %s71
      %s99 = sphi 0, %s101
      %s102 = sphi 0, %s99
      %s103 = sphi 0, %s102
      %s119 = sphi 0, %s103
      %s123 = sphi 0, %s123
      %s125 = sphi 0, %s123
      %s126 = sphi 0, %s125
      %s140 = sphi 0, %s126
      %s144 = sphi 0, %s144
      %s146 = sphi 0, %s144
      %s147 = sphi 0, %s146
      %s161 = sphi 0, %s147
      %s169 = sphi 0, %s171
      %s172 = sphi 0, %s169
      %s173 = sphi 0, %s172
      %s189 = sphi 0, %s173
    $region4: #{tpu_custom_call.1} parent=1 // loop_header_branch
      %14 = sbr.rel (%p12) target = $region8
    $region5: #{tpu_custom_call.1} parent=1 // loop_body
      %s16 = ssub.s32 %s11, 1
      %s17 = ssub.s32 %s11, 2
      %s24 = sadd.s32 1, %s19
      %p25 = scmp.ge.s32.totalorder %s24, 2
      %s26 = scalar_select %p25, 0, %s24
      %s27 = sadd.s32 1, %s18
      %s28 = scalar_select %p25, %s27, %s18
      %p29 = scmp.ge.s32.totalorder %s28, 2
      %s30 = scalar_select %p29, 0, %s28
      %s31 = ssub.s32 %s18, %s30
      %s32 = ssub.s32 %s19, %s26
      %s33 = sor.u32 %s31, %s32
      %p34 = scmp.eq.s32.totalorder %s33, 0
      %s36 = sadd.s32 %s35, 1
      %s37 = scalar_select %p34, %s35, %s36
      %p40 = pneg %p34
      %p41 = scmp.eq.s32.totalorder %s11, 3
      %p42 = por %p40, %p41
      %p43 = scmp.ne.s32.totalorder %s35, %s38
      %p44 = scmp.eq.s32.totalorder %s11, 0
      %p45 = por %p43, %p44
      %p46 = scmp.ne.s32.totalorder %s35, %s38
      %p47 = scmp.eq.s32.totalorder %s16, 3
      %p48 = por %p46, %p47
      %p49 = scmp.ne.s32.totalorder %s38, %s39
      %p50 = scmp.eq.s32.totalorder %s16, 0
      %p51 = por %p49, %p50
      %p52 = scmp.ne.s32.totalorder %s38, %s39
      %p53 = scmp.eq.s32.totalorder %s17, 3
      %p54 = por %p52, %p53
      %p56 = scmp.ne.s32.totalorder %s39, %s55
      %p57 = scmp.eq.s32.totalorder %s17, 0
      %p58 = por %p56, %p57
      %s59 = smul.u32 %s19, 8
      %s60 = sadd.s32 %s59, 8
      %s61 = smul.u32 %s26, 8
      %s62 = sadd.s32 %s61, 8
      %s63 = ssub.s32 %s18, %s30
      %s64 = ssub.s32 %s60, %s62
      %s65 = sor.u32 %s63, %s64
      %p66 = scmp.eq.s32.totalorder %s65, 0
      %s68 = sadd.s32 %s67, 1
      %s69 = scalar_select %p66, %s67, %s68
      %p72 = pneg %p66
      %p73 = scmp.eq.s32.totalorder %s11, 3
      %p74 = por %p72, %p73
      %p75 = scmp.ne.s32.totalorder %s67, %s70
      %p76 = scmp.eq.s32.totalorder %s11, 0
      %p77 = por %p75, %p76
      %p78 = scmp.ne.s32.totalorder %s67, %s70
      %p79 = scmp.eq.s32.totalorder %s16, 3
      %p80 = por %p78, %p79
      %p81 = scmp.ne.s32.totalorder %s70, %s71
      %p82 = scmp.eq.s32.totalorder %s16, 0
      %p83 = por %p81, %p82
      %p84 = scmp.ne.s32.totalorder %s70, %s71
      %p85 = scmp.eq.s32.totalorder %s17, 3
      %p86 = por %p84, %p85
      %p88 = scmp.ne.s32.totalorder %s71, %s87
      %p89 = scmp.eq.s32.totalorder %s17, 0
      %p90 = por %p88, %p89
      %s91 = smul.u32 %s19, 8
      %s92 = sadd.s32 %s91, 9
      %s93 = smul.u32 %s26, 8
      %s94 = sadd.s32 %s93, 9
      %s95 = ssub.s32 %s18, %s30
      %s96 = ssub.s32 %s92, %s94
      %s97 = sor.u32 %s95, %s96
      %p98 = scmp.eq.s32.totalorder %s97, 0
      %s100 = sadd.s32 %s99, 1
      %s101 = scalar_select %p98, %s99, %s100
      %p104 = pneg %p98
      %p105 = scmp.eq.s32.totalorder %s11, 3
      %p106 = por %p104, %p105
      %p107 = scmp.ne.s32.totalorder %s99, %s102
      %p108 = scmp.eq.s32.totalorder %s11, 0
      %p109 = por %p107, %p108
      %p110 = scmp.ne.s32.totalorder %s99, %s102
      %p111 = scmp.eq.s32.totalorder %s16, 3
      %p112 = por %p110, %p111
      %p113 = scmp.ne.s32.totalorder %s102, %s103
      %p114 = scmp.eq.s32.totalorder %s16, 0
      %p115 = por %p113, %p114
      %p116 = scmp.ne.s32.totalorder %s102, %s103
      %p117 = scmp.eq.s32.totalorder %s17, 3
      %p118 = por %p116, %p117
      %p120 = scmp.ne.s32.totalorder %s103, %s119
      %p121 = scmp.eq.s32.totalorder %s17, 0
      %p122 = por %p120, %p121
      %s124 = sadd.s32 %s123, 1
      %p127 = scmp.eq.s32.totalorder %s11, 3
      %p128 = scmp.ne.s32.totalorder %s123, %s125
      %p129 = scmp.eq.s32.totalorder %s11, 0
      %p130 = por %p128, %p129
      %p131 = scmp.ne.s32.totalorder %s123, %s125
      %p132 = scmp.eq.s32.totalorder %s16, 3
      %p133 = por %p131, %p132
      %p134 = scmp.ne.s32.totalorder %s125, %s126
      %p135 = scmp.eq.s32.totalorder %s16, 0
      %p136 = por %p134, %p135
      %p137 = scmp.ne.s32.totalorder %s125, %s126
      %p138 = scmp.eq.s32.totalorder %s17, 3
      %p139 = por %p137, %p138
      %p141 = scmp.ne.s32.totalorder %s126, %s140
      %p142 = scmp.eq.s32.totalorder %s17, 0
      %p143 = por %p141, %p142
      %s145 = sadd.s32 %s144, 1
      %p148 = scmp.eq.s32.totalorder %s11, 3
      %p149 = scmp.ne.s32.totalorder %s144, %s146
      %p150 = scmp.eq.s32.totalorder %s11, 0
      %p151 = por %p149, %p150
      %p152 = scmp.ne.s32.totalorder %s144, %s146
      %p153 = scmp.eq.s32.totalorder %s16, 3
      %p154 = por %p152, %p153
      %p155 = scmp.ne.s32.totalorder %s146, %s147
      %p156 = scmp.eq.s32.totalorder %s16, 0
      %p157 = por %p155, %p156
      %p158 = scmp.ne.s32.totalorder %s146, %s147
      %p159 = scmp.eq.s32.totalorder %s17, 3
      %p160 = por %p158, %p159
      %p162 = scmp.ne.s32.totalorder %s147, %s161
      %p163 = scmp.eq.s32.totalorder %s17, 0
      %p164 = por %p162, %p163
      %s165 = ssub.s32 %s18, %s30
      %s166 = ssub.s32 %s19, %s26
      %s167 = sor.u32 %s165, %s166
      %p168 = scmp.eq.s32.totalorder %s167, 0
      %s170 = sadd.s32 %s169, 1
      %s171 = scalar_select %p168, %s169, %s170
      %p174 = pneg %p168
      %p175 = scmp.eq.s32.totalorder %s11, 3
      %p176 = por %p174, %p175
      %p177 = scmp.ne.s32.totalorder %s169, %s172
      %p178 = scmp.eq.s32.totalorder %s11, 0
      %p179 = por %p177, %p178
      %p180 = scmp.ne.s32.totalorder %s169, %s172
      %p181 = scmp.eq.s32.totalorder %s16, 3
      %p182 = por %p180, %p181
      %p183 = scmp.ne.s32.totalorder %s172, %s173
      %p184 = scmp.eq.s32.totalorder %s16, 0
      %p185 = por %p183, %p184
      %p186 = scmp.ne.s32.totalorder %s172, %s173
      %p187 = scmp.eq.s32.totalorder %s17, 3
      %p188 = por %p186, %p187
      %p190 = scmp.ne.s32.totalorder %s173, %s189
      %p191 = scmp.eq.s32.totalorder %s17, 0
      %p192 = por %p190, %p191
      %p193 = scmp.le.s32.totalorder 1, %s11
      %p194 = scmp.lt.s32.totalorder %s11, 5
      %p195 = pnand %p193, %p194
      %p196 = pneg %p195
      // Predicated region
      $region9: #{tpu_custom_call.1} parent=5 // pred_check
        _
      $region10: #{tpu_custom_call.1} parent=5 // pred_check_branch
        %198 = sbr.rel (%p195) target = $region12
      $region11: #{tpu_custom_call.1} parent=5 // pred_region
        %s199 = ssub.s32 %s11, 1
        // Predicated region
        $region13: #{tpu_custom_call.1} parent=11 // pred_check
          %p200 = pneg %p136
        $region14: #{tpu_custom_call.1} parent=11 // pred_check_branch
          %202 = sbr.rel (%p200) target = $region16
        $region15: #{tpu_custom_call.1} parent=11 // pred_region
          _
        $region16: #{tpu_custom_call.1} parent=11 // pred_fallthru
          _
        // Predicated region
        $region17: #{tpu_custom_call.1} parent=11 // pred_check
          %p203 = pneg %p157
        $region18: #{tpu_custom_call.1} parent=11 // pred_check_branch
          %205 = sbr.rel (%p203) target = $region20
        $region19: #{tpu_custom_call.1} parent=11 // pred_region
          _
        $region20: #{tpu_custom_call.1} parent=11 // pred_fallthru
          _
      $region12: #{tpu_custom_call.1} parent=5 // pred_fallthru
        _
      %p206 = scmp.lt.s32.totalorder %s11, 4
      // Predicated region
      $region21: #{tpu_custom_call.1} parent=5 // pred_check
        %p207 = pneg %p206
      $region22: #{tpu_custom_call.1} parent=5 // pred_check_branch
        %209 = sbr.rel (%p207) target = $region24
      $region23: #{tpu_custom_call.1} parent=5 // pred_region
        // Predicated region
        $region25: #{tpu_custom_call.1} parent=23 // pred_check
          %p210 = pneg %p45
        $region26: #{tpu_custom_call.1} parent=23 // pred_check_branch
          %212 = sbr.rel (%p210) target = $region28
        $region27: #{tpu_custom_call.1} parent=23 // pred_region
          %s213 = smul.u32 8, %s19
          %s214 = ssub.s32 18, %s213
          %p215 = scmp.lt.s32.totalorder %s214, 8
          %s216 = scalar_select %p215, %s214, 8
          %s217 = smul.u32 128, %s216
          %s218 = smul.u32 %s217, 3
          %p219 = scmp.lt.s32.totalorder %s18, 1
          %s220 = scalar_select %p219, %s18, 1
          %p221 = scmp.lt.s32.totalorder %s213, 17
          %s222 = scalar_select %p221, %s213, 17
          %s223 = smul.addr %s222, 3
          %s224 = smul.addr %s220, 54
          %s225 = sadd.s32 %s223, %s224
          %s226 = smul.addr %s225, 8
          %s227 = scalar_lea.vmem %s0, %s226
          %s228 = smul.u32 8, %s19
          %s229 = ssub.s32 18, %s228
          %p230 = scmp.lt.s32.totalorder %s229, 8
          %s231 = scalar_select %p230, %s229, 8
          %s232 = smul.u32 128, %s231
          %s233 = smul.u32 %s232, 3
        $region28: #{tpu_custom_call.1} parent=23 // pred_fallthru
          _
        // Predicated region
        $region29: #{tpu_custom_call.1} parent=23 // pred_check
          %p234 = pneg %p77
        $region30: #{tpu_custom_call.1} parent=23 // pred_check_branch
          %236 = sbr.rel (%p234) target = $region32
        $region31: #{tpu_custom_call.1} parent=23 // pred_region
          %s237 = smul.u32 %s19, 8
          %s238 = sadd.s32 %s237, 8
          %p239 = scmp.lt.s32.totalorder %s18, 1
          %s240 = scalar_select %p239, %s18, 1
          %p241 = scmp.lt.s32.totalorder %s238, 17
          %s242 = scalar_select %p241, %s238, 17
          %s243 = smul.addr %s242, 3
          %s244 = smul.addr %s240, 54
          %s245 = sadd.s32 %s243, %s244
          %s246 = smul.addr %s245, 8
          %s247 = scalar_lea.vmem %s1, %s246
          %s248 = smul.u32 %s19, 8
          %s249 = sadd.s32 %s248, 8
        $region32: #{tpu_custom_call.1} parent=23 // pred_fallthru
          _
        // Predicated region
        $region33: #{tpu_custom_call.1} parent=23 // pred_check
          %p250 = pneg %p109
        $region34: #{tpu_custom_call.1} parent=23 // pred_check_branch
          %252 = sbr.rel (%p250) target = $region36
        $region35: #{tpu_custom_call.1} parent=23 // pred_region
          %s253 = smul.u32 %s19, 8
          %s254 = sadd.s32 %s253, 9
          %p255 = scmp.lt.s32.totalorder %s18, 1
          %s256 = scalar_select %p255, %s18, 1
          %p257 = scmp.lt.s32.totalorder %s254, 17
          %s258 = scalar_select %p257, %s254, 17
          %s259 = smul.addr %s258, 3
          %s260 = smul.addr %s256, 54
          %s261 = sadd.s32 %s259, %s260
          %s262 = smul.addr %s261, 8
          %s263 = scalar_lea.vmem %s2, %s262
          %s264 = smul.u32 %s19, 8
          %s265 = sadd.s32 %s264, 9
        $region36: #{tpu_custom_call.1} parent=23 // pred_fallthru
          _
      $region24: #{tpu_custom_call.1} parent=5 // pred_fallthru
        _
      %p266 = scmp.le.s32.totalorder 1, %s11
      %p267 = scmp.lt.s32.totalorder %s11, 5
      %p268 = pnand %p266, %p267
      %p269 = pneg %p268
      // Predicated region
      $region37: #{tpu_custom_call.1} parent=5 // pred_check
        _
      $region38: #{tpu_custom_call.1} parent=5 // pred_check_branch
        %271 = sbr.rel (%p268) target = $region40
      $region39: #{tpu_custom_call.1} parent=5 // pred_region
        %s272 = ssub.s32 %s11, 1
        %s273 = smul.u32 8, %s21
        %s274 = ssub.s32 18, %s273
        %p275 = scmp.lt.s32.totalorder %s274, 8
        %s276 = scalar_select %p275, %s274, 8
        %s277 = smul.u32 128, %s276
        %s278 = smul.u32 %s277, 3
        %p279 = scmp.lt.s32.totalorder %s20, 1
        %s280 = scalar_select %p279, %s20, 1
        %p281 = scmp.lt.s32.totalorder %s273, 17
        %s282 = scalar_select %p281, %s273, 17
        %s283 = smul.addr %s282, 3
        %s284 = smul.addr %s280, 54
        %s285 = sadd.s32 %s283, %s284
        %s286 = smul.addr %s285, 8
        %s287 = scalar_lea.vmem %s0, %s286
        %p288 = pneg %p51
        %p289 = pneg %p48
        %s290 = smul.u32 %s21, 8
        %s291 = sadd.s32 %s290, 8
        %p292 = scmp.lt.s32.totalorder %s20, 1
        %s293 = scalar_select %p292, %s20, 1
        %p294 = scmp.lt.s32.totalorder %s291, 17
        %s295 = scalar_select %p294, %s291, 17
        %s296 = smul.addr %s295, 3
        %s297 = smul.addr %s293, 54
        %s298 = sadd.s32 %s296, %s297
        %s299 = smul.addr %s298, 8
        %s300 = scalar_lea.vmem %s1, %s299
        %p301 = pneg %p83
        %p302 = pneg %p80
        %s303 = smul.u32 %s21, 8
        %s304 = sadd.s32 %s303, 9
        %p305 = scmp.lt.s32.totalorder %s20, 1
        %s306 = scalar_select %p305, %s20, 1
        %p307 = scmp.lt.s32.totalorder %s304, 17
        %s308 = scalar_select %p307, %s304, 17
        %s309 = smul.addr %s308, 3
        %s310 = smul.addr %s306, 54
        %s311 = sadd.s32 %s309, %s310
        %s312 = smul.addr %s311, 8
        %s313 = scalar_lea.vmem %s2, %s312
        %p314 = pneg %p115
        %p315 = pneg %p112
        %p316 = pneg %p136
        %p317 = pneg %p133
        %p318 = pneg %p157
        %p319 = pneg %p154
        %p320 = pneg %p185
        %p321 = pneg %p182
        %s322 = sand.u32 %s172, 1
        %s323 = sand.u32 %s172, 1
        %s324 = smul.addr %s323, 512
        %s325 = scalar_lea.vmem [#allocation3], %s324
        %s326 = smul.u32 8, %s21
        %s327 = ssub.s32 18, %s326
        %p328 = scmp.lt.s32.totalorder %s327, 8
        %s329 = scalar_select %p328, %s327, 8
        %s330 = smul.u32 128, %s329
        %s331 = smul.u32 %s330, 3
        %p332 = scmp.lt.s32.totalorder %s20, 1
        %s333 = scalar_select %p332, %s20, 1
        %p334 = scmp.lt.s32.totalorder %s326, 17
        %s335 = scalar_select %p334, %s326, 17
        %s336 = smul.addr %s335, 3
        %s337 = smul.addr %s333, 54
        %s338 = sadd.s32 %s336, %s337
        %s339 = smul.addr %s338, 8
        %s340 = scalar_lea.vmem %s0, %s339
        %s341 = smul.u32 8, %s21
        %s342 = ssub.s32 18, %s341
        %p343 = scmp.lt.s32.totalorder %s342, 8
        %s344 = scalar_select %p343, %s342, 8
        %s345 = smul.u32 128, %s344
        %s346 = smul.u32 %s345, 3
        %s347 = smul.u32 %s21, 8
        %s348 = sadd.s32 %s347, 8
        %p349 = scmp.lt.s32.totalorder %s20, 1
        %s350 = scalar_select %p349, %s20, 1
        %p351 = scmp.lt.s32.totalorder %s348, 17
        %s352 = scalar_select %p351, %s348, 17
        %s353 = smul.addr %s352, 3
        %s354 = smul.addr %s350, 54
        %s355 = sadd.s32 %s353, %s354
        %s356 = smul.addr %s355, 8
        %s357 = scalar_lea.vmem %s1, %s356
        %s358 = smul.u32 %s21, 8
        %s359 = sadd.s32 %s358, 8
        %s360 = smul.u32 %s21, 8
        %s361 = sadd.s32 %s360, 9
        %p362 = scmp.lt.s32.totalorder %s20, 1
        %s363 = scalar_select %p362, %s20, 1
        %p364 = scmp.lt.s32.totalorder %s361, 17
        %s365 = scalar_select %p364, %s361, 17
        %s366 = smul.addr %s365, 3
        %s367 = smul.addr %s363, 54
        %s368 = sadd.s32 %s366, %s367
        %s369 = smul.addr %s368, 8
        %s370 = scalar_lea.vmem %s2, %s369
        %s371 = smul.u32 %s21, 8
        %s372 = sadd.s32 %s371, 9
        %s373 = smul.u32 4, %s20
        %s374 = smul.u32 8, %s21
        %v375 = vld [vmem:[%s340] sm:$0xff]
        %v376 = vld [vmem:[%s340 + $0x8] sm:$0xff]
        %v377 = vld [vmem:[%s340 + $0x10] sm:$0x3]
        %v378 = vld [vmem:[%s340 + $0x18] sm:$0xff]
        %v379 = vld [vmem:[%s340 + $0x20] sm:$0xff]
        %v380 = vld [vmem:[%s340 + $0x28] sm:$0x3]
        %v381 = vld [vmem:[%s340 + $0x30] sm:$0xff]
        %v382 = vld [vmem:[%s340 + $0x38] sm:$0xff]
        %v383 = vld [vmem:[%s340 + $0x40] sm:$0x3]
        %v384 = vld [vmem:[%s340 + $0x48] sm:$0xff]
        %v385 = vld [vmem:[%s340 + $0x50] sm:$0xff]
        %v386 = vld [vmem:[%s340 + $0x58] sm:$0x3]
        %v387 = vld [vmem:[%s340 + $0x60] sm:$0xff]
        %v388 = vld [vmem:[%s340 + $0x68] sm:$0xff]
        %v389 = vld [vmem:[%s340 + $0x70] sm:$0x3]
        %v390 = vld [vmem:[%s340 + $0x78] sm:$0xff]
        %v391 = vld [vmem:[%s340 + $0x80] sm:$0xff]
        %v392 = vld [vmem:[%s340 + $0x88] sm:$0x3]
        %v393 = vld [vmem:[%s340 + $0x90] sm:$0xff]
        %v394 = vld [vmem:[%s340 + $0x98] sm:$0xff]
        %v395 = vld [vmem:[%s340 + $0xa0] sm:$0x3]
        %v396 = vld [vmem:[%s340 + $0xa8] sm:$0xff]
        %v397 = vld [vmem:[%s340 + $0xb0] sm:$0xff]
        %v398 = vld [vmem:[%s340 + $0xb8] sm:$0x3]
        %vm399 = vcmask 31744
        %400 = vst.msk [vmem:[#allocation2] sm:$0xff] %vm399, %v375
        %401 = vst.msk [vmem:[#allocation2 + $0x8] sm:$0xff] %vm399, %v376
        %vm402 = vcmask 25600
        %403 = vst.msk [vmem:[#allocation2 + $0x10] sm:$0x3] %vm402, %v377
        %404 = vst.msk [vmem:[#allocation2 + $0x18] sm:$0xff] %vm399, %v378
        %405 = vst.msk [vmem:[#allocation2 + $0x20] sm:$0xff] %vm399, %v379
        %406 = vst.msk [vmem:[#allocation2 + $0x28] sm:$0x3] %vm402, %v380
        %407 = vst.msk [vmem:[#allocation2 + $0x30] sm:$0xff] %vm399, %v381
        %408 = vst.msk [vmem:[#allocation2 + $0x38] sm:$0xff] %vm399, %v382
        %409 = vst.msk [vmem:[#allocation2 + $0x40] sm:$0x3] %vm402, %v383
        %410 = vst.msk [vmem:[#allocation2 + $0x48] sm:$0xff] %vm399, %v384
        %411 = vst.msk [vmem:[#allocation2 + $0x50] sm:$0xff] %vm399, %v385
        %412 = vst.msk [vmem:[#allocation2 + $0x58] sm:$0x3] %vm402, %v386
        %413 = vst.msk [vmem:[#allocation2 + $0x60] sm:$0xff] %vm399, %v387
        %414 = vst.msk [vmem:[#allocation2 + $0x68] sm:$0xff] %vm399, %v388
        %415 = vst.msk [vmem:[#allocation2 + $0x70] sm:$0x3] %vm402, %v389
        %416 = vst.msk [vmem:[#allocation2 + $0x78] sm:$0xff] %vm399, %v390
        %417 = vst.msk [vmem:[#allocation2 + $0x80] sm:$0xff] %vm399, %v391
        %418 = vst.msk [vmem:[#allocation2 + $0x88] sm:$0x3] %vm402, %v392
        %419 = vst.msk [vmem:[#allocation2 + $0x90] sm:$0xff] %vm399, %v393
        %420 = vst.msk [vmem:[#allocation2 + $0x98] sm:$0xff] %vm399, %v394
        %421 = vst.msk [vmem:[#allocation2 + $0xa0] sm:$0x3] %vm402, %v395
        %422 = vst.msk [vmem:[#allocation2 + $0xa8] sm:$0xff] %vm399, %v396
        %423 = vst.msk [vmem:[#allocation2 + $0xb0] sm:$0xff] %vm399, %v397
        %424 = vst.msk [vmem:[#allocation2 + $0xb8] sm:$0x3] %vm402, %v398
        %v425 = vld [vmem:[%s357] sm:$0xff]
        %v426 = vld [vmem:[%s357 + $0x8] sm:$0xff]
        %v427 = vld [vmem:[%s357 + $0x10] sm:$0x3]
        %s428 = scalar_lea.vmem [#allocation2], 192
        %429 = vst.msk [vmem:[%s428] sm:$0xff] %vm399, %v425
        %430 = vst.msk [vmem:[%s428 + $0x8] sm:$0xff] %vm399, %v426
        %431 = vst.msk [vmem:[%s428 + $0x10] sm:$0x3] %vm402, %v427
        %v432 = vld [vmem:[%s370] sm:$0xff]
        %v433 = vld [vmem:[%s370 + $0x8] sm:$0xff]
        %v434 = vld [vmem:[%s370 + $0x10] sm:$0x3]
        %s435 = scalar_lea.vmem [#allocation2], 216
        %436 = vst.msk [vmem:[%s435] sm:$0xff] %vm399, %v432
        %437 = vst.msk [vmem:[%s435 + $0x8] sm:$0xff] %vm399, %v433
        %438 = vst.msk [vmem:[%s435 + $0x10] sm:$0x3] %vm402, %v434
        %v439 = vld [vmem:[%s4] sm:$0x1]
        %v440 = vld [vmem:[#allocation2] sm:$0xff]
        %v441 = vld [vmem:[#allocation2 + $0x8] sm:$0xff]
        %v442 = vld [vmem:[#allocation2 + $0x18] sm:$0xff]
        %v443 = vld [vmem:[#allocation2 + $0x20] sm:$0xff]
        %v444 = vld [vmem:[#allocation2 + $0x30] sm:$0xff]
        %v445 = vld [vmem:[#allocation2 + $0x38] sm:$0xff]
        %v446 = vld [vmem:[#allocation2 + $0x48] sm:$0xff]
        %v447 = vld [vmem:[#allocation2 + $0x50] sm:$0xff]
        %v448 = vld [vmem:[#allocation2 + $0x60] sm:$0xff]
        %v449 = vld [vmem:[#allocation2 + $0x68] sm:$0xff]
        %v450 = vld [vmem:[#allocation2 + $0x78] sm:$0xff]
        %v451 = vld [vmem:[#allocation2 + $0x80] sm:$0xff]
        %v452 = vld [vmem:[#allocation2 + $0x90] sm:$0xff]
        %v453 = vld [vmem:[#allocation2 + $0x98] sm:$0xff]
        %v454 = vld [vmem:[#allocation2 + $0xa8] sm:$0xff]
        %v455 = vld [vmem:[#allocation2 + $0xb0] sm:$0xff]
        %v456 = vld [vmem:[%s3] sm:$0xf]
        %v457 = vld [vmem:[#allocation2 + $0x1] sm:$0xff]
        %v458 = vld [vmem:[#allocation2 + $0x9] sm:$0xff]
        %v459 = vld [vmem:[#allocation2 + $0x19] sm:$0xff]
        %v460 = vld [vmem:[#allocation2 + $0x21] sm:$0xff]
        %v461 = vld [vmem:[#allocation2 + $0x31] sm:$0xff]
        %v462 = vld [vmem:[#allocation2 + $0x39] sm:$0xff]
        %v463 = vld [vmem:[#allocation2 + $0x49] sm:$0xff]
        %v464 = vld [vmem:[#allocation2 + $0x51] sm:$0xff]
        %v465 = vld [vmem:[#allocation2 + $0x61] sm:$0xff]
        %v466 = vld [vmem:[#allocation2 + $0x69] sm:$0xff]
        %v467 = vld [vmem:[#allocation2 + $0x79] sm:$0xff]
        %v468 = vld [vmem:[#allocation2 + $0x81] sm:$0xff]
        %v469 = vld [vmem:[#allocation2 + $0x91] sm:$0xff]
        %v470 = vld [vmem:[#allocation2 + $0x99] sm:$0xff]
        %v471 = vld [vmem:[#allocation2 + $0xa9] sm:$0xff]
        %v472 = vld [vmem:[#allocation2 + $0xb1] sm:$0xff]
        %s473 = scalar_lea.vmem %s3, 4
        %v474 = vld [vmem:[%s473] sm:$0xf]
        %v476 = vsel %vm399, %v457, 0
        %v479 = vsel %vm399, %v458, 0
        %v482 = vsel %vm399, %v459, 0
        %v485 = vsel %vm399, %v460, 0
        %v488 = vsel %vm399, %v461, 0
        %v491 = vsel %vm399, %v462, 0
        %v494 = vsel %vm399, %v463, 0
        %v497 = vsel %vm399, %v464, 0
        %v500 = vsel %vm399, %v465, 0
        %v503 = vsel %vm399, %v466, 0
        %v506 = vsel %vm399, %v467, 0
        %v509 = vsel %vm399, %v468, 0
        %v512 = vsel %vm399, %v469, 0
        %v515 = vsel %vm399, %v470, 0
        %v518 = vsel %vm399, %v471, 0
        %v521 = vsel %vm399, %v472, 0
        %vm523 = vcmask 1043456
        %v525 = vsel %vm523, %v474, 0
        %527 = vmatprep.subr.mxu0 0.0
        %528 = vmatpush1.msra.mxu0 0.0
        %529 = vmatprep.subr.mxu0 0.0
        %530 = vmatpush1.msra.mxu0 0.0
        %531 = vmatprep.subr.mxu0 0.0
        %532 = vmatpush1.msra.mxu0 0.0
        %533 = vmatprep.subr.mxu0 0.0
        %534 = vmatpush1.msra.mxu0 0.0
        %535 = vmatprep.subr.mxu0 0.0
        %536 = vmatpush1.msra.mxu0 0.0
        %537 = vmatprep.subr.mxu0 0.0
        %538 = vmatpush1.msra.mxu0 0.0
        %539 = vmatprep.subr.mxu0 0.0
        %540 = vmatpush1.msra.mxu0 0.0
        %541 = vmatprep.subr.mxu0 0.0
        %542 = vmatpush1.msra.mxu0 0.0
        %543 = vmatprep.subr.mxu0 0.0
        %544 = vmatpush1.msra.mxu0 0.0
        %545 = vmatprep.subr.mxu0 0.0
        %546 = vmatpush1.msra.mxu0 0.0
        %547 = vmatprep.subr.mxu0 0.0
        %548 = vmatpush1.msra.mxu0 0.0
        %549 = vmatprep.subr.mxu0 0.0
        %550 = vmatpush1.msra.mxu0 0.0
        %551 = vmatprep.subr.mxu0 0.0
        %552 = vmatpush1.msra.mxu0 0.0
        %553 = vmatprep.subr.mxu0 0.0
        %554 = vmatpush1.msra.mxu0 0.0
        %555 = vmatprep.subr.mxu0 0.0
        %556 = vmatpush1.msra.mxu0 0.0
        %557 = vmatprep.subr.mxu0 0.0
        %558 = vmatpush1.msra.mxu0 %v525
        %559 = vmatprep.subr.mxu0 0.0
        %560 = vmatpush2.msra.mxu0 0.0
        %561 = vmatprep.subr.mxu0 0.0
        %562 = vmatpush2.msra.mxu0 0.0
        %563 = vmatprep.subr.mxu0 0.0
        %564 = vmatpush2.msra.mxu0 0.0
        %565 = vmatprep.subr.mxu0 0.0
        %566 = vmatpush2.msra.mxu0 0.0
        %567 = vmatprep.subr.mxu0 0.0
        %568 = vmatpush2.msra.mxu0 0.0
        %569 = vmatprep.subr.mxu0 0.0
        %570 = vmatpush2.msra.mxu0 0.0
        %571 = vmatprep.subr.mxu0 0.0
        %572 = vmatpush2.msra.mxu0 0.0
        %573 = vmatprep.subr.mxu0 0.0
        %574 = vmatpush2.msra.mxu0 0.0
        %575 = vmatprep.subr.mxu0 0.0
        %576 = vmatpush2.msra.mxu0 0.0
        %577 = vmatprep.subr.mxu0 0.0
        %578 = vmatpush2.msra.mxu0 0.0
        %579 = vmatprep.subr.mxu0 0.0
        %580 = vmatpush2.msra.mxu0 0.0
        %581 = vmatprep.subr.mxu0 0.0
        %582 = vmatpush2.msra.mxu0 0.0
        %583 = vmatprep.subr.mxu0 0.0
        %584 = vmatpush2.msra.mxu0 0.0
        %585 = vmatprep.subr.mxu0 0.0
        %586 = vmatpush2.msra.mxu0 0.0
        %587 = vmatprep.subr.mxu0 0.0
        %588 = vmatpush2.msra.mxu0 0.0
        %589 = vmatprep.subr.mxu0 0.0
        %590 = vmatpush2.msra.mxu0 0.0
        %591 = vmatprep.mubr.f32.mxu0 0.0
        %592 = vmatmul.mubr.f32.gmra.mxu0 %v476
        %v593 = vpop.f32.mrf.mxu0
        %v594 = vadd.f32 0.0, %v593
        %v595 = vpop.f32.mrf.mxu0
        %596 = vmatprep.mubr.f32.mxu0 0.0
        %597 = vmatmul.mubr.f32.gmra.mxu0 %v479
        %v598 = vpop.f32.mrf.mxu0
        %v599 = vadd.f32 0.0, %v598
        %v600 = vpop.f32.mrf.mxu0
        %601 = vmatprep.mubr.f32.mxu0 0.0
        %602 = vmatmul.mubr.f32.gmra.mxu0 %v482
        %v603 = vpop.f32.mrf.mxu0
        %v604 = vadd.f32 0.0, %v603
        %v605 = vpop.f32.mrf.mxu0
        %606 = vmatprep.mubr.f32.mxu0 0.0
        %607 = vmatmul.mubr.f32.gmra.mxu0 %v485
        %v608 = vpop.f32.mrf.mxu0
        %v609 = vadd.f32 0.0, %v608
        %v610 = vpop.f32.mrf.mxu0
        %611 = vmatprep.mubr.f32.mxu0 0.0
        %612 = vmatmul.mubr.f32.gmra.mxu0 %v488
        %v613 = vpop.f32.mrf.mxu0
        %v614 = vadd.f32 0.0, %v613
        %v615 = vpop.f32.mrf.mxu0
        %616 = vmatprep.mubr.f32.mxu0 0.0
        %617 = vmatmul.mubr.f32.gmra.mxu0 %v491
        %v618 = vpop.f32.mrf.mxu0
        %v619 = vadd.f32 0.0, %v618
        %v620 = vpop.f32.mrf.mxu0
        %621 = vmatprep.mubr.f32.mxu0 0.0
        %622 = vmatmul.mubr.f32.gmra.mxu0 %v494
        %v623 = vpop.f32.mrf.mxu0
        %v624 = vadd.f32 0.0, %v623
        %v625 = vpop.f32.mrf.mxu0
        %626 = vmatprep.mubr.f32.mxu0 0.0
        %627 = vmatmul.mubr.f32.gmra.mxu0 %v497
        %v628 = vpop.f32.mrf.mxu0
        %v629 = vadd.f32 0.0, %v628
        %v630 = vpop.f32.mrf.mxu0
        %631 = vmatprep.mubr.f32.mxu0 0.0
        %632 = vmatmul.mubr.f32.gmra.mxu0 %v500
        %v633 = vpop.f32.mrf.mxu0
        %v634 = vadd.f32 0.0, %v633
        %v635 = vpop.f32.mrf.mxu0
        %636 = vmatprep.mubr.f32.mxu0 0.0
        %637 = vmatmul.mubr.f32.gmra.mxu0 %v503
        %v638 = vpop.f32.mrf.mxu0
        %v639 = vadd.f32 0.0, %v638
        %v640 = vpop.f32.mrf.mxu0
        %641 = vmatprep.mubr.f32.mxu0 0.0
        %642 = vmatmul.mubr.f32.gmra.mxu0 %v506
        %v643 = vpop.f32.mrf.mxu0
        %v644 = vadd.f32 0.0, %v643
        %v645 = vpop.f32.mrf.mxu0
        %646 = vmatprep.mubr.f32.mxu0 0.0
        %647 = vmatmul.mubr.f32.gmra.mxu0 %v509
        %v648 = vpop.f32.mrf.mxu0
        %v649 = vadd.f32 0.0, %v648
        %v650 = vpop.f32.mrf.mxu0
        %651 = vmatprep.mubr.f32.mxu0 0.0
        %652 = vmatmul.mubr.f32.gmra.mxu0 %v512
        %v653 = vpop.f32.mrf.mxu0
        %v654 = vadd.f32 0.0, %v653
        %v655 = vpop.f32.mrf.mxu0
        %656 = vmatprep.mubr.f32.mxu0 0.0
        %657 = vmatmul.mubr.f32.gmra.mxu0 %v515
        %v658 = vpop.f32.mrf.mxu0
        %v659 = vadd.f32 0.0, %v658
        %v660 = vpop.f32.mrf.mxu0
        %661 = vmatprep.mubr.f32.mxu0 0.0
        %662 = vmatmul.mubr.f32.gmra.mxu0 %v518
        %v663 = vpop.f32.mrf.mxu0
        %v664 = vadd.f32 0.0, %v663
        %v665 = vpop.f32.mrf.mxu0
        %666 = vmatprep.mubr.f32.mxu0 0.0
        %667 = vmatmul.mubr.f32.gmra.mxu0 %v521
        %v668 = vpop.f32.mrf.mxu0
        %v669 = vadd.f32 0.0, %v668
        %v670 = vpop.f32.mrf.mxu0
        %671 = vdwg.mxu0
        %v673 = vsel %vm399, %v440, 0
        %v676 = vsel %vm399, %v441, 0
        %v679 = vsel %vm399, %v442, 0
        %v682 = vsel %vm399, %v443, 0
        %v685 = vsel %vm399, %v444, 0
        %v688 = vsel %vm399, %v445, 0
        %v691 = vsel %vm399, %v446, 0
        %v694 = vsel %vm399, %v447, 0
        %v697 = vsel %vm399, %v448, 0
        %v700 = vsel %vm399, %v449, 0
        %v703 = vsel %vm399, %v450, 0
        %v706 = vsel %vm399, %v451, 0
        %v709 = vsel %vm399, %v452, 0
        %v712 = vsel %vm399, %v453, 0
        %v715 = vsel %vm399, %v454, 0
        %v718 = vsel %vm399, %v455, 0
        %v721 = vsel %vm523, %v456, 0
        %723 = vmatprep.subr.mxu0 0.0
        %724 = vmatpush1.msra.mxu0 0.0
        %725 = vmatprep.subr.mxu0 0.0
        %726 = vmatpush1.msra.mxu0 0.0
        %727 = vmatprep.subr.mxu0 0.0
        %728 = vmatpush1.msra.mxu0 0.0
        %729 = vmatprep.subr.mxu0 0.0
        %730 = vmatpush1.msra.mxu0 0.0
        %731 = vmatprep.subr.mxu0 0.0
        %732 = vmatpush1.msra.mxu0 0.0
        %733 = vmatprep.subr.mxu0 0.0
        %734 = vmatpush1.msra.mxu0 0.0
        %735 = vmatprep.subr.mxu0 0.0
        %736 = vmatpush1.msra.mxu0 0.0
        %737 = vmatprep.subr.mxu0 0.0
        %738 = vmatpush1.msra.mxu0 0.0
        %739 = vmatprep.subr.mxu0 0.0
        %740 = vmatpush1.msra.mxu0 0.0
        %741 = vmatprep.subr.mxu0 0.0
        %742 = vmatpush1.msra.mxu0 0.0
        %743 = vmatprep.subr.mxu0 0.0
        %744 = vmatpush1.msra.mxu0 0.0
        %745 = vmatprep.subr.mxu0 0.0
        %746 = vmatpush1.msra.mxu0 0.0
        %747 = vmatprep.subr.mxu0 0.0
        %748 = vmatpush1.msra.mxu0 0.0
        %749 = vmatprep.subr.mxu0 0.0
        %750 = vmatpush1.msra.mxu0 0.0
        %751 = vmatprep.subr.mxu0 0.0
        %752 = vmatpush1.msra.mxu0 0.0
        %753 = vmatprep.subr.mxu0 0.0
        %754 = vmatpush1.msra.mxu0 %v721
        %755 = vmatprep.subr.mxu0 0.0
        %756 = vmatpush2.msra.mxu0 0.0
        %757 = vmatprep.subr.mxu0 0.0
        %758 = vmatpush2.msra.mxu0 0.0
        %759 = vmatprep.subr.mxu0 0.0
        %760 = vmatpush2.msra.mxu0 0.0
        %761 = vmatprep.subr.mxu0 0.0
        %762 = vmatpush2.msra.mxu0 0.0
        %763 = vmatprep.subr.mxu0 0.0
        %764 = vmatpush2.msra.mxu0 0.0
        %765 = vmatprep.subr.mxu0 0.0
        %766 = vmatpush2.msra.mxu0 0.0
        %767 = vmatprep.subr.mxu0 0.0
        %768 = vmatpush2.msra.mxu0 0.0
        %769 = vmatprep.subr.mxu0 0.0
        %770 = vmatpush2.msra.mxu0 0.0
        %771 = vmatprep.subr.mxu0 0.0
        %772 = vmatpush2.msra.mxu0 0.0
        %773 = vmatprep.subr.mxu0 0.0
        %774 = vmatpush2.msra.mxu0 0.0
        %775 = vmatprep.subr.mxu0 0.0
        %776 = vmatpush2.msra.mxu0 0.0
        %777 = vmatprep.subr.mxu0 0.0
        %778 = vmatpush2.msra.mxu0 0.0
        %779 = vmatprep.subr.mxu0 0.0
        %780 = vmatpush2.msra.mxu0 0.0
        %781 = vmatprep.subr.mxu0 0.0
        %782 = vmatpush2.msra.mxu0 0.0
        %783 = vmatprep.subr.mxu0 0.0
        %784 = vmatpush2.msra.mxu0 0.0
        %785 = vmatprep.subr.mxu0 0.0
        %786 = vmatpush2.msra.mxu0 0.0
        %787 = vmatprep.mubr.f32.mxu0 0.0
        %788 = vmatmul.mubr.f32.gmra.mxu0 %v673
        %v789 = vpop.f32.mrf.mxu0
        %v790 = vadd.f32 %v594, %v789
        %v791 = vpop.f32.mrf.mxu0
        %792 = vmatprep.mubr.f32.mxu0 0.0
        %793 = vmatmul.mubr.f32.gmra.mxu0 %v676
        %v794 = vpop.f32.mrf.mxu0
        %v795 = vadd.f32 %v599, %v794
        %v796 = vpop.f32.mrf.mxu0
        %797 = vmatprep.mubr.f32.mxu0 0.0
        %798 = vmatmul.mubr.f32.gmra.mxu0 %v679
        %v799 = vpop.f32.mrf.mxu0
        %v800 = vadd.f32 %v604, %v799
        %v801 = vpop.f32.mrf.mxu0
        %802 = vmatprep.mubr.f32.mxu0 0.0
        %803 = vmatmul.mubr.f32.gmra.mxu0 %v682
        %v804 = vpop.f32.mrf.mxu0
        %v805 = vadd.f32 %v609, %v804
        %v806 = vpop.f32.mrf.mxu0
        %807 = vmatprep.mubr.f32.mxu0 0.0
        %808 = vmatmul.mubr.f32.gmra.mxu0 %v685
        %v809 = vpop.f32.mrf.mxu0
        %v810 = vadd.f32 %v614, %v809
        %v811 = vpop.f32.mrf.mxu0
        %812 = vmatprep.mubr.f32.mxu0 0.0
        %813 = vmatmul.mubr.f32.gmra.mxu0 %v688
        %v814 = vpop.f32.mrf.mxu0
        %v815 = vadd.f32 %v619, %v814
        %v816 = vpop.f32.mrf.mxu0
        %817 = vmatprep.mubr.f32.mxu0 0.0
        %818 = vmatmul.mubr.f32.gmra.mxu0 %v691
        %v819 = vpop.f32.mrf.mxu0
        %v820 = vadd.f32 %v624, %v819
        %v821 = vpop.f32.mrf.mxu0
        %822 = vmatprep.mubr.f32.mxu0 0.0
        %823 = vmatmul.mubr.f32.gmra.mxu0 %v694
        %v824 = vpop.f32.mrf.mxu0
        %v825 = vadd.f32 %v629, %v824
        %v826 = vpop.f32.mrf.mxu0
        %827 = vmatprep.mubr.f32.mxu0 0.0
        %828 = vmatmul.mubr.f32.gmra.mxu0 %v697
        %v829 = vpop.f32.mrf.mxu0
        %v830 = vadd.f32 %v634, %v829
        %v831 = vpop.f32.mrf.mxu0
        %832 = vmatprep.mubr.f32.mxu0 0.0
        %833 = vmatmul.mubr.f32.gmra.mxu0 %v700
        %v834 = vpop.f32.mrf.mxu0
        %v835 = vadd.f32 %v639, %v834
        %v836 = vpop.f32.mrf.mxu0
        %837 = vmatprep.mubr.f32.mxu0 0.0
        %838 = vmatmul.mubr.f32.gmra.mxu0 %v703
        %v839 = vpop.f32.mrf.mxu0
        %v840 = vadd.f32 %v644, %v839
        %v841 = vpop.f32.mrf.mxu0
        %842 = vmatprep.mubr.f32.mxu0 0.0
        %843 = vmatmul.mubr.f32.gmra.mxu0 %v706
        %v844 = vpop.f32.mrf.mxu0
        %v845 = vadd.f32 %v649, %v844
        %v846 = vpop.f32.mrf.mxu0
        %847 = vmatprep.mubr.f32.mxu0 0.0
        %848 = vmatmul.mubr.f32.gmra.mxu0 %v709
        %v849 = vpop.f32.mrf.mxu0
        %v850 = vadd.f32 %v654, %v849
        %v851 = vpop.f32.mrf.mxu0
        %852 = vmatprep.mubr.f32.mxu0 0.0
        %853 = vmatmul.mubr.f32.gmra.mxu0 %v712
        %v854 = vpop.f32.mrf.mxu0
        %v855 = vadd.f32 %v659, %v854
        %v856 = vpop.f32.mrf.mxu0
        %857 = vmatprep.mubr.f32.mxu0 0.0
        %858 = vmatmul.mubr.f32.gmra.mxu0 %v715
        %v859 = vpop.f32.mrf.mxu0
        %v860 = vadd.f32 %v664, %v859
        %v861 = vpop.f32.mrf.mxu0
        %862 = vmatprep.mubr.f32.mxu0 0.0
        %863 = vmatmul.mubr.f32.gmra.mxu0 %v718
        %v864 = vpop.f32.mrf.mxu0
        %v865 = vadd.f32 %v669, %v864
        %v866 = vpop.f32.mrf.mxu0
        %867 = vdwg.mxu0
        %s868 = scalar_lea.vmem [#allocation2], 24
        %v869 = vld [vmem:[%s868] sm:$0xff]
        %v870 = vld [vmem:[%s868 + $0x8] sm:$0xff]
        %v871 = vld [vmem:[%s868 + $0x18] sm:$0xff]
        %v872 = vld [vmem:[%s868 + $0x20] sm:$0xff]
        %v873 = vld [vmem:[%s868 + $0x30] sm:$0xff]
        %v874 = vld [vmem:[%s868 + $0x38] sm:$0xff]
        %v875 = vld [vmem:[%s868 + $0x48] sm:$0xff]
        %v876 = vld [vmem:[%s868 + $0x50] sm:$0xff]
        %v877 = vld [vmem:[%s868 + $0x60] sm:$0xff]
        %v878 = vld [vmem:[%s868 + $0x68] sm:$0xff]
        %v879 = vld [vmem:[%s868 + $0x78] sm:$0xff]
        %v880 = vld [vmem:[%s868 + $0x80] sm:$0xff]
        %v881 = vld [vmem:[%s868 + $0x90] sm:$0xff]
        %v882 = vld [vmem:[%s868 + $0x98] sm:$0xff]
        %v883 = vld [vmem:[%s868 + $0xa8] sm:$0xff]
        %v884 = vld [vmem:[%s868 + $0xb0] sm:$0xff]
        %s885 = scalar_lea.vmem %s3, 8
        %v886 = vld [vmem:[%s885] sm:$0xf]
        %v888 = vsel %vm399, %v869, 0
        %v891 = vsel %vm399, %v870, 0
        %v894 = vsel %vm399, %v871, 0
        %v897 = vsel %vm399, %v872, 0
        %v900 = vsel %vm399, %v873, 0
        %v903 = vsel %vm399, %v874, 0
        %v906 = vsel %vm399, %v875, 0
        %v909 = vsel %vm399, %v876, 0
        %v912 = vsel %vm399, %v877, 0
        %v915 = vsel %vm399, %v878, 0
        %v918 = vsel %vm399, %v879, 0
        %v921 = vsel %vm399, %v880, 0
        %v924 = vsel %vm399, %v881, 0
        %v927 = vsel %vm399, %v882, 0
        %v930 = vsel %vm399, %v883, 0
        %v933 = vsel %vm399, %v884, 0
        %v936 = vsel %vm523, %v886, 0
        %938 = vmatprep.subr.mxu0 0.0
        %939 = vmatpush1.msra.mxu0 0.0
        %940 = vmatprep.subr.mxu0 0.0
        %941 = vmatpush1.msra.mxu0 0.0
        %942 = vmatprep.subr.mxu0 0.0
        %943 = vmatpush1.msra.mxu0 0.0
        %944 = vmatprep.subr.mxu0 0.0
        %945 = vmatpush1.msra.mxu0 0.0
        %946 = vmatprep.subr.mxu0 0.0
        %947 = vmatpush1.msra.mxu0 0.0
        %948 = vmatprep.subr.mxu0 0.0
        %949 = vmatpush1.msra.mxu0 0.0
        %950 = vmatprep.subr.mxu0 0.0
        %951 = vmatpush1.msra.mxu0 0.0
        %952 = vmatprep.subr.mxu0 0.0
        %953 = vmatpush1.msra.mxu0 0.0
        %954 = vmatprep.subr.mxu0 0.0
        %955 = vmatpush1.msra.mxu0 0.0
        %956 = vmatprep.subr.mxu0 0.0
        %957 = vmatpush1.msra.mxu0 0.0
        %958 = vmatprep.subr.mxu0 0.0
        %959 = vmatpush1.msra.mxu0 0.0
        %960 = vmatprep.subr.mxu0 0.0
        %961 = vmatpush1.msra.mxu0 0.0
        %962 = vmatprep.subr.mxu0 0.0
        %963 = vmatpush1.msra.mxu0 0.0
        %964 = vmatprep.subr.mxu0 0.0
        %965 = vmatpush1.msra.mxu0 0.0
        %966 = vmatprep.subr.mxu0 0.0
        %967 = vmatpush1.msra.mxu0 0.0
        %968 = vmatprep.subr.mxu0 0.0
        %969 = vmatpush1.msra.mxu0 %v936
        %970 = vmatprep.subr.mxu0 0.0
        %971 = vmatpush2.msra.mxu0 0.0
        %972 = vmatprep.subr.mxu0 0.0
        %973 = vmatpush2.msra.mxu0 0.0
        %974 = vmatprep.subr.mxu0 0.0
        %975 = vmatpush2.msra.mxu0 0.0
        %976 = vmatprep.subr.mxu0 0.0
        %977 = vmatpush2.msra.mxu0 0.0
        %978 = vmatprep.subr.mxu0 0.0
        %979 = vmatpush2.msra.mxu0 0.0
        %980 = vmatprep.subr.mxu0 0.0
        %981 = vmatpush2.msra.mxu0 0.0
        %982 = vmatprep.subr.mxu0 0.0
        %983 = vmatpush2.msra.mxu0 0.0
        %984 = vmatprep.subr.mxu0 0.0
        %985 = vmatpush2.msra.mxu0 0.0
        %986 = vmatprep.subr.mxu0 0.0
        %987 = vmatpush2.msra.mxu0 0.0
        %988 = vmatprep.subr.mxu0 0.0
        %989 = vmatpush2.msra.mxu0 0.0
        %990 = vmatprep.subr.mxu0 0.0
        %991 = vmatpush2.msra.mxu0 0.0
        %992 = vmatprep.subr.mxu0 0.0
        %993 = vmatpush2.msra.mxu0 0.0
        %994 = vmatprep.subr.mxu0 0.0
        %995 = vmatpush2.msra.mxu0 0.0
        %996 = vmatprep.subr.mxu0 0.0
        %997 = vmatpush2.msra.mxu0 0.0
        %998 = vmatprep.subr.mxu0 0.0
        %999 = vmatpush2.msra.mxu0 0.0
        %1000 = vmatprep.subr.mxu0 0.0
        %1001 = vmatpush2.msra.mxu0 0.0
        %1002 = vmatprep.mubr.f32.mxu0 0.0
        %1003 = vmatmul.mubr.f32.gmra.mxu0 %v888
        %v1004 = vpop.f32.mrf.mxu0
        %v1005 = vadd.f32 0.0, %v1004
        %v1006 = vpop.f32.mrf.mxu0
        %1007 = vmatprep.mubr.f32.mxu0 0.0
        %1008 = vmatmul.mubr.f32.gmra.mxu0 %v891
        %v1009 = vpop.f32.mrf.mxu0
        %v1010 = vadd.f32 0.0, %v1009
        %v1011 = vpop.f32.mrf.mxu0
        %1012 = vmatprep.mubr.f32.mxu0 0.0
        %1013 = vmatmul.mubr.f32.gmra.mxu0 %v894
        %v1014 = vpop.f32.mrf.mxu0
        %v1015 = vadd.f32 0.0, %v1014
        %v1016 = vpop.f32.mrf.mxu0
        %1017 = vmatprep.mubr.f32.mxu0 0.0
        %1018 = vmatmul.mubr.f32.gmra.mxu0 %v897
        %v1019 = vpop.f32.mrf.mxu0
        %v1020 = vadd.f32 0.0, %v1019
        %v1021 = vpop.f32.mrf.mxu0
        %1022 = vmatprep.mubr.f32.mxu0 0.0
        %1023 = vmatmul.mubr.f32.gmra.mxu0 %v900
        %v1024 = vpop.f32.mrf.mxu0
        %v1025 = vadd.f32 0.0, %v1024
        %v1026 = vpop.f32.mrf.mxu0
        %1027 = vmatprep.mubr.f32.mxu0 0.0
        %1028 = vmatmul.mubr.f32.gmra.mxu0 %v903
        %v1029 = vpop.f32.mrf.mxu0
        %v1030 = vadd.f32 0.0, %v1029
        %v1031 = vpop.f32.mrf.mxu0
        %1032 = vmatprep.mubr.f32.mxu0 0.0
        %1033 = vmatmul.mubr.f32.gmra.mxu0 %v906
        %v1034 = vpop.f32.mrf.mxu0
        %v1035 = vadd.f32 0.0, %v1034
        %v1036 = vpop.f32.mrf.mxu0
        %1037 = vmatprep.mubr.f32.mxu0 0.0
        %1038 = vmatmul.mubr.f32.gmra.mxu0 %v909
        %v1039 = vpop.f32.mrf.mxu0
        %v1040 = vadd.f32 0.0, %v1039
        %v1041 = vpop.f32.mrf.mxu0
        %1042 = vmatprep.mubr.f32.mxu0 0.0
        %1043 = vmatmul.mubr.f32.gmra.mxu0 %v912
        %v1044 = vpop.f32.mrf.mxu0
        %v1045 = vadd.f32 0.0, %v1044
        %v1046 = vpop.f32.mrf.mxu0
        %1047 = vmatprep.mubr.f32.mxu0 0.0
        %1048 = vmatmul.mubr.f32.gmra.mxu0 %v915
        %v1049 = vpop.f32.mrf.mxu0
        %v1050 = vadd.f32 0.0, %v1049
        %v1051 = vpop.f32.mrf.mxu0
        %1052 = vmatprep.mubr.f32.mxu0 0.0
        %1053 = vmatmul.mubr.f32.gmra.mxu0 %v918
        %v1054 = vpop.f32.mrf.mxu0
        %v1055 = vadd.f32 0.0, %v1054
        %v1056 = vpop.f32.mrf.mxu0
        %1057 = vmatprep.mubr.f32.mxu0 0.0
        %1058 = vmatmul.mubr.f32.gmra.mxu0 %v921
        %v1059 = vpop.f32.mrf.mxu0
        %v1060 = vadd.f32 0.0, %v1059
        %v1061 = vpop.f32.mrf.mxu0
        %1062 = vmatprep.mubr.f32.mxu0 0.0
        %1063 = vmatmul.mubr.f32.gmra.mxu0 %v924
        %v1064 = vpop.f32.mrf.mxu0
        %v1065 = vadd.f32 0.0, %v1064
        %v1066 = vpop.f32.mrf.mxu0
        %1067 = vmatprep.mubr.f32.mxu0 0.0
        %1068 = vmatmul.mubr.f32.gmra.mxu0 %v927
        %v1069 = vpop.f32.mrf.mxu0
        %v1070 = vadd.f32 0.0, %v1069
        %v1071 = vpop.f32.mrf.mxu0
        %1072 = vmatprep.mubr.f32.mxu0 0.0
        %1073 = vmatmul.mubr.f32.gmra.mxu0 %v930
        %v1074 = vpop.f32.mrf.mxu0
        %v1075 = vadd.f32 0.0, %v1074
        %v1076 = vpop.f32.mrf.mxu0
        %1077 = vmatprep.mubr.f32.mxu0 0.0
        %1078 = vmatmul.mubr.f32.gmra.mxu0 %v933
        %v1079 = vpop.f32.mrf.mxu0
        %v1080 = vadd.f32 0.0, %v1079
        %v1081 = vpop.f32.mrf.mxu0
        %1082 = vdwg.mxu0
        %v1083 = vadd.f32 %v790, %v1005
        %v1084 = vadd.f32 %v795, %v1010
        %v1085 = vadd.f32 %v800, %v1015
        %v1086 = vadd.f32 %v805, %v1020
        %v1087 = vadd.f32 %v810, %v1025
        %v1088 = vadd.f32 %v815, %v1030
        %v1089 = vadd.f32 %v820, %v1035
        %v1090 = vadd.f32 %v825, %v1040
        %v1091 = vadd.f32 %v830, %v1045
        %v1092 = vadd.f32 %v835, %v1050
        %v1093 = vadd.f32 %v840, %v1055
        %v1094 = vadd.f32 %v845, %v1060
        %v1095 = vadd.f32 %v850, %v1065
        %v1096 = vadd.f32 %v855, %v1070
        %v1097 = vadd.f32 %v860, %v1075
        %v1098 = vadd.f32 %v865, %v1080
        %v1099 = vld [vmem:[%s868 + $0x1] sm:$0xff]
        %v1100 = vld [vmem:[%s868 + $0x9] sm:$0xff]
        %v1101 = vld [vmem:[%s868 + $0x19] sm:$0xff]
        %v1102 = vld [vmem:[%s868 + $0x21] sm:$0xff]
        %v1103 = vld [vmem:[%s868 + $0x31] sm:$0xff]
        %v1104 = vld [vmem:[%s868 + $0x39] sm:$0xff]
        %v1105 = vld [vmem:[%s868 + $0x49] sm:$0xff]
        %v1106 = vld [vmem:[%s868 + $0x51] sm:$0xff]
        %v1107 = vld [vmem:[%s868 + $0x61] sm:$0xff]
        %v1108 = vld [vmem:[%s868 + $0x69] sm:$0xff]
        %v1109 = vld [vmem:[%s868 + $0x79] sm:$0xff]
        %v1110 = vld [vmem:[%s868 + $0x81] sm:$0xff]
        %v1111 = vld [vmem:[%s868 + $0x91] sm:$0xff]
        %v1112 = vld [vmem:[%s868 + $0x99] sm:$0xff]
        %v1113 = vld [vmem:[%s868 + $0xa9] sm:$0xff]
        %v1114 = vld [vmem:[%s868 + $0xb1] sm:$0xff]
        %s1115 = scalar_lea.vmem %s3, 12
        %v1116 = vld [vmem:[%s1115] sm:$0xf]
        %v1118 = vsel %vm399, %v1099, 0
        %v1121 = vsel %vm399, %v1100, 0
        %v1124 = vsel %vm399, %v1101, 0
        %v1127 = vsel %vm399, %v1102, 0
        %v1130 = vsel %vm399, %v1103, 0
        %v1133 = vsel %vm399, %v1104, 0
        %v1136 = vsel %vm399, %v1105, 0
        %v1139 = vsel %vm399, %v1106, 0
        %v1142 = vsel %vm399, %v1107, 0
        %v1145 = vsel %vm399, %v1108, 0
        %v1148 = vsel %vm399, %v1109, 0
        %v1151 = vsel %vm399, %v1110, 0
        %v1154 = vsel %vm399, %v1111, 0
        %v1157 = vsel %vm399, %v1112, 0
        %v1160 = vsel %vm399, %v1113, 0
        %v1163 = vsel %vm399, %v1114, 0
        %v1166 = vsel %vm523, %v1116, 0
        %1168 = vmatprep.subr.mxu0 0.0
        %1169 = vmatpush1.msra.mxu0 0.0
        %1170 = vmatprep.subr.mxu0 0.0
        %1171 = vmatpush1.msra.mxu0 0.0
        %1172 = vmatprep.subr.mxu0 0.0
        %1173 = vmatpush1.msra.mxu0 0.0
        %1174 = vmatprep.subr.mxu0 0.0
        %1175 = vmatpush1.msra.mxu0 0.0
        %1176 = vmatprep.subr.mxu0 0.0
        %1177 = vmatpush1.msra.mxu0 0.0
        %1178 = vmatprep.subr.mxu0 0.0
        %1179 = vmatpush1.msra.mxu0 0.0
        %1180 = vmatprep.subr.mxu0 0.0
        %1181 = vmatpush1.msra.mxu0 0.0
        %1182 = vmatprep.subr.mxu0 0.0
        %1183 = vmatpush1.msra.mxu0 0.0
        %1184 = vmatprep.subr.mxu0 0.0
        %1185 = vmatpush1.msra.mxu0 0.0
        %1186 = vmatprep.subr.mxu0 0.0
        %1187 = vmatpush1.msra.mxu0 0.0
        %1188 = vmatprep.subr.mxu0 0.0
        %1189 = vmatpush1.msra.mxu0 0.0
        %1190 = vmatprep.subr.mxu0 0.0
        %1191 = vmatpush1.msra.mxu0 0.0
        %1192 = vmatprep.subr.mxu0 0.0
        %1193 = vmatpush1.msra.mxu0 0.0
        %1194 = vmatprep.subr.mxu0 0.0
        %1195 = vmatpush1.msra.mxu0 0.0
        %1196 = vmatprep.subr.mxu0 0.0
        %1197 = vmatpush1.msra.mxu0 0.0
        %1198 = vmatprep.subr.mxu0 0.0
        %1199 = vmatpush1.msra.mxu0 %v1166
        %1200 = vmatprep.subr.mxu0 0.0
        %1201 = vmatpush2.msra.mxu0 0.0
        %1202 = vmatprep.subr.mxu0 0.0
        %1203 = vmatpush2.msra.mxu0 0.0
        %1204 = vmatprep.subr.mxu0 0.0
        %1205 = vmatpush2.msra.mxu0 0.0
        %1206 = vmatprep.subr.mxu0 0.0
        %1207 = vmatpush2.msra.mxu0 0.0
        %1208 = vmatprep.subr.mxu0 0.0
        %1209 = vmatpush2.msra.mxu0 0.0
        %1210 = vmatprep.subr.mxu0 0.0
        %1211 = vmatpush2.msra.mxu0 0.0
        %1212 = vmatprep.subr.mxu0 0.0
        %1213 = vmatpush2.msra.mxu0 0.0
        %1214 = vmatprep.subr.mxu0 0.0
        %1215 = vmatpush2.msra.mxu0 0.0
        %1216 = vmatprep.subr.mxu0 0.0
        %1217 = vmatpush2.msra.mxu0 0.0
        %1218 = vmatprep.subr.mxu0 0.0
        %1219 = vmatpush2.msra.mxu0 0.0
        %1220 = vmatprep.subr.mxu0 0.0
        %1221 = vmatpush2.msra.mxu0 0.0
        %1222 = vmatprep.subr.mxu0 0.0
        %1223 = vmatpush2.msra.mxu0 0.0
        %1224 = vmatprep.subr.mxu0 0.0
        %1225 = vmatpush2.msra.mxu0 0.0
        %1226 = vmatprep.subr.mxu0 0.0
        %1227 = vmatpush2.msra.mxu0 0.0
        %1228 = vmatprep.subr.mxu0 0.0
        %1229 = vmatpush2.msra.mxu0 0.0
        %1230 = vmatprep.subr.mxu0 0.0
        %1231 = vmatpush2.msra.mxu0 0.0
        %1232 = vmatprep.mubr.f32.mxu0 0.0
        %1233 = vmatmul.mubr.f32.gmra.mxu0 %v1118
        %v1234 = vpop.f32.mrf.mxu0
        %v1235 = vadd.f32 0.0, %v1234
        %v1236 = vpop.f32.mrf.mxu0
        %1237 = vmatprep.mubr.f32.mxu0 0.0
        %1238 = vmatmul.mubr.f32.gmra.mxu0 %v1121
        %v1239 = vpop.f32.mrf.mxu0
        %v1240 = vadd.f32 0.0, %v1239
        %v1241 = vpop.f32.mrf.mxu0
        %1242 = vmatprep.mubr.f32.mxu0 0.0
        %1243 = vmatmul.mubr.f32.gmra.mxu0 %v1124
        %v1244 = vpop.f32.mrf.mxu0
        %v1245 = vadd.f32 0.0, %v1244
        %v1246 = vpop.f32.mrf.mxu0
        %1247 = vmatprep.mubr.f32.mxu0 0.0
        %1248 = vmatmul.mubr.f32.gmra.mxu0 %v1127
        %v1249 = vpop.f32.mrf.mxu0
        %v1250 = vadd.f32 0.0, %v1249
        %v1251 = vpop.f32.mrf.mxu0
        %1252 = vmatprep.mubr.f32.mxu0 0.0
        %1253 = vmatmul.mubr.f32.gmra.mxu0 %v1130
        %v1254 = vpop.f32.mrf.mxu0
        %v1255 = vadd.f32 0.0, %v1254
        %v1256 = vpop.f32.mrf.mxu0
        %1257 = vmatprep.mubr.f32.mxu0 0.0
        %1258 = vmatmul.mubr.f32.gmra.mxu0 %v1133
        %v1259 = vpop.f32.mrf.mxu0
        %v1260 = vadd.f32 0.0, %v1259
        %v1261 = vpop.f32.mrf.mxu0
        %1262 = vmatprep.mubr.f32.mxu0 0.0
        %1263 = vmatmul.mubr.f32.gmra.mxu0 %v1136
        %v1264 = vpop.f32.mrf.mxu0
        %v1265 = vadd.f32 0.0, %v1264
        %v1266 = vpop.f32.mrf.mxu0
        %1267 = vmatprep.mubr.f32.mxu0 0.0
        %1268 = vmatmul.mubr.f32.gmra.mxu0 %v1139
        %v1269 = vpop.f32.mrf.mxu0
        %v1270 = vadd.f32 0.0, %v1269
        %v1271 = vpop.f32.mrf.mxu0
        %1272 = vmatprep.mubr.f32.mxu0 0.0
        %1273 = vmatmul.mubr.f32.gmra.mxu0 %v1142
        %v1274 = vpop.f32.mrf.mxu0
        %v1275 = vadd.f32 0.0, %v1274
        %v1276 = vpop.f32.mrf.mxu0
        %1277 = vmatprep.mubr.f32.mxu0 0.0
        %1278 = vmatmul.mubr.f32.gmra.mxu0 %v1145
        %v1279 = vpop.f32.mrf.mxu0
        %v1280 = vadd.f32 0.0, %v1279
        %v1281 = vpop.f32.mrf.mxu0
        %1282 = vmatprep.mubr.f32.mxu0 0.0
        %1283 = vmatmul.mubr.f32.gmra.mxu0 %v1148
        %v1284 = vpop.f32.mrf.mxu0
        %v1285 = vadd.f32 0.0, %v1284
        %v1286 = vpop.f32.mrf.mxu0
        %1287 = vmatprep.mubr.f32.mxu0 0.0
        %1288 = vmatmul.mubr.f32.gmra.mxu0 %v1151
        %v1289 = vpop.f32.mrf.mxu0
        %v1290 = vadd.f32 0.0, %v1289
        %v1291 = vpop.f32.mrf.mxu0
        %1292 = vmatprep.mubr.f32.mxu0 0.0
        %1293 = vmatmul.mubr.f32.gmra.mxu0 %v1154
        %v1294 = vpop.f32.mrf.mxu0
        %v1295 = vadd.f32 0.0, %v1294
        %v1296 = vpop.f32.mrf.mxu0
        %1297 = vmatprep.mubr.f32.mxu0 0.0
        %1298 = vmatmul.mubr.f32.gmra.mxu0 %v1157
        %v1299 = vpop.f32.mrf.mxu0
        %v1300 = vadd.f32 0.0, %v1299
        %v1301 = vpop.f32.mrf.mxu0
        %1302 = vmatprep.mubr.f32.mxu0 0.0
        %1303 = vmatmul.mubr.f32.gmra.mxu0 %v1160
        %v1304 = vpop.f32.mrf.mxu0
        %v1305 = vadd.f32 0.0, %v1304
        %v1306 = vpop.f32.mrf.mxu0
        %1307 = vmatprep.mubr.f32.mxu0 0.0
        %1308 = vmatmul.mubr.f32.gmra.mxu0 %v1163
        %v1309 = vpop.f32.mrf.mxu0
        %v1310 = vadd.f32 0.0, %v1309
        %v1311 = vpop.f32.mrf.mxu0
        %1312 = vdwg.mxu0
        %v1313 = vadd.f32 %v1083, %v1235
        %v1314 = vadd.f32 %v1084, %v1240
        %v1315 = vadd.f32 %v1085, %v1245
        %v1316 = vadd.f32 %v1086, %v1250
        %v1317 = vadd.f32 %v1087, %v1255
        %v1318 = vadd.f32 %v1088, %v1260
        %v1319 = vadd.f32 %v1089, %v1265
        %v1320 = vadd.f32 %v1090, %v1270
        %v1321 = vadd.f32 %v1091, %v1275
        %v1322 = vadd.f32 %v1092, %v1280
        %v1323 = vadd.f32 %v1093, %v1285
        %v1324 = vadd.f32 %v1094, %v1290
        %v1325 = vadd.f32 %v1095, %v1295
        %v1326 = vadd.f32 %v1096, %v1300
        %v1327 = vadd.f32 %v1097, %v1305
        %v1328 = vadd.f32 %v1098, %v1310
        %v1330 = vlaneseq
        %v1331 = vshrl.u32 %v1330, 7
        %v1332 = vsub.s32 0, %v1331
        %v1333 = vrot.slane %v439, %v1332
        %v1335 = vadd.f32 %v1313, %v1333
        %v1336 = vadd.f32 %v1314, %v1333
        %v1337 = vadd.f32 %v1315, %v1333
        %v1338 = vadd.f32 %v1316, %v1333
        %v1339 = vadd.f32 %v1317, %v1333
        %v1340 = vadd.f32 %v1318, %v1333
        %v1341 = vadd.f32 %v1319, %v1333
        %v1342 = vadd.f32 %v1320, %v1333
        %v1343 = vadd.f32 %v1321, %v1333
        %v1344 = vadd.f32 %v1322, %v1333
        %v1345 = vadd.f32 %v1323, %v1333
        %v1346 = vadd.f32 %v1324, %v1333
        %v1347 = vadd.f32 %v1325, %v1333
        %v1348 = vadd.f32 %v1326, %v1333
        %v1349 = vadd.f32 %v1327, %v1333
        %v1350 = vadd.f32 %v1328, %v1333
        %1351 = vst.msk [vmem:[%s325] sm:$0xff] %vm399, %v1335
        %1352 = vst.msk [vmem:[%s325 + $0x8] sm:$0xff] %vm399, %v1336
        %1353 = vst.msk [vmem:[%s325 + $0x10] sm:$0xff] %vm399, %v1337
        %1354 = vst.msk [vmem:[%s325 + $0x18] sm:$0xff] %vm399, %v1338
        %1355 = vst.msk [vmem:[%s325 + $0x20] sm:$0xff] %vm399, %v1339
        %1356 = vst.msk [vmem:[%s325 + $0x28] sm:$0xff] %vm399, %v1340
        %1357 = vst.msk [vmem:[%s325 + $0x30] sm:$0xff] %vm399, %v1341
        %1358 = vst.msk [vmem:[%s325 + $0x38] sm:$0xff] %vm399, %v1342
        %1359 = vst.msk [vmem:[%s325 + $0x40] sm:$0xff] %vm399, %v1343
        %1360 = vst.msk [vmem:[%s325 + $0x48] sm:$0xff] %vm399, %v1344
        %1361 = vst.msk [vmem:[%s325 + $0x50] sm:$0xff] %vm399, %v1345
        %1362 = vst.msk [vmem:[%s325 + $0x58] sm:$0xff] %vm399, %v1346
        %1363 = vst.msk [vmem:[%s325 + $0x60] sm:$0xff] %vm399, %v1347
        %1364 = vst.msk [vmem:[%s325 + $0x68] sm:$0xff] %vm399, %v1348
        %1365 = vst.msk [vmem:[%s325 + $0x70] sm:$0xff] %vm399, %v1349
        %1366 = vst.msk [vmem:[%s325 + $0x78] sm:$0xff] %vm399, %v1350
        %v1367 = vld [vmem:[#allocation2 + $0x1] sm:$0xff]
        %v1368 = vld [vmem:[#allocation2 + $0x9] sm:$0xff]
        %v1369 = vld [vmem:[#allocation2 + $0x19] sm:$0xff]
        %v1370 = vld [vmem:[#allocation2 + $0x21] sm:$0xff]
        %v1371 = vld [vmem:[#allocation2 + $0x31] sm:$0xff]
        %v1372 = vld [vmem:[#allocation2 + $0x39] sm:$0xff]
        %v1373 = vld [vmem:[#allocation2 + $0x49] sm:$0xff]
        %v1374 = vld [vmem:[#allocation2 + $0x51] sm:$0xff]
        %v1375 = vld [vmem:[#allocation2 + $0x61] sm:$0xff]
        %v1376 = vld [vmem:[#allocation2 + $0x69] sm:$0xff]
        %v1377 = vld [vmem:[#allocation2 + $0x79] sm:$0xff]
        %v1378 = vld [vmem:[#allocation2 + $0x81] sm:$0xff]
        %v1379 = vld [vmem:[#allocation2 + $0x91] sm:$0xff]
        %v1380 = vld [vmem:[#allocation2 + $0x99] sm:$0xff]
        %v1381 = vld [vmem:[#allocation2 + $0xa9] sm:$0xff]
        %v1382 = vld [vmem:[#allocation2 + $0xb1] sm:$0xff]
        %s1383 = scalar_lea.vmem %s3, 16
        %v1384 = vld [vmem:[%s1383] sm:$0xf]
        %v1385 = vld [vmem:[#allocation2 + $0x2] sm:$0xff]
        %v1386 = vld [vmem:[#allocation2 + $0xa] sm:$0xff]
        %v1387 = vld [vmem:[#allocation2 + $0x1a] sm:$0xff]
        %v1388 = vld [vmem:[#allocation2 + $0x22] sm:$0xff]
        %v1389 = vld [vmem:[#allocation2 + $0x32] sm:$0xff]
        %v1390 = vld [vmem:[#allocation2 + $0x3a] sm:$0xff]
        %v1391 = vld [vmem:[#allocation2 + $0x4a] sm:$0xff]
        %v1392 = vld [vmem:[#allocation2 + $0x52] sm:$0xff]
        %v1393 = vld [vmem:[#allocation2 + $0x62] sm:$0xff]
        %v1394 = vld [vmem:[#allocation2 + $0x6a] sm:$0xff]
        %v1395 = vld [vmem:[#allocation2 + $0x7a] sm:$0xff]
        %v1396 = vld [vmem:[#allocation2 + $0x82] sm:$0xff]
        %v1397 = vld [vmem:[#allocation2 + $0x92] sm:$0xff]
        %v1398 = vld [vmem:[#allocation2 + $0x9a] sm:$0xff]
        %v1399 = vld [vmem:[#allocation2 + $0xaa] sm:$0xff]
        %v1400 = vld [vmem:[#allocation2 + $0xb2] sm:$0xff]
        %s1401 = scalar_lea.vmem %s3, 20
        %v1402 = vld [vmem:[%s1401] sm:$0xf]
        %v1404 = vsel %vm399, %v1385, 0
        %v1407 = vsel %vm399, %v1386, 0
        %v1410 = vsel %vm399, %v1387, 0
        %v1413 = vsel %vm399, %v1388, 0
        %v1416 = vsel %vm399, %v1389, 0
        %v1419 = vsel %vm399, %v1390, 0
        %v1422 = vsel %vm399, %v1391, 0
        %v1425 = vsel %vm399, %v1392, 0
        %v1428 = vsel %vm399, %v1393, 0
        %v1431 = vsel %vm399, %v1394, 0
        %v1434 = vsel %vm399, %v1395, 0
        %v1437 = vsel %vm399, %v1396, 0
        %v1440 = vsel %vm399, %v1397, 0
        %v1443 = vsel %vm399, %v1398, 0
        %v1446 = vsel %vm399, %v1399, 0
        %v1449 = vsel %vm399, %v1400, 0
        %v1452 = vsel %vm523, %v1402, 0
        %1454 = vmatprep.subr.mxu0 0.0
        %1455 = vmatpush1.msra.mxu0 0.0
        %1456 = vmatprep.subr.mxu0 0.0
        %1457 = vmatpush1.msra.mxu0 0.0
        %1458 = vmatprep.subr.mxu0 0.0
        %1459 = vmatpush1.msra.mxu0 0.0
        %1460 = vmatprep.subr.mxu0 0.0
        %1461 = vmatpush1.msra.mxu0 0.0
        %1462 = vmatprep.subr.mxu0 0.0
        %1463 = vmatpush1.msra.mxu0 0.0
        %1464 = vmatprep.subr.mxu0 0.0
        %1465 = vmatpush1.msra.mxu0 0.0
        %1466 = vmatprep.subr.mxu0 0.0
        %1467 = vmatpush1.msra.mxu0 0.0
        %1468 = vmatprep.subr.mxu0 0.0
        %1469 = vmatpush1.msra.mxu0 0.0
        %1470 = vmatprep.subr.mxu0 0.0
        %1471 = vmatpush1.msra.mxu0 0.0
        %1472 = vmatprep.subr.mxu0 0.0
        %1473 = vmatpush1.msra.mxu0 0.0
        %1474 = vmatprep.subr.mxu0 0.0
        %1475 = vmatpush1.msra.mxu0 0.0
        %1476 = vmatprep.subr.mxu0 0.0
        %1477 = vmatpush1.msra.mxu0 0.0
        %1478 = vmatprep.subr.mxu0 0.0
        %1479 = vmatpush1.msra.mxu0 0.0
        %1480 = vmatprep.subr.mxu0 0.0
        %1481 = vmatpush1.msra.mxu0 0.0
        %1482 = vmatprep.subr.mxu0 0.0
        %1483 = vmatpush1.msra.mxu0 0.0
        %1484 = vmatprep.subr.mxu0 0.0
        %1485 = vmatpush1.msra.mxu0 %v1452
        %1486 = vmatprep.subr.mxu0 0.0
        %1487 = vmatpush2.msra.mxu0 0.0
        %1488 = vmatprep.subr.mxu0 0.0
        %1489 = vmatpush2.msra.mxu0 0.0
        %1490 = vmatprep.subr.mxu0 0.0
        %1491 = vmatpush2.msra.mxu0 0.0
        %1492 = vmatprep.subr.mxu0 0.0
        %1493 = vmatpush2.msra.mxu0 0.0
        %1494 = vmatprep.subr.mxu0 0.0
        %1495 = vmatpush2.msra.mxu0 0.0
        %1496 = vmatprep.subr.mxu0 0.0
        %1497 = vmatpush2.msra.mxu0 0.0
        %1498 = vmatprep.subr.mxu0 0.0
        %1499 = vmatpush2.msra.mxu0 0.0
        %1500 = vmatprep.subr.mxu0 0.0
        %1501 = vmatpush2.msra.mxu0 0.0
        %1502 = vmatprep.subr.mxu0 0.0
        %1503 = vmatpush2.msra.mxu0 0.0
        %1504 = vmatprep.subr.mxu0 0.0
        %1505 = vmatpush2.msra.mxu0 0.0
        %1506 = vmatprep.subr.mxu0 0.0
        %1507 = vmatpush2.msra.mxu0 0.0
        %1508 = vmatprep.subr.mxu0 0.0
        %1509 = vmatpush2.msra.mxu0 0.0
        %1510 = vmatprep.subr.mxu0 0.0
        %1511 = vmatpush2.msra.mxu0 0.0
        %1512 = vmatprep.subr.mxu0 0.0
        %1513 = vmatpush2.msra.mxu0 0.0
        %1514 = vmatprep.subr.mxu0 0.0
        %1515 = vmatpush2.msra.mxu0 0.0
        %1516 = vmatprep.subr.mxu0 0.0
        %1517 = vmatpush2.msra.mxu0 0.0
        %1518 = vmatprep.mubr.f32.mxu0 0.0
        %1519 = vmatmul.mubr.f32.gmra.mxu0 %v1404
        %v1520 = vpop.f32.mrf.mxu0
        %v1521 = vadd.f32 0.0, %v1520
        %v1522 = vpop.f32.mrf.mxu0
        %1523 = vmatprep.mubr.f32.mxu0 0.0
        %1524 = vmatmul.mubr.f32.gmra.mxu0 %v1407
        %v1525 = vpop.f32.mrf.mxu0
        %v1526 = vadd.f32 0.0, %v1525
        %v1527 = vpop.f32.mrf.mxu0
        %1528 = vmatprep.mubr.f32.mxu0 0.0
        %1529 = vmatmul.mubr.f32.gmra.mxu0 %v1410
        %v1530 = vpop.f32.mrf.mxu0
        %v1531 = vadd.f32 0.0, %v1530
        %v1532 = vpop.f32.mrf.mxu0
        %1533 = vmatprep.mubr.f32.mxu0 0.0
        %1534 = vmatmul.mubr.f32.gmra.mxu0 %v1413
        %v1535 = vpop.f32.mrf.mxu0
        %v1536 = vadd.f32 0.0, %v1535
        %v1537 = vpop.f32.mrf.mxu0
        %1538 = vmatprep.mubr.f32.mxu0 0.0
        %1539 = vmatmul.mubr.f32.gmra.mxu0 %v1416
        %v1540 = vpop.f32.mrf.mxu0
        %v1541 = vadd.f32 0.0, %v1540
        %v1542 = vpop.f32.mrf.mxu0
        %1543 = vmatprep.mubr.f32.mxu0 0.0
        %1544 = vmatmul.mubr.f32.gmra.mxu0 %v1419
        %v1545 = vpop.f32.mrf.mxu0
        %v1546 = vadd.f32 0.0, %v1545
        %v1547 = vpop.f32.mrf.mxu0
        %1548 = vmatprep.mubr.f32.mxu0 0.0
        %1549 = vmatmul.mubr.f32.gmra.mxu0 %v1422
        %v1550 = vpop.f32.mrf.mxu0
        %v1551 = vadd.f32 0.0, %v1550
        %v1552 = vpop.f32.mrf.mxu0
        %1553 = vmatprep.mubr.f32.mxu0 0.0
        %1554 = vmatmul.mubr.f32.gmra.mxu0 %v1425
        %v1555 = vpop.f32.mrf.mxu0
        %v1556 = vadd.f32 0.0, %v1555
        %v1557 = vpop.f32.mrf.mxu0
        %1558 = vmatprep.mubr.f32.mxu0 0.0
        %1559 = vmatmul.mubr.f32.gmra.mxu0 %v1428
        %v1560 = vpop.f32.mrf.mxu0
        %v1561 = vadd.f32 0.0, %v1560
        %v1562 = vpop.f32.mrf.mxu0
        %1563 = vmatprep.mubr.f32.mxu0 0.0
        %1564 = vmatmul.mubr.f32.gmra.mxu0 %v1431
        %v1565 = vpop.f32.mrf.mxu0
        %v1566 = vadd.f32 0.0, %v1565
        %v1567 = vpop.f32.mrf.mxu0
        %1568 = vmatprep.mubr.f32.mxu0 0.0
        %1569 = vmatmul.mubr.f32.gmra.mxu0 %v1434
        %v1570 = vpop.f32.mrf.mxu0
        %v1571 = vadd.f32 0.0, %v1570
        %v1572 = vpop.f32.mrf.mxu0
        %1573 = vmatprep.mubr.f32.mxu0 0.0
        %1574 = vmatmul.mubr.f32.gmra.mxu0 %v1437
        %v1575 = vpop.f32.mrf.mxu0
        %v1576 = vadd.f32 0.0, %v1575
        %v1577 = vpop.f32.mrf.mxu0
        %1578 = vmatprep.mubr.f32.mxu0 0.0
        %1579 = vmatmul.mubr.f32.gmra.mxu0 %v1440
        %v1580 = vpop.f32.mrf.mxu0
        %v1581 = vadd.f32 0.0, %v1580
        %v1582 = vpop.f32.mrf.mxu0
        %1583 = vmatprep.mubr.f32.mxu0 0.0
        %1584 = vmatmul.mubr.f32.gmra.mxu0 %v1443
        %v1585 = vpop.f32.mrf.mxu0
        %v1586 = vadd.f32 0.0, %v1585
        %v1587 = vpop.f32.mrf.mxu0
        %1588 = vmatprep.mubr.f32.mxu0 0.0
        %1589 = vmatmul.mubr.f32.gmra.mxu0 %v1446
        %v1590 = vpop.f32.mrf.mxu0
        %v1591 = vadd.f32 0.0, %v1590
        %v1592 = vpop.f32.mrf.mxu0
        %1593 = vmatprep.mubr.f32.mxu0 0.0
        %1594 = vmatmul.mubr.f32.gmra.mxu0 %v1449
        %v1595 = vpop.f32.mrf.mxu0
        %v1596 = vadd.f32 0.0, %v1595
        %v1597 = vpop.f32.mrf.mxu0
        %1598 = vdwg.mxu0
        %v1600 = vsel %vm399, %v1367, 0
        %v1603 = vsel %vm399, %v1368, 0
        %v1606 = vsel %vm399, %v1369, 0
        %v1609 = vsel %vm399, %v1370, 0
        %v1612 = vsel %vm399, %v1371, 0
        %v1615 = vsel %vm399, %v1372, 0
        %v1618 = vsel %vm399, %v1373, 0
        %v1621 = vsel %vm399, %v1374, 0
        %v1624 = vsel %vm399, %v1375, 0
        %v1627 = vsel %vm399, %v1376, 0
        %v1630 = vsel %vm399, %v1377, 0
        %v1633 = vsel %vm399, %v1378, 0
        %v1636 = vsel %vm399, %v1379, 0
        %v1639 = vsel %vm399, %v1380, 0
        %v1642 = vsel %vm399, %v1381, 0
        %v1645 = vsel %vm399, %v1382, 0
        %v1648 = vsel %vm523, %v1384, 0
        %1650 = vmatprep.subr.mxu0 0.0
        %1651 = vmatpush1.msra.mxu0 0.0
        %1652 = vmatprep.subr.mxu0 0.0
        %1653 = vmatpush1.msra.mxu0 0.0
        %1654 = vmatprep.subr.mxu0 0.0
        %1655 = vmatpush1.msra.mxu0 0.0
        %1656 = vmatprep.subr.mxu0 0.0
        %1657 = vmatpush1.msra.mxu0 0.0
        %1658 = vmatprep.subr.mxu0 0.0
        %1659 = vmatpush1.msra.mxu0 0.0
        %1660 = vmatprep.subr.mxu0 0.0
        %1661 = vmatpush1.msra.mxu0 0.0
        %1662 = vmatprep.subr.mxu0 0.0
        %1663 = vmatpush1.msra.mxu0 0.0
        %1664 = vmatprep.subr.mxu0 0.0
        %1665 = vmatpush1.msra.mxu0 0.0
        %1666 = vmatprep.subr.mxu0 0.0
        %1667 = vmatpush1.msra.mxu0 0.0
        %1668 = vmatprep.subr.mxu0 0.0
        %1669 = vmatpush1.msra.mxu0 0.0
        %1670 = vmatprep.subr.mxu0 0.0
        %1671 = vmatpush1.msra.mxu0 0.0
        %1672 = vmatprep.subr.mxu0 0.0
        %1673 = vmatpush1.msra.mxu0 0.0
        %1674 = vmatprep.subr.mxu0 0.0
        %1675 = vmatpush1.msra.mxu0 0.0
        %1676 = vmatprep.subr.mxu0 0.0
        %1677 = vmatpush1.msra.mxu0 0.0
        %1678 = vmatprep.subr.mxu0 0.0
        %1679 = vmatpush1.msra.mxu0 0.0
        %1680 = vmatprep.subr.mxu0 0.0
        %1681 = vmatpush1.msra.mxu0 %v1648
        %1682 = vmatprep.subr.mxu0 0.0
        %1683 = vmatpush2.msra.mxu0 0.0
        %1684 = vmatprep.subr.mxu0 0.0
        %1685 = vmatpush2.msra.mxu0 0.0
        %1686 = vmatprep.subr.mxu0 0.0
        %1687 = vmatpush2.msra.mxu0 0.0
        %1688 = vmatprep.subr.mxu0 0.0
        %1689 = vmatpush2.msra.mxu0 0.0
        %1690 = vmatprep.subr.mxu0 0.0
        %1691 = vmatpush2.msra.mxu0 0.0
        %1692 = vmatprep.subr.mxu0 0.0
        %1693 = vmatpush2.msra.mxu0 0.0
        %1694 = vmatprep.subr.mxu0 0.0
        %1695 = vmatpush2.msra.mxu0 0.0
        %1696 = vmatprep.subr.mxu0 0.0
        %1697 = vmatpush2.msra.mxu0 0.0
        %1698 = vmatprep.subr.mxu0 0.0
        %1699 = vmatpush2.msra.mxu0 0.0
        %1700 = vmatprep.subr.mxu0 0.0
        %1701 = vmatpush2.msra.mxu0 0.0
        %1702 = vmatprep.subr.mxu0 0.0
        %1703 = vmatpush2.msra.mxu0 0.0
        %1704 = vmatprep.subr.mxu0 0.0
        %1705 = vmatpush2.msra.mxu0 0.0
        %1706 = vmatprep.subr.mxu0 0.0
        %1707 = vmatpush2.msra.mxu0 0.0
        %1708 = vmatprep.subr.mxu0 0.0
        %1709 = vmatpush2.msra.mxu0 0.0
        %1710 = vmatprep.subr.mxu0 0.0
        %1711 = vmatpush2.msra.mxu0 0.0
        %1712 = vmatprep.subr.mxu0 0.0
        %1713 = vmatpush2.msra.mxu0 0.0
        %1714 = vmatprep.mubr.f32.mxu0 0.0
        %1715 = vmatmul.mubr.f32.gmra.mxu0 %v1600
        %v1716 = vpop.f32.mrf.mxu0
        %v1717 = vadd.f32 %v1521, %v1716
        %v1718 = vpop.f32.mrf.mxu0
        %1719 = vmatprep.mubr.f32.mxu0 0.0
        %1720 = vmatmul.mubr.f32.gmra.mxu0 %v1603
        %v1721 = vpop.f32.mrf.mxu0
        %v1722 = vadd.f32 %v1526, %v1721
        %v1723 = vpop.f32.mrf.mxu0
        %1724 = vmatprep.mubr.f32.mxu0 0.0
        %1725 = vmatmul.mubr.f32.gmra.mxu0 %v1606
        %v1726 = vpop.f32.mrf.mxu0
        %v1727 = vadd.f32 %v1531, %v1726
        %v1728 = vpop.f32.mrf.mxu0
        %1729 = vmatprep.mubr.f32.mxu0 0.0
        %1730 = vmatmul.mubr.f32.gmra.mxu0 %v1609
        %v1731 = vpop.f32.mrf.mxu0
        %v1732 = vadd.f32 %v1536, %v1731
        %v1733 = vpop.f32.mrf.mxu0
        %1734 = vmatprep.mubr.f32.mxu0 0.0
        %1735 = vmatmul.mubr.f32.gmra.mxu0 %v1612
        %v1736 = vpop.f32.mrf.mxu0
        %v1737 = vadd.f32 %v1541, %v1736
        %v1738 = vpop.f32.mrf.mxu0
        %1739 = vmatprep.mubr.f32.mxu0 0.0
        %1740 = vmatmul.mubr.f32.gmra.mxu0 %v1615
        %v1741 = vpop.f32.mrf.mxu0
        %v1742 = vadd.f32 %v1546, %v1741
        %v1743 = vpop.f32.mrf.mxu0
        %1744 = vmatprep.mubr.f32.mxu0 0.0
        %1745 = vmatmul.mubr.f32.gmra.mxu0 %v1618
        %v1746 = vpop.f32.mrf.mxu0
        %v1747 = vadd.f32 %v1551, %v1746
        %v1748 = vpop.f32.mrf.mxu0
        %1749 = vmatprep.mubr.f32.mxu0 0.0
        %1750 = vmatmul.mubr.f32.gmra.mxu0 %v1621
        %v1751 = vpop.f32.mrf.mxu0
        %v1752 = vadd.f32 %v1556, %v1751
        %v1753 = vpop.f32.mrf.mxu0
        %1754 = vmatprep.mubr.f32.mxu0 0.0
        %1755 = vmatmul.mubr.f32.gmra.mxu0 %v1624
        %v1756 = vpop.f32.mrf.mxu0
        %v1757 = vadd.f32 %v1561, %v1756
        %v1758 = vpop.f32.mrf.mxu0
        %1759 = vmatprep.mubr.f32.mxu0 0.0
        %1760 = vmatmul.mubr.f32.gmra.mxu0 %v1627
        %v1761 = vpop.f32.mrf.mxu0
        %v1762 = vadd.f32 %v1566, %v1761
        %v1763 = vpop.f32.mrf.mxu0
        %1764 = vmatprep.mubr.f32.mxu0 0.0
        %1765 = vmatmul.mubr.f32.gmra.mxu0 %v1630
        %v1766 = vpop.f32.mrf.mxu0
        %v1767 = vadd.f32 %v1571, %v1766
        %v1768 = vpop.f32.mrf.mxu0
        %1769 = vmatprep.mubr.f32.mxu0 0.0
        %1770 = vmatmul.mubr.f32.gmra.mxu0 %v1633
        %v1771 = vpop.f32.mrf.mxu0
        %v1772 = vadd.f32 %v1576, %v1771
        %v1773 = vpop.f32.mrf.mxu0
        %1774 = vmatprep.mubr.f32.mxu0 0.0
        %1775 = vmatmul.mubr.f32.gmra.mxu0 %v1636
        %v1776 = vpop.f32.mrf.mxu0
        %v1777 = vadd.f32 %v1581, %v1776
        %v1778 = vpop.f32.mrf.mxu0
        %1779 = vmatprep.mubr.f32.mxu0 0.0
        %1780 = vmatmul.mubr.f32.gmra.mxu0 %v1639
        %v1781 = vpop.f32.mrf.mxu0
        %v1782 = vadd.f32 %v1586, %v1781
        %v1783 = vpop.f32.mrf.mxu0
        %1784 = vmatprep.mubr.f32.mxu0 0.0
        %1785 = vmatmul.mubr.f32.gmra.mxu0 %v1642
        %v1786 = vpop.f32.mrf.mxu0
        %v1787 = vadd.f32 %v1591, %v1786
        %v1788 = vpop.f32.mrf.mxu0
        %1789 = vmatprep.mubr.f32.mxu0 0.0
        %1790 = vmatmul.mubr.f32.gmra.mxu0 %v1645
        %v1791 = vpop.f32.mrf.mxu0
        %v1792 = vadd.f32 %v1596, %v1791
        %v1793 = vpop.f32.mrf.mxu0
        %1794 = vdwg.mxu0
        %v1795 = vld [vmem:[%s868 + $0x1] sm:$0xff]
        %v1796 = vld [vmem:[%s868 + $0x9] sm:$0xff]
        %v1797 = vld [vmem:[%s868 + $0x19] sm:$0xff]
        %v1798 = vld [vmem:[%s868 + $0x21] sm:$0xff]
        %v1799 = vld [vmem:[%s868 + $0x31] sm:$0xff]
        %v1800 = vld [vmem:[%s868 + $0x39] sm:$0xff]
        %v1801 = vld [vmem:[%s868 + $0x49] sm:$0xff]
        %v1802 = vld [vmem:[%s868 + $0x51] sm:$0xff]
        %v1803 = vld [vmem:[%s868 + $0x61] sm:$0xff]
        %v1804 = vld [vmem:[%s868 + $0x69] sm:$0xff]
        %v1805 = vld [vmem:[%s868 + $0x79] sm:$0xff]
        %v1806 = vld [vmem:[%s868 + $0x81] sm:$0xff]
        %v1807 = vld [vmem:[%s868 + $0x91] sm:$0xff]
        %v1808 = vld [vmem:[%s868 + $0x99] sm:$0xff]
        %v1809 = vld [vmem:[%s868 + $0xa9] sm:$0xff]
        %v1810 = vld [vmem:[%s868 + $0xb1] sm:$0xff]
        %s1811 = scalar_lea.vmem %s3, 24
        %v1812 = vld [vmem:[%s1811] sm:$0xf]
        %v1814 = vsel %vm399, %v1795, 0
        %v1817 = vsel %vm399, %v1796, 0
        %v1820 = vsel %vm399, %v1797, 0
        %v1823 = vsel %vm399, %v1798, 0
        %v1826 = vsel %vm399, %v1799, 0
        %v1829 = vsel %vm399, %v1800, 0
        %v1832 = vsel %vm399, %v1801, 0
        %v1835 = vsel %vm399, %v1802, 0
        %v1838 = vsel %vm399, %v1803, 0
        %v1841 = vsel %vm399, %v1804, 0
        %v1844 = vsel %vm399, %v1805, 0
        %v1847 = vsel %vm399, %v1806, 0
        %v1850 = vsel %vm399, %v1807, 0
        %v1853 = vsel %vm399, %v1808, 0
        %v1856 = vsel %vm399, %v1809, 0
        %v1859 = vsel %vm399, %v1810, 0
        %v1862 = vsel %vm523, %v1812, 0
        %1864 = vmatprep.subr.mxu0 0.0
        %1865 = vmatpush1.msra.mxu0 0.0
        %1866 = vmatprep.subr.mxu0 0.0
        %1867 = vmatpush1.msra.mxu0 0.0
        %1868 = vmatprep.subr.mxu0 0.0
        %1869 = vmatpush1.msra.mxu0 0.0
        %1870 = vmatprep.subr.mxu0 0.0
        %1871 = vmatpush1.msra.mxu0 0.0
        %1872 = vmatprep.subr.mxu0 0.0
        %1873 = vmatpush1.msra.mxu0 0.0
        %1874 = vmatprep.subr.mxu0 0.0
        %1875 = vmatpush1.msra.mxu0 0.0
        %1876 = vmatprep.subr.mxu0 0.0
        %1877 = vmatpush1.msra.mxu0 0.0
        %1878 = vmatprep.subr.mxu0 0.0
        %1879 = vmatpush1.msra.mxu0 0.0
        %1880 = vmatprep.subr.mxu0 0.0
        %1881 = vmatpush1.msra.mxu0 0.0
        %1882 = vmatprep.subr.mxu0 0.0
        %1883 = vmatpush1.msra.mxu0 0.0
        %1884 = vmatprep.subr.mxu0 0.0
        %1885 = vmatpush1.msra.mxu0 0.0
        %1886 = vmatprep.subr.mxu0 0.0
        %1887 = vmatpush1.msra.mxu0 0.0
        %1888 = vmatprep.subr.mxu0 0.0
        %1889 = vmatpush1.msra.mxu0 0.0
        %1890 = vmatprep.subr.mxu0 0.0
        %1891 = vmatpush1.msra.mxu0 0.0
        %1892 = vmatprep.subr.mxu0 0.0
        %1893 = vmatpush1.msra.mxu0 0.0
        %1894 = vmatprep.subr.mxu0 0.0
        %1895 = vmatpush1.msra.mxu0 %v1862
        %1896 = vmatprep.subr.mxu0 0.0
        %1897 = vmatpush2.msra.mxu0 0.0
        %1898 = vmatprep.subr.mxu0 0.0
        %1899 = vmatpush2.msra.mxu0 0.0
        %1900 = vmatprep.subr.mxu0 0.0
        %1901 = vmatpush2.msra.mxu0 0.0
        %1902 = vmatprep.subr.mxu0 0.0
        %1903 = vmatpush2.msra.mxu0 0.0
        %1904 = vmatprep.subr.mxu0 0.0
        %1905 = vmatpush2.msra.mxu0 0.0
        %1906 = vmatprep.subr.mxu0 0.0
        %1907 = vmatpush2.msra.mxu0 0.0
        %1908 = vmatprep.subr.mxu0 0.0
        %1909 = vmatpush2.msra.mxu0 0.0
        %1910 = vmatprep.subr.mxu0 0.0
        %1911 = vmatpush2.msra.mxu0 0.0
        %1912 = vmatprep.subr.mxu0 0.0
        %1913 = vmatpush2.msra.mxu0 0.0
        %1914 = vmatprep.subr.mxu0 0.0
        %1915 = vmatpush2.msra.mxu0 0.0
        %1916 = vmatprep.subr.mxu0 0.0
        %1917 = vmatpush2.msra.mxu0 0.0
        %1918 = vmatprep.subr.mxu0 0.0
        %1919 = vmatpush2.msra.mxu0 0.0
        %1920 = vmatprep.subr.mxu0 0.0
        %1921 = vmatpush2.msra.mxu0 0.0
        %1922 = vmatprep.subr.mxu0 0.0
        %1923 = vmatpush2.msra.mxu0 0.0
        %1924 = vmatprep.subr.mxu0 0.0
        %1925 = vmatpush2.msra.mxu0 0.0
        %1926 = vmatprep.subr.mxu0 0.0
        %1927 = vmatpush2.msra.mxu0 0.0
        %1928 = vmatprep.mubr.f32.mxu0 0.0
        %1929 = vmatmul.mubr.f32.gmra.mxu0 %v1814
        %v1930 = vpop.f32.mrf.mxu0
        %v1931 = vadd.f32 0.0, %v1930
        %v1932 = vpop.f32.mrf.mxu0
        %1933 = vmatprep.mubr.f32.mxu0 0.0
        %1934 = vmatmul.mubr.f32.gmra.mxu0 %v1817
        %v1935 = vpop.f32.mrf.mxu0
        %v1936 = vadd.f32 0.0, %v1935
        %v1937 = vpop.f32.mrf.mxu0
        %1938 = vmatprep.mubr.f32.mxu0 0.0
        %1939 = vmatmul.mubr.f32.gmra.mxu0 %v1820
        %v1940 = vpop.f32.mrf.mxu0
        %v1941 = vadd.f32 0.0, %v1940
        %v1942 = vpop.f32.mrf.mxu0
        %1943 = vmatprep.mubr.f32.mxu0 0.0
        %1944 = vmatmul.mubr.f32.gmra.mxu0 %v1823
        %v1945 = vpop.f32.mrf.mxu0
        %v1946 = vadd.f32 0.0, %v1945
        %v1947 = vpop.f32.mrf.mxu0
        %1948 = vmatprep.mubr.f32.mxu0 0.0
        %1949 = vmatmul.mubr.f32.gmra.mxu0 %v1826
        %v1950 = vpop.f32.mrf.mxu0
        %v1951 = vadd.f32 0.0, %v1950
        %v1952 = vpop.f32.mrf.mxu0
        %1953 = vmatprep.mubr.f32.mxu0 0.0
        %1954 = vmatmul.mubr.f32.gmra.mxu0 %v1829
        %v1955 = vpop.f32.mrf.mxu0
        %v1956 = vadd.f32 0.0, %v1955
        %v1957 = vpop.f32.mrf.mxu0
        %1958 = vmatprep.mubr.f32.mxu0 0.0
        %1959 = vmatmul.mubr.f32.gmra.mxu0 %v1832
        %v1960 = vpop.f32.mrf.mxu0
        %v1961 = vadd.f32 0.0, %v1960
        %v1962 = vpop.f32.mrf.mxu0
        %1963 = vmatprep.mubr.f32.mxu0 0.0
        %1964 = vmatmul.mubr.f32.gmra.mxu0 %v1835
        %v1965 = vpop.f32.mrf.mxu0
        %v1966 = vadd.f32 0.0, %v1965
        %v1967 = vpop.f32.mrf.mxu0
        %1968 = vmatprep.mubr.f32.mxu0 0.0
        %1969 = vmatmul.mubr.f32.gmra.mxu0 %v1838
        %v1970 = vpop.f32.mrf.mxu0
        %v1971 = vadd.f32 0.0, %v1970
        %v1972 = vpop.f32.mrf.mxu0
        %1973 = vmatprep.mubr.f32.mxu0 0.0
        %1974 = vmatmul.mubr.f32.gmra.mxu0 %v1841
        %v1975 = vpop.f32.mrf.mxu0
        %v1976 = vadd.f32 0.0, %v1975
        %v1977 = vpop.f32.mrf.mxu0
        %1978 = vmatprep.mubr.f32.mxu0 0.0
        %1979 = vmatmul.mubr.f32.gmra.mxu0 %v1844
        %v1980 = vpop.f32.mrf.mxu0
        %v1981 = vadd.f32 0.0, %v1980
        %v1982 = vpop.f32.mrf.mxu0
        %1983 = vmatprep.mubr.f32.mxu0 0.0
        %1984 = vmatmul.mubr.f32.gmra.mxu0 %v1847
        %v1985 = vpop.f32.mrf.mxu0
        %v1986 = vadd.f32 0.0, %v1985
        %v1987 = vpop.f32.mrf.mxu0
        %1988 = vmatprep.mubr.f32.mxu0 0.0
        %1989 = vmatmul.mubr.f32.gmra.mxu0 %v1850
        %v1990 = vpop.f32.mrf.mxu0
        %v1991 = vadd.f32 0.0, %v1990
        %v1992 = vpop.f32.mrf.mxu0
        %1993 = vmatprep.mubr.f32.mxu0 0.0
        %1994 = vmatmul.mubr.f32.gmra.mxu0 %v1853
        %v1995 = vpop.f32.mrf.mxu0
        %v1996 = vadd.f32 0.0, %v1995
        %v1997 = vpop.f32.mrf.mxu0
        %1998 = vmatprep.mubr.f32.mxu0 0.0
        %1999 = vmatmul.mubr.f32.gmra.mxu0 %v1856
        %v2000 = vpop.f32.mrf.mxu0
        %v2001 = vadd.f32 0.0, %v2000
        %v2002 = vpop.f32.mrf.mxu0
        %2003 = vmatprep.mubr.f32.mxu0 0.0
        %2004 = vmatmul.mubr.f32.gmra.mxu0 %v1859
        %v2005 = vpop.f32.mrf.mxu0
        %v2006 = vadd.f32 0.0, %v2005
        %v2007 = vpop.f32.mrf.mxu0
        %2008 = vdwg.mxu0
        %v2009 = vadd.f32 %v1717, %v1931
        %v2010 = vadd.f32 %v1722, %v1936
        %v2011 = vadd.f32 %v1727, %v1941
        %v2012 = vadd.f32 %v1732, %v1946
        %v2013 = vadd.f32 %v1737, %v1951
        %v2014 = vadd.f32 %v1742, %v1956
        %v2015 = vadd.f32 %v1747, %v1961
        %v2016 = vadd.f32 %v1752, %v1966
        %v2017 = vadd.f32 %v1757, %v1971
        %v2018 = vadd.f32 %v1762, %v1976
        %v2019 = vadd.f32 %v1767, %v1981
        %v2020 = vadd.f32 %v1772, %v1986
        %v2021 = vadd.f32 %v1777, %v1991
        %v2022 = vadd.f32 %v1782, %v1996
        %v2023 = vadd.f32 %v1787, %v2001
        %v2024 = vadd.f32 %v1792, %v2006
        %v2025 = vld [vmem:[%s868 + $0x2] sm:$0xff]
        %v2026 = vld [vmem:[%s868 + $0xa] sm:$0xff]
        %v2027 = vld [vmem:[%s868 + $0x1a] sm:$0xff]
        %v2028 = vld [vmem:[%s868 + $0x22] sm:$0xff]
        %v2029 = vld [vmem:[%s868 + $0x32] sm:$0xff]
        %v2030 = vld [vmem:[%s868 + $0x3a] sm:$0xff]
        %v2031 = vld [vmem:[%s868 + $0x4a] sm:$0xff]
        %v2032 = vld [vmem:[%s868 + $0x52] sm:$0xff]
        %v2033 = vld [vmem:[%s868 + $0x62] sm:$0xff]
        %v2034 = vld [vmem:[%s868 + $0x6a] sm:$0xff]
        %v2035 = vld [vmem:[%s868 + $0x7a] sm:$0xff]
        %v2036 = vld [vmem:[%s868 + $0x82] sm:$0xff]
        %v2037 = vld [vmem:[%s868 + $0x92] sm:$0xff]
        %v2038 = vld [vmem:[%s868 + $0x9a] sm:$0xff]
        %v2039 = vld [vmem:[%s868 + $0xaa] sm:$0xff]
        %v2040 = vld [vmem:[%s868 + $0xb2] sm:$0xff]
        %s2041 = scalar_lea.vmem %s3, 28
        %v2042 = vld [vmem:[%s2041] sm:$0xf]
        %v2044 = vsel %vm399, %v2025, 0
        %v2047 = vsel %vm399, %v2026, 0
        %v2050 = vsel %vm399, %v2027, 0
        %v2053 = vsel %vm399, %v2028, 0
        %v2056 = vsel %vm399, %v2029, 0
        %v2059 = vsel %vm399, %v2030, 0
        %v2062 = vsel %vm399, %v2031, 0
        %v2065 = vsel %vm399, %v2032, 0
        %v2068 = vsel %vm399, %v2033, 0
        %v2071 = vsel %vm399, %v2034, 0
        %v2074 = vsel %vm399, %v2035, 0
        %v2077 = vsel %vm399, %v2036, 0
        %v2080 = vsel %vm399, %v2037, 0
        %v2083 = vsel %vm399, %v2038, 0
        %v2086 = vsel %vm399, %v2039, 0
        %v2089 = vsel %vm399, %v2040, 0
        %v2092 = vsel %vm523, %v2042, 0
        %2094 = vmatprep.subr.mxu0 0.0
        %2095 = vmatpush1.msra.mxu0 0.0
        %2096 = vmatprep.subr.mxu0 0.0
        %2097 = vmatpush1.msra.mxu0 0.0
        %2098 = vmatprep.subr.mxu0 0.0
        %2099 = vmatpush1.msra.mxu0 0.0
        %2100 = vmatprep.subr.mxu0 0.0
        %2101 = vmatpush1.msra.mxu0 0.0
        %2102 = vmatprep.subr.mxu0 0.0
        %2103 = vmatpush1.msra.mxu0 0.0
        %2104 = vmatprep.subr.mxu0 0.0
        %2105 = vmatpush1.msra.mxu0 0.0
        %2106 = vmatprep.subr.mxu0 0.0
        %2107 = vmatpush1.msra.mxu0 0.0
        %2108 = vmatprep.subr.mxu0 0.0
        %2109 = vmatpush1.msra.mxu0 0.0
        %2110 = vmatprep.subr.mxu0 0.0
        %2111 = vmatpush1.msra.mxu0 0.0
        %2112 = vmatprep.subr.mxu0 0.0
        %2113 = vmatpush1.msra.mxu0 0.0
        %2114 = vmatprep.subr.mxu0 0.0
        %2115 = vmatpush1.msra.mxu0 0.0
        %2116 = vmatprep.subr.mxu0 0.0
        %2117 = vmatpush1.msra.mxu0 0.0
        %2118 = vmatprep.subr.mxu0 0.0
        %2119 = vmatpush1.msra.mxu0 0.0
        %2120 = vmatprep.subr.mxu0 0.0
        %2121 = vmatpush1.msra.mxu0 0.0
        %2122 = vmatprep.subr.mxu0 0.0
        %2123 = vmatpush1.msra.mxu0 0.0
        %2124 = vmatprep.subr.mxu0 0.0
        %2125 = vmatpush1.msra.mxu0 %v2092
        %2126 = vmatprep.subr.mxu0 0.0
        %2127 = vmatpush2.msra.mxu0 0.0
        %2128 = vmatprep.subr.mxu0 0.0
        %2129 = vmatpush2.msra.mxu0 0.0
        %2130 = vmatprep.subr.mxu0 0.0
        %2131 = vmatpush2.msra.mxu0 0.0
        %2132 = vmatprep.subr.mxu0 0.0
        %2133 = vmatpush2.msra.mxu0 0.0
        %2134 = vmatprep.subr.mxu0 0.0
        %2135 = vmatpush2.msra.mxu0 0.0
        %2136 = vmatprep.subr.mxu0 0.0
        %2137 = vmatpush2.msra.mxu0 0.0
        %2138 = vmatprep.subr.mxu0 0.0
        %2139 = vmatpush2.msra.mxu0 0.0
        %2140 = vmatprep.subr.mxu0 0.0
        %2141 = vmatpush2.msra.mxu0 0.0
        %2142 = vmatprep.subr.mxu0 0.0
        %2143 = vmatpush2.msra.mxu0 0.0
        %2144 = vmatprep.subr.mxu0 0.0
        %2145 = vmatpush2.msra.mxu0 0.0
        %2146 = vmatprep.subr.mxu0 0.0
        %2147 = vmatpush2.msra.mxu0 0.0
        %2148 = vmatprep.subr.mxu0 0.0
        %2149 = vmatpush2.msra.mxu0 0.0
        %2150 = vmatprep.subr.mxu0 0.0
        %2151 = vmatpush2.msra.mxu0 0.0
        %2152 = vmatprep.subr.mxu0 0.0
        %2153 = vmatpush2.msra.mxu0 0.0
        %2154 = vmatprep.subr.mxu0 0.0
        %2155 = vmatpush2.msra.mxu0 0.0
        %2156 = vmatprep.subr.mxu0 0.0
        %2157 = vmatpush2.msra.mxu0 0.0
        %2158 = vmatprep.mubr.f32.mxu0 0.0
        %2159 = vmatmul.mubr.f32.gmra.mxu0 %v2044
        %v2160 = vpop.f32.mrf.mxu0
        %v2161 = vadd.f32 0.0, %v2160
        %v2162 = vpop.f32.mrf.mxu0
        %2163 = vmatprep.mubr.f32.mxu0 0.0
        %2164 = vmatmul.mubr.f32.gmra.mxu0 %v2047
        %v2165 = vpop.f32.mrf.mxu0
        %v2166 = vadd.f32 0.0, %v2165
        %v2167 = vpop.f32.mrf.mxu0
        %2168 = vmatprep.mubr.f32.mxu0 0.0
        %2169 = vmatmul.mubr.f32.gmra.mxu0 %v2050
        %v2170 = vpop.f32.mrf.mxu0
        %v2171 = vadd.f32 0.0, %v2170
        %v2172 = vpop.f32.mrf.mxu0
        %2173 = vmatprep.mubr.f32.mxu0 0.0
        %2174 = vmatmul.mubr.f32.gmra.mxu0 %v2053
        %v2175 = vpop.f32.mrf.mxu0
        %v2176 = vadd.f32 0.0, %v2175
        %v2177 = vpop.f32.mrf.mxu0
        %2178 = vmatprep.mubr.f32.mxu0 0.0
        %2179 = vmatmul.mubr.f32.gmra.mxu0 %v2056
        %v2180 = vpop.f32.mrf.mxu0
        %v2181 = vadd.f32 0.0, %v2180
        %v2182 = vpop.f32.mrf.mxu0
        %2183 = vmatprep.mubr.f32.mxu0 0.0
        %2184 = vmatmul.mubr.f32.gmra.mxu0 %v2059
        %v2185 = vpop.f32.mrf.mxu0
        %v2186 = vadd.f32 0.0, %v2185
        %v2187 = vpop.f32.mrf.mxu0
        %2188 = vmatprep.mubr.f32.mxu0 0.0
        %2189 = vmatmul.mubr.f32.gmra.mxu0 %v2062
        %v2190 = vpop.f32.mrf.mxu0
        %v2191 = vadd.f32 0.0, %v2190
        %v2192 = vpop.f32.mrf.mxu0
        %2193 = vmatprep.mubr.f32.mxu0 0.0
        %2194 = vmatmul.mubr.f32.gmra.mxu0 %v2065
        %v2195 = vpop.f32.mrf.mxu0
        %v2196 = vadd.f32 0.0, %v2195
        %v2197 = vpop.f32.mrf.mxu0
        %2198 = vmatprep.mubr.f32.mxu0 0.0
        %2199 = vmatmul.mubr.f32.gmra.mxu0 %v2068
        %v2200 = vpop.f32.mrf.mxu0
        %v2201 = vadd.f32 0.0, %v2200
        %v2202 = vpop.f32.mrf.mxu0
        %2203 = vmatprep.mubr.f32.mxu0 0.0
        %2204 = vmatmul.mubr.f32.gmra.mxu0 %v2071
        %v2205 = vpop.f32.mrf.mxu0
        %v2206 = vadd.f32 0.0, %v2205
        %v2207 = vpop.f32.mrf.mxu0
        %2208 = vmatprep.mubr.f32.mxu0 0.0
        %2209 = vmatmul.mubr.f32.gmra.mxu0 %v2074
        %v2210 = vpop.f32.mrf.mxu0
        %v2211 = vadd.f32 0.0, %v2210
        %v2212 = vpop.f32.mrf.mxu0
        %2213 = vmatprep.mubr.f32.mxu0 0.0
        %2214 = vmatmul.mubr.f32.gmra.mxu0 %v2077
        %v2215 = vpop.f32.mrf.mxu0
        %v2216 = vadd.f32 0.0, %v2215
        %v2217 = vpop.f32.mrf.mxu0
        %2218 = vmatprep.mubr.f32.mxu0 0.0
        %2219 = vmatmul.mubr.f32.gmra.mxu0 %v2080
        %v2220 = vpop.f32.mrf.mxu0
        %v2221 = vadd.f32 0.0, %v2220
        %v2222 = vpop.f32.mrf.mxu0
        %2223 = vmatprep.mubr.f32.mxu0 0.0
        %2224 = vmatmul.mubr.f32.gmra.mxu0 %v2083
        %v2225 = vpop.f32.mrf.mxu0
        %v2226 = vadd.f32 0.0, %v2225
        %v2227 = vpop.f32.mrf.mxu0
        %2228 = vmatprep.mubr.f32.mxu0 0.0
        %2229 = vmatmul.mubr.f32.gmra.mxu0 %v2086
        %v2230 = vpop.f32.mrf.mxu0
        %v2231 = vadd.f32 0.0, %v2230
        %v2232 = vpop.f32.mrf.mxu0
        %2233 = vmatprep.mubr.f32.mxu0 0.0
        %2234 = vmatmul.mubr.f32.gmra.mxu0 %v2089
        %v2235 = vpop.f32.mrf.mxu0
        %v2236 = vadd.f32 0.0, %v2235
        %v2237 = vpop.f32.mrf.mxu0
        %2238 = vdwg.mxu0
        %v2239 = vadd.f32 %v2009, %v2161
        %v2240 = vadd.f32 %v2010, %v2166
        %v2241 = vadd.f32 %v2011, %v2171
        %v2242 = vadd.f32 %v2012, %v2176
        %v2243 = vadd.f32 %v2013, %v2181
        %v2244 = vadd.f32 %v2014, %v2186
        %v2245 = vadd.f32 %v2015, %v2191
        %v2246 = vadd.f32 %v2016, %v2196
        %v2247 = vadd.f32 %v2017, %v2201
        %v2248 = vadd.f32 %v2018, %v2206
        %v2249 = vadd.f32 %v2019, %v2211
        %v2250 = vadd.f32 %v2020, %v2216
        %v2251 = vadd.f32 %v2021, %v2221
        %v2252 = vadd.f32 %v2022, %v2226
        %v2253 = vadd.f32 %v2023, %v2231
        %v2254 = vadd.f32 %v2024, %v2236
        %v2255 = vadd.f32 %v2239, %v1333
        %v2256 = vadd.f32 %v2240, %v1333
        %v2257 = vadd.f32 %v2241, %v1333
        %v2258 = vadd.f32 %v2242, %v1333
        %v2259 = vadd.f32 %v2243, %v1333
        %v2260 = vadd.f32 %v2244, %v1333
        %v2261 = vadd.f32 %v2245, %v1333
        %v2262 = vadd.f32 %v2246, %v1333
        %v2263 = vadd.f32 %v2247, %v1333
        %v2264 = vadd.f32 %v2248, %v1333
        %v2265 = vadd.f32 %v2249, %v1333
        %v2266 = vadd.f32 %v2250, %v1333
        %v2267 = vadd.f32 %v2251, %v1333
        %v2268 = vadd.f32 %v2252, %v1333
        %v2269 = vadd.f32 %v2253, %v1333
        %v2270 = vadd.f32 %v2254, %v1333
        %s2271 = scalar_lea.vmem %s325, 128 [#allocation3]
        %2272 = vst.msk [vmem:[%s2271] sm:$0xff] %vm399, %v2255
        %2273 = vst.msk [vmem:[%s2271 + $0x8] sm:$0xff] %vm399, %v2256
        %2274 = vst.msk [vmem:[%s2271 + $0x10] sm:$0xff] %vm399, %v2257
        %2275 = vst.msk [vmem:[%s2271 + $0x18] sm:$0xff] %vm399, %v2258
        %2276 = vst.msk [vmem:[%s2271 + $0x20] sm:$0xff] %vm399, %v2259
        %2277 = vst.msk [vmem:[%s2271 + $0x28] sm:$0xff] %vm399, %v2260
        %2278 = vst.msk [vmem:[%s2271 + $0x30] sm:$0xff] %vm399, %v2261
        %2279 = vst.msk [vmem:[%s2271 + $0x38] sm:$0xff] %vm399, %v2262
        %2280 = vst.msk [vmem:[%s2271 + $0x40] sm:$0xff] %vm399, %v2263
        %2281 = vst.msk [vmem:[%s2271 + $0x48] sm:$0xff] %vm399, %v2264
        %2282 = vst.msk [vmem:[%s2271 + $0x50] sm:$0xff] %vm399, %v2265
        %2283 = vst.msk [vmem:[%s2271 + $0x58] sm:$0xff] %vm399, %v2266
        %2284 = vst.msk [vmem:[%s2271 + $0x60] sm:$0xff] %vm399, %v2267
        %2285 = vst.msk [vmem:[%s2271 + $0x68] sm:$0xff] %vm399, %v2268
        %2286 = vst.msk [vmem:[%s2271 + $0x70] sm:$0xff] %vm399, %v2269
        %2287 = vst.msk [vmem:[%s2271 + $0x78] sm:$0xff] %vm399, %v2270
        %v2288 = vld [vmem:[%s868] sm:$0xff]
        %v2289 = vld [vmem:[%s868 + $0x8] sm:$0xff]
        %v2290 = vld [vmem:[%s868 + $0x18] sm:$0xff]
        %v2291 = vld [vmem:[%s868 + $0x20] sm:$0xff]
        %v2292 = vld [vmem:[%s868 + $0x30] sm:$0xff]
        %v2293 = vld [vmem:[%s868 + $0x38] sm:$0xff]
        %v2294 = vld [vmem:[%s868 + $0x48] sm:$0xff]
        %v2295 = vld [vmem:[%s868 + $0x50] sm:$0xff]
        %v2296 = vld [vmem:[%s868 + $0x60] sm:$0xff]
        %v2297 = vld [vmem:[%s868 + $0x68] sm:$0xff]
        %v2298 = vld [vmem:[%s868 + $0x78] sm:$0xff]
        %v2299 = vld [vmem:[%s868 + $0x80] sm:$0xff]
        %v2300 = vld [vmem:[%s868 + $0x90] sm:$0xff]
        %v2301 = vld [vmem:[%s868 + $0x98] sm:$0xff]
        %v2302 = vld [vmem:[%s868 + $0xa8] sm:$0xff]
        %v2303 = vld [vmem:[%s868 + $0xb0] sm:$0xff]
        %s2304 = scalar_lea.vmem %s3, 32
        %v2305 = vld [vmem:[%s2304] sm:$0xf]
        %v2306 = vld [vmem:[%s868 + $0x1] sm:$0xff]
        %v2307 = vld [vmem:[%s868 + $0x9] sm:$0xff]
        %v2308 = vld [vmem:[%s868 + $0x19] sm:$0xff]
        %v2309 = vld [vmem:[%s868 + $0x21] sm:$0xff]
        %v2310 = vld [vmem:[%s868 + $0x31] sm:$0xff]
        %v2311 = vld [vmem:[%s868 + $0x39] sm:$0xff]
        %v2312 = vld [vmem:[%s868 + $0x49] sm:$0xff]
        %v2313 = vld [vmem:[%s868 + $0x51] sm:$0xff]
        %v2314 = vld [vmem:[%s868 + $0x61] sm:$0xff]
        %v2315 = vld [vmem:[%s868 + $0x69] sm:$0xff]
        %v2316 = vld [vmem:[%s868 + $0x79] sm:$0xff]
        %v2317 = vld [vmem:[%s868 + $0x81] sm:$0xff]
        %v2318 = vld [vmem:[%s868 + $0x91] sm:$0xff]
        %v2319 = vld [vmem:[%s868 + $0x99] sm:$0xff]
        %v2320 = vld [vmem:[%s868 + $0xa9] sm:$0xff]
        %v2321 = vld [vmem:[%s868 + $0xb1] sm:$0xff]
        %s2322 = scalar_lea.vmem %s3, 36
        %v2323 = vld [vmem:[%s2322] sm:$0xf]
        %v2325 = vsel %vm399, %v2306, 0
        %v2328 = vsel %vm399, %v2307, 0
        %v2331 = vsel %vm399, %v2308, 0
        %v2334 = vsel %vm399, %v2309, 0
        %v2337 = vsel %vm399, %v2310, 0
        %v2340 = vsel %vm399, %v2311, 0
        %v2343 = vsel %vm399, %v2312, 0
        %v2346 = vsel %vm399, %v2313, 0
        %v2349 = vsel %vm399, %v2314, 0
        %v2352 = vsel %vm399, %v2315, 0
        %v2355 = vsel %vm399, %v2316, 0
        %v2358 = vsel %vm399, %v2317, 0
        %v2361 = vsel %vm399, %v2318, 0
        %v2364 = vsel %vm399, %v2319, 0
        %v2367 = vsel %vm399, %v2320, 0
        %v2370 = vsel %vm399, %v2321, 0
        %v2373 = vsel %vm523, %v2323, 0
        %2375 = vmatprep.subr.mxu0 0.0
        %2376 = vmatpush1.msra.mxu0 0.0
        %2377 = vmatprep.subr.mxu0 0.0
        %2378 = vmatpush1.msra.mxu0 0.0
        %2379 = vmatprep.subr.mxu0 0.0
        %2380 = vmatpush1.msra.mxu0 0.0
        %2381 = vmatprep.subr.mxu0 0.0
        %2382 = vmatpush1.msra.mxu0 0.0
        %2383 = vmatprep.subr.mxu0 0.0
        %2384 = vmatpush1.msra.mxu0 0.0
        %2385 = vmatprep.subr.mxu0 0.0
        %2386 = vmatpush1.msra.mxu0 0.0
        %2387 = vmatprep.subr.mxu0 0.0
        %2388 = vmatpush1.msra.mxu0 0.0
        %2389 = vmatprep.subr.mxu0 0.0
        %2390 = vmatpush1.msra.mxu0 0.0
        %2391 = vmatprep.subr.mxu0 0.0
        %2392 = vmatpush1.msra.mxu0 0.0
        %2393 = vmatprep.subr.mxu0 0.0
        %2394 = vmatpush1.msra.mxu0 0.0
        %2395 = vmatprep.subr.mxu0 0.0
        %2396 = vmatpush1.msra.mxu0 0.0
        %2397 = vmatprep.subr.mxu0 0.0
        %2398 = vmatpush1.msra.mxu0 0.0
        %2399 = vmatprep.subr.mxu0 0.0
        %2400 = vmatpush1.msra.mxu0 0.0
        %2401 = vmatprep.subr.mxu0 0.0
        %2402 = vmatpush1.msra.mxu0 0.0
        %2403 = vmatprep.subr.mxu0 0.0
        %2404 = vmatpush1.msra.mxu0 0.0
        %2405 = vmatprep.subr.mxu0 0.0
        %2406 = vmatpush1.msra.mxu0 %v2373
        %2407 = vmatprep.subr.mxu0 0.0
        %2408 = vmatpush2.msra.mxu0 0.0
        %2409 = vmatprep.subr.mxu0 0.0
        %2410 = vmatpush2.msra.mxu0 0.0
        %2411 = vmatprep.subr.mxu0 0.0
        %2412 = vmatpush2.msra.mxu0 0.0
        %2413 = vmatprep.subr.mxu0 0.0
        %2414 = vmatpush2.msra.mxu0 0.0
        %2415 = vmatprep.subr.mxu0 0.0
        %2416 = vmatpush2.msra.mxu0 0.0
        %2417 = vmatprep.subr.mxu0 0.0
        %2418 = vmatpush2.msra.mxu0 0.0
        %2419 = vmatprep.subr.mxu0 0.0
        %2420 = vmatpush2.msra.mxu0 0.0
        %2421 = vmatprep.subr.mxu0 0.0
        %2422 = vmatpush2.msra.mxu0 0.0
        %2423 = vmatprep.subr.mxu0 0.0
        %2424 = vmatpush2.msra.mxu0 0.0
        %2425 = vmatprep.subr.mxu0 0.0
        %2426 = vmatpush2.msra.mxu0 0.0
        %2427 = vmatprep.subr.mxu0 0.0
        %2428 = vmatpush2.msra.mxu0 0.0
        %2429 = vmatprep.subr.mxu0 0.0
        %2430 = vmatpush2.msra.mxu0 0.0
        %2431 = vmatprep.subr.mxu0 0.0
        %2432 = vmatpush2.msra.mxu0 0.0
        %2433 = vmatprep.subr.mxu0 0.0
        %2434 = vmatpush2.msra.mxu0 0.0
        %2435 = vmatprep.subr.mxu0 0.0
        %2436 = vmatpush2.msra.mxu0 0.0
        %2437 = vmatprep.subr.mxu0 0.0
        %2438 = vmatpush2.msra.mxu0 0.0
        %2439 = vmatprep.mubr.f32.mxu0 0.0
        %2440 = vmatmul.mubr.f32.gmra.mxu0 %v2325
        %v2441 = vpop.f32.mrf.mxu0
        %v2442 = vadd.f32 0.0, %v2441
        %v2443 = vpop.f32.mrf.mxu0
        %2444 = vmatprep.mubr.f32.mxu0 0.0
        %2445 = vmatmul.mubr.f32.gmra.mxu0 %v2328
        %v2446 = vpop.f32.mrf.mxu0
        %v2447 = vadd.f32 0.0, %v2446
        %v2448 = vpop.f32.mrf.mxu0
        %2449 = vmatprep.mubr.f32.mxu0 0.0
        %2450 = vmatmul.mubr.f32.gmra.mxu0 %v2331
        %v2451 = vpop.f32.mrf.mxu0
        %v2452 = vadd.f32 0.0, %v2451
        %v2453 = vpop.f32.mrf.mxu0
        %2454 = vmatprep.mubr.f32.mxu0 0.0
        %2455 = vmatmul.mubr.f32.gmra.mxu0 %v2334
        %v2456 = vpop.f32.mrf.mxu0
        %v2457 = vadd.f32 0.0, %v2456
        %v2458 = vpop.f32.mrf.mxu0
        %2459 = vmatprep.mubr.f32.mxu0 0.0
        %2460 = vmatmul.mubr.f32.gmra.mxu0 %v2337
        %v2461 = vpop.f32.mrf.mxu0
        %v2462 = vadd.f32 0.0, %v2461
        %v2463 = vpop.f32.mrf.mxu0
        %2464 = vmatprep.mubr.f32.mxu0 0.0
        %2465 = vmatmul.mubr.f32.gmra.mxu0 %v2340
        %v2466 = vpop.f32.mrf.mxu0
        %v2467 = vadd.f32 0.0, %v2466
        %v2468 = vpop.f32.mrf.mxu0
        %2469 = vmatprep.mubr.f32.mxu0 0.0
        %2470 = vmatmul.mubr.f32.gmra.mxu0 %v2343
        %v2471 = vpop.f32.mrf.mxu0
        %v2472 = vadd.f32 0.0, %v2471
        %v2473 = vpop.f32.mrf.mxu0
        %2474 = vmatprep.mubr.f32.mxu0 0.0
        %2475 = vmatmul.mubr.f32.gmra.mxu0 %v2346
        %v2476 = vpop.f32.mrf.mxu0
        %v2477 = vadd.f32 0.0, %v2476
        %v2478 = vpop.f32.mrf.mxu0
        %2479 = vmatprep.mubr.f32.mxu0 0.0
        %2480 = vmatmul.mubr.f32.gmra.mxu0 %v2349
        %v2481 = vpop.f32.mrf.mxu0
        %v2482 = vadd.f32 0.0, %v2481
        %v2483 = vpop.f32.mrf.mxu0
        %2484 = vmatprep.mubr.f32.mxu0 0.0
        %2485 = vmatmul.mubr.f32.gmra.mxu0 %v2352
        %v2486 = vpop.f32.mrf.mxu0
        %v2487 = vadd.f32 0.0, %v2486
        %v2488 = vpop.f32.mrf.mxu0
        %2489 = vmatprep.mubr.f32.mxu0 0.0
        %2490 = vmatmul.mubr.f32.gmra.mxu0 %v2355
        %v2491 = vpop.f32.mrf.mxu0
        %v2492 = vadd.f32 0.0, %v2491
        %v2493 = vpop.f32.mrf.mxu0
        %2494 = vmatprep.mubr.f32.mxu0 0.0
        %2495 = vmatmul.mubr.f32.gmra.mxu0 %v2358
        %v2496 = vpop.f32.mrf.mxu0
        %v2497 = vadd.f32 0.0, %v2496
        %v2498 = vpop.f32.mrf.mxu0
        %2499 = vmatprep.mubr.f32.mxu0 0.0
        %2500 = vmatmul.mubr.f32.gmra.mxu0 %v2361
        %v2501 = vpop.f32.mrf.mxu0
        %v2502 = vadd.f32 0.0, %v2501
        %v2503 = vpop.f32.mrf.mxu0
        %2504 = vmatprep.mubr.f32.mxu0 0.0
        %2505 = vmatmul.mubr.f32.gmra.mxu0 %v2364
        %v2506 = vpop.f32.mrf.mxu0
        %v2507 = vadd.f32 0.0, %v2506
        %v2508 = vpop.f32.mrf.mxu0
        %2509 = vmatprep.mubr.f32.mxu0 0.0
        %2510 = vmatmul.mubr.f32.gmra.mxu0 %v2367
        %v2511 = vpop.f32.mrf.mxu0
        %v2512 = vadd.f32 0.0, %v2511
        %v2513 = vpop.f32.mrf.mxu0
        %2514 = vmatprep.mubr.f32.mxu0 0.0
        %2515 = vmatmul.mubr.f32.gmra.mxu0 %v2370
        %v2516 = vpop.f32.mrf.mxu0
        %v2517 = vadd.f32 0.0, %v2516
        %v2518 = vpop.f32.mrf.mxu0
        %2519 = vdwg.mxu0
        %v2521 = vsel %vm399, %v2288, 0
        %v2524 = vsel %vm399, %v2289, 0
        %v2527 = vsel %vm399, %v2290, 0
        %v2530 = vsel %vm399, %v2291, 0
        %v2533 = vsel %vm399, %v2292, 0
        %v2536 = vsel %vm399, %v2293, 0
        %v2539 = vsel %vm399, %v2294, 0
        %v2542 = vsel %vm399, %v2295, 0
        %v2545 = vsel %vm399, %v2296, 0
        %v2548 = vsel %vm399, %v2297, 0
        %v2551 = vsel %vm399, %v2298, 0
        %v2554 = vsel %vm399, %v2299, 0
        %v2557 = vsel %vm399, %v2300, 0
        %v2560 = vsel %vm399, %v2301, 0
        %v2563 = vsel %vm399, %v2302, 0
        %v2566 = vsel %vm399, %v2303, 0
        %v2569 = vsel %vm523, %v2305, 0
        %2571 = vmatprep.subr.mxu0 0.0
        %2572 = vmatpush1.msra.mxu0 0.0
        %2573 = vmatprep.subr.mxu0 0.0
        %2574 = vmatpush1.msra.mxu0 0.0
        %2575 = vmatprep.subr.mxu0 0.0
        %2576 = vmatpush1.msra.mxu0 0.0
        %2577 = vmatprep.subr.mxu0 0.0
        %2578 = vmatpush1.msra.mxu0 0.0
        %2579 = vmatprep.subr.mxu0 0.0
        %2580 = vmatpush1.msra.mxu0 0.0
        %2581 = vmatprep.subr.mxu0 0.0
        %2582 = vmatpush1.msra.mxu0 0.0
        %2583 = vmatprep.subr.mxu0 0.0
        %2584 = vmatpush1.msra.mxu0 0.0
        %2585 = vmatprep.subr.mxu0 0.0
        %2586 = vmatpush1.msra.mxu0 0.0
        %2587 = vmatprep.subr.mxu0 0.0
        %2588 = vmatpush1.msra.mxu0 0.0
        %2589 = vmatprep.subr.mxu0 0.0
        %2590 = vmatpush1.msra.mxu0 0.0
        %2591 = vmatprep.subr.mxu0 0.0
        %2592 = vmatpush1.msra.mxu0 0.0
        %2593 = vmatprep.subr.mxu0 0.0
        %2594 = vmatpush1.msra.mxu0 0.0
        %2595 = vmatprep.subr.mxu0 0.0
        %2596 = vmatpush1.msra.mxu0 0.0
        %2597 = vmatprep.subr.mxu0 0.0
        %2598 = vmatpush1.msra.mxu0 0.0
        %2599 = vmatprep.subr.mxu0 0.0
        %2600 = vmatpush1.msra.mxu0 0.0
        %2601 = vmatprep.subr.mxu0 0.0
        %2602 = vmatpush1.msra.mxu0 %v2569
        %2603 = vmatprep.subr.mxu0 0.0
        %2604 = vmatpush2.msra.mxu0 0.0
        %2605 = vmatprep.subr.mxu0 0.0
        %2606 = vmatpush2.msra.mxu0 0.0
        %2607 = vmatprep.subr.mxu0 0.0
        %2608 = vmatpush2.msra.mxu0 0.0
        %2609 = vmatprep.subr.mxu0 0.0
        %2610 = vmatpush2.msra.mxu0 0.0
        %2611 = vmatprep.subr.mxu0 0.0
        %2612 = vmatpush2.msra.mxu0 0.0
        %2613 = vmatprep.subr.mxu0 0.0
        %2614 = vmatpush2.msra.mxu0 0.0
        %2615 = vmatprep.subr.mxu0 0.0
        %2616 = vmatpush2.msra.mxu0 0.0
        %2617 = vmatprep.subr.mxu0 0.0
        %2618 = vmatpush2.msra.mxu0 0.0
        %2619 = vmatprep.subr.mxu0 0.0
        %2620 = vmatpush2.msra.mxu0 0.0
        %2621 = vmatprep.subr.mxu0 0.0
        %2622 = vmatpush2.msra.mxu0 0.0
        %2623 = vmatprep.subr.mxu0 0.0
        %2624 = vmatpush2.msra.mxu0 0.0
        %2625 = vmatprep.subr.mxu0 0.0
        %2626 = vmatpush2.msra.mxu0 0.0
        %2627 = vmatprep.subr.mxu0 0.0
        %2628 = vmatpush2.msra.mxu0 0.0
        %2629 = vmatprep.subr.mxu0 0.0
        %2630 = vmatpush2.msra.mxu0 0.0
        %2631 = vmatprep.subr.mxu0 0.0
        %2632 = vmatpush2.msra.mxu0 0.0
        %2633 = vmatprep.subr.mxu0 0.0
        %2634 = vmatpush2.msra.mxu0 0.0
        %2635 = vmatprep.mubr.f32.mxu0 0.0
        %2636 = vmatmul.mubr.f32.gmra.mxu0 %v2521
        %v2637 = vpop.f32.mrf.mxu0
        %v2638 = vadd.f32 %v2442, %v2637
        %v2639 = vpop.f32.mrf.mxu0
        %2640 = vmatprep.mubr.f32.mxu0 0.0
        %2641 = vmatmul.mubr.f32.gmra.mxu0 %v2524
        %v2642 = vpop.f32.mrf.mxu0
        %v2643 = vadd.f32 %v2447, %v2642
        %v2644 = vpop.f32.mrf.mxu0
        %2645 = vmatprep.mubr.f32.mxu0 0.0
        %2646 = vmatmul.mubr.f32.gmra.mxu0 %v2527
        %v2647 = vpop.f32.mrf.mxu0
        %v2648 = vadd.f32 %v2452, %v2647
        %v2649 = vpop.f32.mrf.mxu0
        %2650 = vmatprep.mubr.f32.mxu0 0.0
        %2651 = vmatmul.mubr.f32.gmra.mxu0 %v2530
        %v2652 = vpop.f32.mrf.mxu0
        %v2653 = vadd.f32 %v2457, %v2652
        %v2654 = vpop.f32.mrf.mxu0
        %2655 = vmatprep.mubr.f32.mxu0 0.0
        %2656 = vmatmul.mubr.f32.gmra.mxu0 %v2533
        %v2657 = vpop.f32.mrf.mxu0
        %v2658 = vadd.f32 %v2462, %v2657
        %v2659 = vpop.f32.mrf.mxu0
        %2660 = vmatprep.mubr.f32.mxu0 0.0
        %2661 = vmatmul.mubr.f32.gmra.mxu0 %v2536
        %v2662 = vpop.f32.mrf.mxu0
        %v2663 = vadd.f32 %v2467, %v2662
        %v2664 = vpop.f32.mrf.mxu0
        %2665 = vmatprep.mubr.f32.mxu0 0.0
        %2666 = vmatmul.mubr.f32.gmra.mxu0 %v2539
        %v2667 = vpop.f32.mrf.mxu0
        %v2668 = vadd.f32 %v2472, %v2667
        %v2669 = vpop.f32.mrf.mxu0
        %2670 = vmatprep.mubr.f32.mxu0 0.0
        %2671 = vmatmul.mubr.f32.gmra.mxu0 %v2542
        %v2672 = vpop.f32.mrf.mxu0
        %v2673 = vadd.f32 %v2477, %v2672
        %v2674 = vpop.f32.mrf.mxu0
        %2675 = vmatprep.mubr.f32.mxu0 0.0
        %2676 = vmatmul.mubr.f32.gmra.mxu0 %v2545
        %v2677 = vpop.f32.mrf.mxu0
        %v2678 = vadd.f32 %v2482, %v2677
        %v2679 = vpop.f32.mrf.mxu0
        %2680 = vmatprep.mubr.f32.mxu0 0.0
        %2681 = vmatmul.mubr.f32.gmra.mxu0 %v2548
        %v2682 = vpop.f32.mrf.mxu0
        %v2683 = vadd.f32 %v2487, %v2682
        %v2684 = vpop.f32.mrf.mxu0
        %2685 = vmatprep.mubr.f32.mxu0 0.0
        %2686 = vmatmul.mubr.f32.gmra.mxu0 %v2551
        %v2687 = vpop.f32.mrf.mxu0
        %v2688 = vadd.f32 %v2492, %v2687
        %v2689 = vpop.f32.mrf.mxu0
        %2690 = vmatprep.mubr.f32.mxu0 0.0
        %2691 = vmatmul.mubr.f32.gmra.mxu0 %v2554
        %v2692 = vpop.f32.mrf.mxu0
        %v2693 = vadd.f32 %v2497, %v2692
        %v2694 = vpop.f32.mrf.mxu0
        %2695 = vmatprep.mubr.f32.mxu0 0.0
        %2696 = vmatmul.mubr.f32.gmra.mxu0 %v2557
        %v2697 = vpop.f32.mrf.mxu0
        %v2698 = vadd.f32 %v2502, %v2697
        %v2699 = vpop.f32.mrf.mxu0
        %2700 = vmatprep.mubr.f32.mxu0 0.0
        %2701 = vmatmul.mubr.f32.gmra.mxu0 %v2560
        %v2702 = vpop.f32.mrf.mxu0
        %v2703 = vadd.f32 %v2507, %v2702
        %v2704 = vpop.f32.mrf.mxu0
        %2705 = vmatprep.mubr.f32.mxu0 0.0
        %2706 = vmatmul.mubr.f32.gmra.mxu0 %v2563
        %v2707 = vpop.f32.mrf.mxu0
        %v2708 = vadd.f32 %v2512, %v2707
        %v2709 = vpop.f32.mrf.mxu0
        %2710 = vmatprep.mubr.f32.mxu0 0.0
        %2711 = vmatmul.mubr.f32.gmra.mxu0 %v2566
        %v2712 = vpop.f32.mrf.mxu0
        %v2713 = vadd.f32 %v2517, %v2712
        %v2714 = vpop.f32.mrf.mxu0
        %2715 = vdwg.mxu0
        %s2716 = scalar_lea.vmem [#allocation2], 48
        %v2717 = vld [vmem:[%s2716] sm:$0xff]
        %v2718 = vld [vmem:[%s2716 + $0x8] sm:$0xff]
        %v2719 = vld [vmem:[%s2716 + $0x18] sm:$0xff]
        %v2720 = vld [vmem:[%s2716 + $0x20] sm:$0xff]
        %v2721 = vld [vmem:[%s2716 + $0x30] sm:$0xff]
        %v2722 = vld [vmem:[%s2716 + $0x38] sm:$0xff]
        %v2723 = vld [vmem:[%s2716 + $0x48] sm:$0xff]
        %v2724 = vld [vmem:[%s2716 + $0x50] sm:$0xff]
        %v2725 = vld [vmem:[%s2716 + $0x60] sm:$0xff]
        %v2726 = vld [vmem:[%s2716 + $0x68] sm:$0xff]
        %v2727 = vld [vmem:[%s2716 + $0x78] sm:$0xff]
        %v2728 = vld [vmem:[%s2716 + $0x80] sm:$0xff]
        %v2729 = vld [vmem:[%s2716 + $0x90] sm:$0xff]
        %v2730 = vld [vmem:[%s2716 + $0x98] sm:$0xff]
        %v2731 = vld [vmem:[%s2716 + $0xa8] sm:$0xff]
        %v2732 = vld [vmem:[%s2716 + $0xb0] sm:$0xff]
        %s2733 = scalar_lea.vmem %s3, 40
        %v2734 = vld [vmem:[%s2733] sm:$0xf]
        %v2736 = vsel %vm399, %v2717, 0
        %v2739 = vsel %vm399, %v2718, 0
        %v2742 = vsel %vm399, %v2719, 0
        %v2745 = vsel %vm399, %v2720, 0
        %v2748 = vsel %vm399, %v2721, 0
        %v2751 = vsel %vm399, %v2722, 0
        %v2754 = vsel %vm399, %v2723, 0
        %v2757 = vsel %vm399, %v2724, 0
        %v2760 = vsel %vm399, %v2725, 0
        %v2763 = vsel %vm399, %v2726, 0
        %v2766 = vsel %vm399, %v2727, 0
        %v2769 = vsel %vm399, %v2728, 0
        %v2772 = vsel %vm399, %v2729, 0
        %v2775 = vsel %vm399, %v2730, 0
        %v2778 = vsel %vm399, %v2731, 0
        %v2781 = vsel %vm399, %v2732, 0
        %v2784 = vsel %vm523, %v2734, 0
        %2786 = vmatprep.subr.mxu0 0.0
        %2787 = vmatpush1.msra.mxu0 0.0
        %2788 = vmatprep.subr.mxu0 0.0
        %2789 = vmatpush1.msra.mxu0 0.0
        %2790 = vmatprep.subr.mxu0 0.0
        %2791 = vmatpush1.msra.mxu0 0.0
        %2792 = vmatprep.subr.mxu0 0.0
        %2793 = vmatpush1.msra.mxu0 0.0
        %2794 = vmatprep.subr.mxu0 0.0
        %2795 = vmatpush1.msra.mxu0 0.0
        %2796 = vmatprep.subr.mxu0 0.0
        %2797 = vmatpush1.msra.mxu0 0.0
        %2798 = vmatprep.subr.mxu0 0.0
        %2799 = vmatpush1.msra.mxu0 0.0
        %2800 = vmatprep.subr.mxu0 0.0
        %2801 = vmatpush1.msra.mxu0 0.0
        %2802 = vmatprep.subr.mxu0 0.0
        %2803 = vmatpush1.msra.mxu0 0.0
        %2804 = vmatprep.subr.mxu0 0.0
        %2805 = vmatpush1.msra.mxu0 0.0
        %2806 = vmatprep.subr.mxu0 0.0
        %2807 = vmatpush1.msra.mxu0 0.0
        %2808 = vmatprep.subr.mxu0 0.0
        %2809 = vmatpush1.msra.mxu0 0.0
        %2810 = vmatprep.subr.mxu0 0.0
        %2811 = vmatpush1.msra.mxu0 0.0
        %2812 = vmatprep.subr.mxu0 0.0
        %2813 = vmatpush1.msra.mxu0 0.0
        %2814 = vmatprep.subr.mxu0 0.0
        %2815 = vmatpush1.msra.mxu0 0.0
        %2816 = vmatprep.subr.mxu0 0.0
        %2817 = vmatpush1.msra.mxu0 %v2784
        %2818 = vmatprep.subr.mxu0 0.0
        %2819 = vmatpush2.msra.mxu0 0.0
        %2820 = vmatprep.subr.mxu0 0.0
        %2821 = vmatpush2.msra.mxu0 0.0
        %2822 = vmatprep.subr.mxu0 0.0
        %2823 = vmatpush2.msra.mxu0 0.0
        %2824 = vmatprep.subr.mxu0 0.0
        %2825 = vmatpush2.msra.mxu0 0.0
        %2826 = vmatprep.subr.mxu0 0.0
        %2827 = vmatpush2.msra.mxu0 0.0
        %2828 = vmatprep.subr.mxu0 0.0
        %2829 = vmatpush2.msra.mxu0 0.0
        %2830 = vmatprep.subr.mxu0 0.0
        %2831 = vmatpush2.msra.mxu0 0.0
        %2832 = vmatprep.subr.mxu0 0.0
        %2833 = vmatpush2.msra.mxu0 0.0
        %2834 = vmatprep.subr.mxu0 0.0
        %2835 = vmatpush2.msra.mxu0 0.0
        %2836 = vmatprep.subr.mxu0 0.0
        %2837 = vmatpush2.msra.mxu0 0.0
        %2838 = vmatprep.subr.mxu0 0.0
        %2839 = vmatpush2.msra.mxu0 0.0
        %2840 = vmatprep.subr.mxu0 0.0
        %2841 = vmatpush2.msra.mxu0 0.0
        %2842 = vmatprep.subr.mxu0 0.0
        %2843 = vmatpush2.msra.mxu0 0.0
        %2844 = vmatprep.subr.mxu0 0.0
        %2845 = vmatpush2.msra.mxu0 0.0
        %2846 = vmatprep.subr.mxu0 0.0
        %2847 = vmatpush2.msra.mxu0 0.0
        %2848 = vmatprep.subr.mxu0 0.0
        %2849 = vmatpush2.msra.mxu0 0.0
        %2850 = vmatprep.mubr.f32.mxu0 0.0
        %2851 = vmatmul.mubr.f32.gmra.mxu0 %v2736
        %v2852 = vpop.f32.mrf.mxu0
        %v2853 = vadd.f32 0.0, %v2852
        %v2854 = vpop.f32.mrf.mxu0
        %2855 = vmatprep.mubr.f32.mxu0 0.0
        %2856 = vmatmul.mubr.f32.gmra.mxu0 %v2739
        %v2857 = vpop.f32.mrf.mxu0
        %v2858 = vadd.f32 0.0, %v2857
        %v2859 = vpop.f32.mrf.mxu0
        %2860 = vmatprep.mubr.f32.mxu0 0.0
        %2861 = vmatmul.mubr.f32.gmra.mxu0 %v2742
        %v2862 = vpop.f32.mrf.mxu0
        %v2863 = vadd.f32 0.0, %v2862
        %v2864 = vpop.f32.mrf.mxu0
        %2865 = vmatprep.mubr.f32.mxu0 0.0
        %2866 = vmatmul.mubr.f32.gmra.mxu0 %v2745
        %v2867 = vpop.f32.mrf.mxu0
        %v2868 = vadd.f32 0.0, %v2867
        %v2869 = vpop.f32.mrf.mxu0
        %2870 = vmatprep.mubr.f32.mxu0 0.0
        %2871 = vmatmul.mubr.f32.gmra.mxu0 %v2748
        %v2872 = vpop.f32.mrf.mxu0
        %v2873 = vadd.f32 0.0, %v2872
        %v2874 = vpop.f32.mrf.mxu0
        %2875 = vmatprep.mubr.f32.mxu0 0.0
        %2876 = vmatmul.mubr.f32.gmra.mxu0 %v2751
        %v2877 = vpop.f32.mrf.mxu0
        %v2878 = vadd.f32 0.0, %v2877
        %v2879 = vpop.f32.mrf.mxu0
        %2880 = vmatprep.mubr.f32.mxu0 0.0
        %2881 = vmatmul.mubr.f32.gmra.mxu0 %v2754
        %v2882 = vpop.f32.mrf.mxu0
        %v2883 = vadd.f32 0.0, %v2882
        %v2884 = vpop.f32.mrf.mxu0
        %2885 = vmatprep.mubr.f32.mxu0 0.0
        %2886 = vmatmul.mubr.f32.gmra.mxu0 %v2757
        %v2887 = vpop.f32.mrf.mxu0
        %v2888 = vadd.f32 0.0, %v2887
        %v2889 = vpop.f32.mrf.mxu0
        %2890 = vmatprep.mubr.f32.mxu0 0.0
        %2891 = vmatmul.mubr.f32.gmra.mxu0 %v2760
        %v2892 = vpop.f32.mrf.mxu0
        %v2893 = vadd.f32 0.0, %v2892
        %v2894 = vpop.f32.mrf.mxu0
        %2895 = vmatprep.mubr.f32.mxu0 0.0
        %2896 = vmatmul.mubr.f32.gmra.mxu0 %v2763
        %v2897 = vpop.f32.mrf.mxu0
        %v2898 = vadd.f32 0.0, %v2897
        %v2899 = vpop.f32.mrf.mxu0
        %2900 = vmatprep.mubr.f32.mxu0 0.0
        %2901 = vmatmul.mubr.f32.gmra.mxu0 %v2766
        %v2902 = vpop.f32.mrf.mxu0
        %v2903 = vadd.f32 0.0, %v2902
        %v2904 = vpop.f32.mrf.mxu0
        %2905 = vmatprep.mubr.f32.mxu0 0.0
        %2906 = vmatmul.mubr.f32.gmra.mxu0 %v2769
        %v2907 = vpop.f32.mrf.mxu0
        %v2908 = vadd.f32 0.0, %v2907
        %v2909 = vpop.f32.mrf.mxu0
        %2910 = vmatprep.mubr.f32.mxu0 0.0
        %2911 = vmatmul.mubr.f32.gmra.mxu0 %v2772
        %v2912 = vpop.f32.mrf.mxu0
        %v2913 = vadd.f32 0.0, %v2912
        %v2914 = vpop.f32.mrf.mxu0
        %2915 = vmatprep.mubr.f32.mxu0 0.0
        %2916 = vmatmul.mubr.f32.gmra.mxu0 %v2775
        %v2917 = vpop.f32.mrf.mxu0
        %v2918 = vadd.f32 0.0, %v2917
        %v2919 = vpop.f32.mrf.mxu0
        %2920 = vmatprep.mubr.f32.mxu0 0.0
        %2921 = vmatmul.mubr.f32.gmra.mxu0 %v2778
        %v2922 = vpop.f32.mrf.mxu0
        %v2923 = vadd.f32 0.0, %v2922
        %v2924 = vpop.f32.mrf.mxu0
        %2925 = vmatprep.mubr.f32.mxu0 0.0
        %2926 = vmatmul.mubr.f32.gmra.mxu0 %v2781
        %v2927 = vpop.f32.mrf.mxu0
        %v2928 = vadd.f32 0.0, %v2927
        %v2929 = vpop.f32.mrf.mxu0
        %2930 = vdwg.mxu0
        %v2931 = vadd.f32 %v2638, %v2853
        %v2932 = vadd.f32 %v2643, %v2858
        %v2933 = vadd.f32 %v2648, %v2863
        %v2934 = vadd.f32 %v2653, %v2868
        %v2935 = vadd.f32 %v2658, %v2873
        %v2936 = vadd.f32 %v2663, %v2878
        %v2937 = vadd.f32 %v2668, %v2883
        %v2938 = vadd.f32 %v2673, %v2888
        %v2939 = vadd.f32 %v2678, %v2893
        %v2940 = vadd.f32 %v2683, %v2898
        %v2941 = vadd.f32 %v2688, %v2903
        %v2942 = vadd.f32 %v2693, %v2908
        %v2943 = vadd.f32 %v2698, %v2913
        %v2944 = vadd.f32 %v2703, %v2918
        %v2945 = vadd.f32 %v2708, %v2923
        %v2946 = vadd.f32 %v2713, %v2928
        %v2947 = vld [vmem:[%s2716 + $0x1] sm:$0xff]
        %v2948 = vld [vmem:[%s2716 + $0x9] sm:$0xff]
        %v2949 = vld [vmem:[%s2716 + $0x19] sm:$0xff]
        %v2950 = vld [vmem:[%s2716 + $0x21] sm:$0xff]
        %v2951 = vld [vmem:[%s2716 + $0x31] sm:$0xff]
        %v2952 = vld [vmem:[%s2716 + $0x39] sm:$0xff]
        %v2953 = vld [vmem:[%s2716 + $0x49] sm:$0xff]
        %v2954 = vld [vmem:[%s2716 + $0x51] sm:$0xff]
        %v2955 = vld [vmem:[%s2716 + $0x61] sm:$0xff]
        %v2956 = vld [vmem:[%s2716 + $0x69] sm:$0xff]
        %v2957 = vld [vmem:[%s2716 + $0x79] sm:$0xff]
        %v2958 = vld [vmem:[%s2716 + $0x81] sm:$0xff]
        %v2959 = vld [vmem:[%s2716 + $0x91] sm:$0xff]
        %v2960 = vld [vmem:[%s2716 + $0x99] sm:$0xff]
        %v2961 = vld [vmem:[%s2716 + $0xa9] sm:$0xff]
        %v2962 = vld [vmem:[%s2716 + $0xb1] sm:$0xff]
        %s2963 = scalar_lea.vmem %s3, 44
        %v2964 = vld [vmem:[%s2963] sm:$0xf]
        %v2966 = vsel %vm399, %v2947, 0
        %v2969 = vsel %vm399, %v2948, 0
        %v2972 = vsel %vm399, %v2949, 0
        %v2975 = vsel %vm399, %v2950, 0
        %v2978 = vsel %vm399, %v2951, 0
        %v2981 = vsel %vm399, %v2952, 0
        %v2984 = vsel %vm399, %v2953, 0
        %v2987 = vsel %vm399, %v2954, 0
        %v2990 = vsel %vm399, %v2955, 0
        %v2993 = vsel %vm399, %v2956, 0
        %v2996 = vsel %vm399, %v2957, 0
        %v2999 = vsel %vm399, %v2958, 0
        %v3002 = vsel %vm399, %v2959, 0
        %v3005 = vsel %vm399, %v2960, 0
        %v3008 = vsel %vm399, %v2961, 0
        %v3011 = vsel %vm399, %v2962, 0
        %v3014 = vsel %vm523, %v2964, 0
        %3016 = vmatprep.subr.mxu0 0.0
        %3017 = vmatpush1.msra.mxu0 0.0
        %3018 = vmatprep.subr.mxu0 0.0
        %3019 = vmatpush1.msra.mxu0 0.0
        %3020 = vmatprep.subr.mxu0 0.0
        %3021 = vmatpush1.msra.mxu0 0.0
        %3022 = vmatprep.subr.mxu0 0.0
        %3023 = vmatpush1.msra.mxu0 0.0
        %3024 = vmatprep.subr.mxu0 0.0
        %3025 = vmatpush1.msra.mxu0 0.0
        %3026 = vmatprep.subr.mxu0 0.0
        %3027 = vmatpush1.msra.mxu0 0.0
        %3028 = vmatprep.subr.mxu0 0.0
        %3029 = vmatpush1.msra.mxu0 0.0
        %3030 = vmatprep.subr.mxu0 0.0
        %3031 = vmatpush1.msra.mxu0 0.0
        %3032 = vmatprep.subr.mxu0 0.0
        %3033 = vmatpush1.msra.mxu0 0.0
        %3034 = vmatprep.subr.mxu0 0.0
        %3035 = vmatpush1.msra.mxu0 0.0
        %3036 = vmatprep.subr.mxu0 0.0
        %3037 = vmatpush1.msra.mxu0 0.0
        %3038 = vmatprep.subr.mxu0 0.0
        %3039 = vmatpush1.msra.mxu0 0.0
        %3040 = vmatprep.subr.mxu0 0.0
        %3041 = vmatpush1.msra.mxu0 0.0
        %3042 = vmatprep.subr.mxu0 0.0
        %3043 = vmatpush1.msra.mxu0 0.0
        %3044 = vmatprep.subr.mxu0 0.0
        %3045 = vmatpush1.msra.mxu0 0.0
        %3046 = vmatprep.subr.mxu0 0.0
        %3047 = vmatpush1.msra.mxu0 %v3014
        %3048 = vmatprep.subr.mxu0 0.0
        %3049 = vmatpush2.msra.mxu0 0.0
        %3050 = vmatprep.subr.mxu0 0.0
        %3051 = vmatpush2.msra.mxu0 0.0
        %3052 = vmatprep.subr.mxu0 0.0
        %3053 = vmatpush2.msra.mxu0 0.0
        %3054 = vmatprep.subr.mxu0 0.0
        %3055 = vmatpush2.msra.mxu0 0.0
        %3056 = vmatprep.subr.mxu0 0.0
        %3057 = vmatpush2.msra.mxu0 0.0
        %3058 = vmatprep.subr.mxu0 0.0
        %3059 = vmatpush2.msra.mxu0 0.0
        %3060 = vmatprep.subr.mxu0 0.0
        %3061 = vmatpush2.msra.mxu0 0.0
        %3062 = vmatprep.subr.mxu0 0.0
        %3063 = vmatpush2.msra.mxu0 0.0
        %3064 = vmatprep.subr.mxu0 0.0
        %3065 = vmatpush2.msra.mxu0 0.0
        %3066 = vmatprep.subr.mxu0 0.0
        %3067 = vmatpush2.msra.mxu0 0.0
        %3068 = vmatprep.subr.mxu0 0.0
        %3069 = vmatpush2.msra.mxu0 0.0
        %3070 = vmatprep.subr.mxu0 0.0
        %3071 = vmatpush2.msra.mxu0 0.0
        %3072 = vmatprep.subr.mxu0 0.0
        %3073 = vmatpush2.msra.mxu0 0.0
        %3074 = vmatprep.subr.mxu0 0.0
        %3075 = vmatpush2.msra.mxu0 0.0
        %3076 = vmatprep.subr.mxu0 0.0
        %3077 = vmatpush2.msra.mxu0 0.0
        %3078 = vmatprep.subr.mxu0 0.0
        %3079 = vmatpush2.msra.mxu0 0.0
        %3080 = vmatprep.mubr.f32.mxu0 0.0
        %3081 = vmatmul.mubr.f32.gmra.mxu0 %v2966
        %v3082 = vpop.f32.mrf.mxu0
        %v3083 = vadd.f32 0.0, %v3082
        %v3084 = vpop.f32.mrf.mxu0
        %3085 = vmatprep.mubr.f32.mxu0 0.0
        %3086 = vmatmul.mubr.f32.gmra.mxu0 %v2969
        %v3087 = vpop.f32.mrf.mxu0
        %v3088 = vadd.f32 0.0, %v3087
        %v3089 = vpop.f32.mrf.mxu0
        %3090 = vmatprep.mubr.f32.mxu0 0.0
        %3091 = vmatmul.mubr.f32.gmra.mxu0 %v2972
        %v3092 = vpop.f32.mrf.mxu0
        %v3093 = vadd.f32 0.0, %v3092
        %v3094 = vpop.f32.mrf.mxu0
        %3095 = vmatprep.mubr.f32.mxu0 0.0
        %3096 = vmatmul.mubr.f32.gmra.mxu0 %v2975
        %v3097 = vpop.f32.mrf.mxu0
        %v3098 = vadd.f32 0.0, %v3097
        %v3099 = vpop.f32.mrf.mxu0
        %3100 = vmatprep.mubr.f32.mxu0 0.0
        %3101 = vmatmul.mubr.f32.gmra.mxu0 %v2978
        %v3102 = vpop.f32.mrf.mxu0
        %v3103 = vadd.f32 0.0, %v3102
        %v3104 = vpop.f32.mrf.mxu0
        %3105 = vmatprep.mubr.f32.mxu0 0.0
        %3106 = vmatmul.mubr.f32.gmra.mxu0 %v2981
        %v3107 = vpop.f32.mrf.mxu0
        %v3108 = vadd.f32 0.0, %v3107
        %v3109 = vpop.f32.mrf.mxu0
        %3110 = vmatprep.mubr.f32.mxu0 0.0
        %3111 = vmatmul.mubr.f32.gmra.mxu0 %v2984
        %v3112 = vpop.f32.mrf.mxu0
        %v3113 = vadd.f32 0.0, %v3112
        %v3114 = vpop.f32.mrf.mxu0
        %3115 = vmatprep.mubr.f32.mxu0 0.0
        %3116 = vmatmul.mubr.f32.gmra.mxu0 %v2987
        %v3117 = vpop.f32.mrf.mxu0
        %v3118 = vadd.f32 0.0, %v3117
        %v3119 = vpop.f32.mrf.mxu0
        %3120 = vmatprep.mubr.f32.mxu0 0.0
        %3121 = vmatmul.mubr.f32.gmra.mxu0 %v2990
        %v3122 = vpop.f32.mrf.mxu0
        %v3123 = vadd.f32 0.0, %v3122
        %v3124 = vpop.f32.mrf.mxu0
        %3125 = vmatprep.mubr.f32.mxu0 0.0
        %3126 = vmatmul.mubr.f32.gmra.mxu0 %v2993
        %v3127 = vpop.f32.mrf.mxu0
        %v3128 = vadd.f32 0.0, %v3127
        %v3129 = vpop.f32.mrf.mxu0
        %3130 = vmatprep.mubr.f32.mxu0 0.0
        %3131 = vmatmul.mubr.f32.gmra.mxu0 %v2996
        %v3132 = vpop.f32.mrf.mxu0
        %v3133 = vadd.f32 0.0, %v3132
        %v3134 = vpop.f32.mrf.mxu0
        %3135 = vmatprep.mubr.f32.mxu0 0.0
        %3136 = vmatmul.mubr.f32.gmra.mxu0 %v2999
        %v3137 = vpop.f32.mrf.mxu0
        %v3138 = vadd.f32 0.0, %v3137
        %v3139 = vpop.f32.mrf.mxu0
        %3140 = vmatprep.mubr.f32.mxu0 0.0
        %3141 = vmatmul.mubr.f32.gmra.mxu0 %v3002
        %v3142 = vpop.f32.mrf.mxu0
        %v3143 = vadd.f32 0.0, %v3142
        %v3144 = vpop.f32.mrf.mxu0
        %3145 = vmatprep.mubr.f32.mxu0 0.0
        %3146 = vmatmul.mubr.f32.gmra.mxu0 %v3005
        %v3147 = vpop.f32.mrf.mxu0
        %v3148 = vadd.f32 0.0, %v3147
        %v3149 = vpop.f32.mrf.mxu0
        %3150 = vmatprep.mubr.f32.mxu0 0.0
        %3151 = vmatmul.mubr.f32.gmra.mxu0 %v3008
        %v3152 = vpop.f32.mrf.mxu0
        %v3153 = vadd.f32 0.0, %v3152
        %v3154 = vpop.f32.mrf.mxu0
        %3155 = vmatprep.mubr.f32.mxu0 0.0
        %3156 = vmatmul.mubr.f32.gmra.mxu0 %v3011
        %v3157 = vpop.f32.mrf.mxu0
        %v3158 = vadd.f32 0.0, %v3157
        %v3159 = vpop.f32.mrf.mxu0
        %3160 = vdwg.mxu0
        %v3161 = vadd.f32 %v2931, %v3083
        %v3162 = vadd.f32 %v2932, %v3088
        %v3163 = vadd.f32 %v2933, %v3093
        %v3164 = vadd.f32 %v2934, %v3098
        %v3165 = vadd.f32 %v2935, %v3103
        %v3166 = vadd.f32 %v2936, %v3108
        %v3167 = vadd.f32 %v2937, %v3113
        %v3168 = vadd.f32 %v2938, %v3118
        %v3169 = vadd.f32 %v2939, %v3123
        %v3170 = vadd.f32 %v2940, %v3128
        %v3171 = vadd.f32 %v2941, %v3133
        %v3172 = vadd.f32 %v2942, %v3138
        %v3173 = vadd.f32 %v2943, %v3143
        %v3174 = vadd.f32 %v2944, %v3148
        %v3175 = vadd.f32 %v2945, %v3153
        %v3176 = vadd.f32 %v2946, %v3158
        %v3177 = vadd.f32 %v3161, %v1333
        %v3178 = vadd.f32 %v3162, %v1333
        %v3179 = vadd.f32 %v3163, %v1333
        %v3180 = vadd.f32 %v3164, %v1333
        %v3181 = vadd.f32 %v3165, %v1333
        %v3182 = vadd.f32 %v3166, %v1333
        %v3183 = vadd.f32 %v3167, %v1333
        %v3184 = vadd.f32 %v3168, %v1333
        %v3185 = vadd.f32 %v3169, %v1333
        %v3186 = vadd.f32 %v3170, %v1333
        %v3187 = vadd.f32 %v3171, %v1333
        %v3188 = vadd.f32 %v3172, %v1333
        %v3189 = vadd.f32 %v3173, %v1333
        %v3190 = vadd.f32 %v3174, %v1333
        %v3191 = vadd.f32 %v3175, %v1333
        %v3192 = vadd.f32 %v3176, %v1333
        %s3193 = scalar_lea.vmem %s325, 256 [#allocation3]
        %3194 = vst.msk [vmem:[%s3193] sm:$0xff] %vm399, %v3177
        %3195 = vst.msk [vmem:[%s3193 + $0x8] sm:$0xff] %vm399, %v3178
        %3196 = vst.msk [vmem:[%s3193 + $0x10] sm:$0xff] %vm399, %v3179
        %3197 = vst.msk [vmem:[%s3193 + $0x18] sm:$0xff] %vm399, %v3180
        %3198 = vst.msk [vmem:[%s3193 + $0x20] sm:$0xff] %vm399, %v3181
        %3199 = vst.msk [vmem:[%s3193 + $0x28] sm:$0xff] %vm399, %v3182
        %3200 = vst.msk [vmem:[%s3193 + $0x30] sm:$0xff] %vm399, %v3183
        %3201 = vst.msk [vmem:[%s3193 + $0x38] sm:$0xff] %vm399, %v3184
        %3202 = vst.msk [vmem:[%s3193 + $0x40] sm:$0xff] %vm399, %v3185
        %3203 = vst.msk [vmem:[%s3193 + $0x48] sm:$0xff] %vm399, %v3186
        %3204 = vst.msk [vmem:[%s3193 + $0x50] sm:$0xff] %vm399, %v3187
        %3205 = vst.msk [vmem:[%s3193 + $0x58] sm:$0xff] %vm399, %v3188
        %3206 = vst.msk [vmem:[%s3193 + $0x60] sm:$0xff] %vm399, %v3189
        %3207 = vst.msk [vmem:[%s3193 + $0x68] sm:$0xff] %vm399, %v3190
        %3208 = vst.msk [vmem:[%s3193 + $0x70] sm:$0xff] %vm399, %v3191
        %3209 = vst.msk [vmem:[%s3193 + $0x78] sm:$0xff] %vm399, %v3192
        %v3210 = vld [vmem:[%s868 + $0x1] sm:$0xff]
        %v3211 = vld [vmem:[%s868 + $0x9] sm:$0xff]
        %v3212 = vld [vmem:[%s868 + $0x19] sm:$0xff]
        %v3213 = vld [vmem:[%s868 + $0x21] sm:$0xff]
        %v3214 = vld [vmem:[%s868 + $0x31] sm:$0xff]
        %v3215 = vld [vmem:[%s868 + $0x39] sm:$0xff]
        %v3216 = vld [vmem:[%s868 + $0x49] sm:$0xff]
        %v3217 = vld [vmem:[%s868 + $0x51] sm:$0xff]
        %v3218 = vld [vmem:[%s868 + $0x61] sm:$0xff]
        %v3219 = vld [vmem:[%s868 + $0x69] sm:$0xff]
        %v3220 = vld [vmem:[%s868 + $0x79] sm:$0xff]
        %v3221 = vld [vmem:[%s868 + $0x81] sm:$0xff]
        %v3222 = vld [vmem:[%s868 + $0x91] sm:$0xff]
        %v3223 = vld [vmem:[%s868 + $0x99] sm:$0xff]
        %v3224 = vld [vmem:[%s868 + $0xa9] sm:$0xff]
        %v3225 = vld [vmem:[%s868 + $0xb1] sm:$0xff]
        %s3226 = scalar_lea.vmem %s3, 48
        %v3227 = vld [vmem:[%s3226] sm:$0xf]
        %v3228 = vld [vmem:[%s868 + $0x2] sm:$0xff]
        %v3229 = vld [vmem:[%s868 + $0xa] sm:$0xff]
        %v3230 = vld [vmem:[%s868 + $0x1a] sm:$0xff]
        %v3231 = vld [vmem:[%s868 + $0x22] sm:$0xff]
        %v3232 = vld [vmem:[%s868 + $0x32] sm:$0xff]
        %v3233 = vld [vmem:[%s868 + $0x3a] sm:$0xff]
        %v3234 = vld [vmem:[%s868 + $0x4a] sm:$0xff]
        %v3235 = vld [vmem:[%s868 + $0x52] sm:$0xff]
        %v3236 = vld [vmem:[%s868 + $0x62] sm:$0xff]
        %v3237 = vld [vmem:[%s868 + $0x6a] sm:$0xff]
        %v3238 = vld [vmem:[%s868 + $0x7a] sm:$0xff]
        %v3239 = vld [vmem:[%s868 + $0x82] sm:$0xff]
        %v3240 = vld [vmem:[%s868 + $0x92] sm:$0xff]
        %v3241 = vld [vmem:[%s868 + $0x9a] sm:$0xff]
        %v3242 = vld [vmem:[%s868 + $0xaa] sm:$0xff]
        %v3243 = vld [vmem:[%s868 + $0xb2] sm:$0xff]
        %s3244 = scalar_lea.vmem %s3, 52
        %v3245 = vld [vmem:[%s3244] sm:$0xf]
        %v3247 = vsel %vm399, %v3228, 0
        %v3250 = vsel %vm399, %v3229, 0
        %v3253 = vsel %vm399, %v3230, 0
        %v3256 = vsel %vm399, %v3231, 0
        %v3259 = vsel %vm399, %v3232, 0
        %v3262 = vsel %vm399, %v3233, 0
        %v3265 = vsel %vm399, %v3234, 0
        %v3268 = vsel %vm399, %v3235, 0
        %v3271 = vsel %vm399, %v3236, 0
        %v3274 = vsel %vm399, %v3237, 0
        %v3277 = vsel %vm399, %v3238, 0
        %v3280 = vsel %vm399, %v3239, 0
        %v3283 = vsel %vm399, %v3240, 0
        %v3286 = vsel %vm399, %v3241, 0
        %v3289 = vsel %vm399, %v3242, 0
        %v3292 = vsel %vm399, %v3243, 0
        %v3295 = vsel %vm523, %v3245, 0
        %3297 = vmatprep.subr.mxu0 0.0
        %3298 = vmatpush1.msra.mxu0 0.0
        %3299 = vmatprep.subr.mxu0 0.0
        %3300 = vmatpush1.msra.mxu0 0.0
        %3301 = vmatprep.subr.mxu0 0.0
        %3302 = vmatpush1.msra.mxu0 0.0
        %3303 = vmatprep.subr.mxu0 0.0
        %3304 = vmatpush1.msra.mxu0 0.0
        %3305 = vmatprep.subr.mxu0 0.0
        %3306 = vmatpush1.msra.mxu0 0.0
        %3307 = vmatprep.subr.mxu0 0.0
        %3308 = vmatpush1.msra.mxu0 0.0
        %3309 = vmatprep.subr.mxu0 0.0
        %3310 = vmatpush1.msra.mxu0 0.0
        %3311 = vmatprep.subr.mxu0 0.0
        %3312 = vmatpush1.msra.mxu0 0.0
        %3313 = vmatprep.subr.mxu0 0.0
        %3314 = vmatpush1.msra.mxu0 0.0
        %3315 = vmatprep.subr.mxu0 0.0
        %3316 = vmatpush1.msra.mxu0 0.0
        %3317 = vmatprep.subr.mxu0 0.0
        %3318 = vmatpush1.msra.mxu0 0.0
        %3319 = vmatprep.subr.mxu0 0.0
        %3320 = vmatpush1.msra.mxu0 0.0
        %3321 = vmatprep.subr.mxu0 0.0
        %3322 = vmatpush1.msra.mxu0 0.0
        %3323 = vmatprep.subr.mxu0 0.0
        %3324 = vmatpush1.msra.mxu0 0.0
        %3325 = vmatprep.subr.mxu0 0.0
        %3326 = vmatpush1.msra.mxu0 0.0
        %3327 = vmatprep.subr.mxu0 0.0
        %3328 = vmatpush1.msra.mxu0 %v3295
        %3329 = vmatprep.subr.mxu0 0.0
        %3330 = vmatpush2.msra.mxu0 0.0
        %3331 = vmatprep.subr.mxu0 0.0
        %3332 = vmatpush2.msra.mxu0 0.0
        %3333 = vmatprep.subr.mxu0 0.0
        %3334 = vmatpush2.msra.mxu0 0.0
        %3335 = vmatprep.subr.mxu0 0.0
        %3336 = vmatpush2.msra.mxu0 0.0
        %3337 = vmatprep.subr.mxu0 0.0
        %3338 = vmatpush2.msra.mxu0 0.0
        %3339 = vmatprep.subr.mxu0 0.0
        %3340 = vmatpush2.msra.mxu0 0.0
        %3341 = vmatprep.subr.mxu0 0.0
        %3342 = vmatpush2.msra.mxu0 0.0
        %3343 = vmatprep.subr.mxu0 0.0
        %3344 = vmatpush2.msra.mxu0 0.0
        %3345 = vmatprep.subr.mxu0 0.0
        %3346 = vmatpush2.msra.mxu0 0.0
        %3347 = vmatprep.subr.mxu0 0.0
        %3348 = vmatpush2.msra.mxu0 0.0
        %3349 = vmatprep.subr.mxu0 0.0
        %3350 = vmatpush2.msra.mxu0 0.0
        %3351 = vmatprep.subr.mxu0 0.0
        %3352 = vmatpush2.msra.mxu0 0.0
        %3353 = vmatprep.subr.mxu0 0.0
        %3354 = vmatpush2.msra.mxu0 0.0
        %3355 = vmatprep.subr.mxu0 0.0
        %3356 = vmatpush2.msra.mxu0 0.0
        %3357 = vmatprep.subr.mxu0 0.0
        %3358 = vmatpush2.msra.mxu0 0.0
        %3359 = vmatprep.subr.mxu0 0.0
        %3360 = vmatpush2.msra.mxu0 0.0
        %3361 = vmatprep.mubr.f32.mxu0 0.0
        %3362 = vmatmul.mubr.f32.gmra.mxu0 %v3247
        %v3363 = vpop.f32.mrf.mxu0
        %v3364 = vadd.f32 0.0, %v3363
        %v3365 = vpop.f32.mrf.mxu0
        %3366 = vmatprep.mubr.f32.mxu0 0.0
        %3367 = vmatmul.mubr.f32.gmra.mxu0 %v3250
        %v3368 = vpop.f32.mrf.mxu0
        %v3369 = vadd.f32 0.0, %v3368
        %v3370 = vpop.f32.mrf.mxu0
        %3371 = vmatprep.mubr.f32.mxu0 0.0
        %3372 = vmatmul.mubr.f32.gmra.mxu0 %v3253
        %v3373 = vpop.f32.mrf.mxu0
        %v3374 = vadd.f32 0.0, %v3373
        %v3375 = vpop.f32.mrf.mxu0
        %3376 = vmatprep.mubr.f32.mxu0 0.0
        %3377 = vmatmul.mubr.f32.gmra.mxu0 %v3256
        %v3378 = vpop.f32.mrf.mxu0
        %v3379 = vadd.f32 0.0, %v3378
        %v3380 = vpop.f32.mrf.mxu0
        %3381 = vmatprep.mubr.f32.mxu0 0.0
        %3382 = vmatmul.mubr.f32.gmra.mxu0 %v3259
        %v3383 = vpop.f32.mrf.mxu0
        %v3384 = vadd.f32 0.0, %v3383
        %v3385 = vpop.f32.mrf.mxu0
        %3386 = vmatprep.mubr.f32.mxu0 0.0
        %3387 = vmatmul.mubr.f32.gmra.mxu0 %v3262
        %v3388 = vpop.f32.mrf.mxu0
        %v3389 = vadd.f32 0.0, %v3388
        %v3390 = vpop.f32.mrf.mxu0
        %3391 = vmatprep.mubr.f32.mxu0 0.0
        %3392 = vmatmul.mubr.f32.gmra.mxu0 %v3265
        %v3393 = vpop.f32.mrf.mxu0
        %v3394 = vadd.f32 0.0, %v3393
        %v3395 = vpop.f32.mrf.mxu0
        %3396 = vmatprep.mubr.f32.mxu0 0.0
        %3397 = vmatmul.mubr.f32.gmra.mxu0 %v3268
        %v3398 = vpop.f32.mrf.mxu0
        %v3399 = vadd.f32 0.0, %v3398
        %v3400 = vpop.f32.mrf.mxu0
        %3401 = vmatprep.mubr.f32.mxu0 0.0
        %3402 = vmatmul.mubr.f32.gmra.mxu0 %v3271
        %v3403 = vpop.f32.mrf.mxu0
        %v3404 = vadd.f32 0.0, %v3403
        %v3405 = vpop.f32.mrf.mxu0
        %3406 = vmatprep.mubr.f32.mxu0 0.0
        %3407 = vmatmul.mubr.f32.gmra.mxu0 %v3274
        %v3408 = vpop.f32.mrf.mxu0
        %v3409 = vadd.f32 0.0, %v3408
        %v3410 = vpop.f32.mrf.mxu0
        %3411 = vmatprep.mubr.f32.mxu0 0.0
        %3412 = vmatmul.mubr.f32.gmra.mxu0 %v3277
        %v3413 = vpop.f32.mrf.mxu0
        %v3414 = vadd.f32 0.0, %v3413
        %v3415 = vpop.f32.mrf.mxu0
        %3416 = vmatprep.mubr.f32.mxu0 0.0
        %3417 = vmatmul.mubr.f32.gmra.mxu0 %v3280
        %v3418 = vpop.f32.mrf.mxu0
        %v3419 = vadd.f32 0.0, %v3418
        %v3420 = vpop.f32.mrf.mxu0
        %3421 = vmatprep.mubr.f32.mxu0 0.0
        %3422 = vmatmul.mubr.f32.gmra.mxu0 %v3283
        %v3423 = vpop.f32.mrf.mxu0
        %v3424 = vadd.f32 0.0, %v3423
        %v3425 = vpop.f32.mrf.mxu0
        %3426 = vmatprep.mubr.f32.mxu0 0.0
        %3427 = vmatmul.mubr.f32.gmra.mxu0 %v3286
        %v3428 = vpop.f32.mrf.mxu0
        %v3429 = vadd.f32 0.0, %v3428
        %v3430 = vpop.f32.mrf.mxu0
        %3431 = vmatprep.mubr.f32.mxu0 0.0
        %3432 = vmatmul.mubr.f32.gmra.mxu0 %v3289
        %v3433 = vpop.f32.mrf.mxu0
        %v3434 = vadd.f32 0.0, %v3433
        %v3435 = vpop.f32.mrf.mxu0
        %3436 = vmatprep.mubr.f32.mxu0 0.0
        %3437 = vmatmul.mubr.f32.gmra.mxu0 %v3292
        %v3438 = vpop.f32.mrf.mxu0
        %v3439 = vadd.f32 0.0, %v3438
        %v3440 = vpop.f32.mrf.mxu0
        %3441 = vdwg.mxu0
        %v3443 = vsel %vm399, %v3210, 0
        %v3446 = vsel %vm399, %v3211, 0
        %v3449 = vsel %vm399, %v3212, 0
        %v3452 = vsel %vm399, %v3213, 0
        %v3455 = vsel %vm399, %v3214, 0
        %v3458 = vsel %vm399, %v3215, 0
        %v3461 = vsel %vm399, %v3216, 0
        %v3464 = vsel %vm399, %v3217, 0
        %v3467 = vsel %vm399, %v3218, 0
        %v3470 = vsel %vm399, %v3219, 0
        %v3473 = vsel %vm399, %v3220, 0
        %v3476 = vsel %vm399, %v3221, 0
        %v3479 = vsel %vm399, %v3222, 0
        %v3482 = vsel %vm399, %v3223, 0
        %v3485 = vsel %vm399, %v3224, 0
        %v3488 = vsel %vm399, %v3225, 0
        %v3491 = vsel %vm523, %v3227, 0
        %3493 = vmatprep.subr.mxu0 0.0
        %3494 = vmatpush1.msra.mxu0 0.0
        %3495 = vmatprep.subr.mxu0 0.0
        %3496 = vmatpush1.msra.mxu0 0.0
        %3497 = vmatprep.subr.mxu0 0.0
        %3498 = vmatpush1.msra.mxu0 0.0
        %3499 = vmatprep.subr.mxu0 0.0
        %3500 = vmatpush1.msra.mxu0 0.0
        %3501 = vmatprep.subr.mxu0 0.0
        %3502 = vmatpush1.msra.mxu0 0.0
        %3503 = vmatprep.subr.mxu0 0.0
        %3504 = vmatpush1.msra.mxu0 0.0
        %3505 = vmatprep.subr.mxu0 0.0
        %3506 = vmatpush1.msra.mxu0 0.0
        %3507 = vmatprep.subr.mxu0 0.0
        %3508 = vmatpush1.msra.mxu0 0.0
        %3509 = vmatprep.subr.mxu0 0.0
        %3510 = vmatpush1.msra.mxu0 0.0
        %3511 = vmatprep.subr.mxu0 0.0
        %3512 = vmatpush1.msra.mxu0 0.0
        %3513 = vmatprep.subr.mxu0 0.0
        %3514 = vmatpush1.msra.mxu0 0.0
        %3515 = vmatprep.subr.mxu0 0.0
        %3516 = vmatpush1.msra.mxu0 0.0
        %3517 = vmatprep.subr.mxu0 0.0
        %3518 = vmatpush1.msra.mxu0 0.0
        %3519 = vmatprep.subr.mxu0 0.0
        %3520 = vmatpush1.msra.mxu0 0.0
        %3521 = vmatprep.subr.mxu0 0.0
        %3522 = vmatpush1.msra.mxu0 0.0
        %3523 = vmatprep.subr.mxu0 0.0
        %3524 = vmatpush1.msra.mxu0 %v3491
        %3525 = vmatprep.subr.mxu0 0.0
        %3526 = vmatpush2.msra.mxu0 0.0
        %3527 = vmatprep.subr.mxu0 0.0
        %3528 = vmatpush2.msra.mxu0 0.0
        %3529 = vmatprep.subr.mxu0 0.0
        %3530 = vmatpush2.msra.mxu0 0.0
        %3531 = vmatprep.subr.mxu0 0.0
        %3532 = vmatpush2.msra.mxu0 0.0
        %3533 = vmatprep.subr.mxu0 0.0
        %3534 = vmatpush2.msra.mxu0 0.0
        %3535 = vmatprep.subr.mxu0 0.0
        %3536 = vmatpush2.msra.mxu0 0.0
        %3537 = vmatprep.subr.mxu0 0.0
        %3538 = vmatpush2.msra.mxu0 0.0
        %3539 = vmatprep.subr.mxu0 0.0
        %3540 = vmatpush2.msra.mxu0 0.0
        %3541 = vmatprep.subr.mxu0 0.0
        %3542 = vmatpush2.msra.mxu0 0.0
        %3543 = vmatprep.subr.mxu0 0.0
        %3544 = vmatpush2.msra.mxu0 0.0
        %3545 = vmatprep.subr.mxu0 0.0
        %3546 = vmatpush2.msra.mxu0 0.0
        %3547 = vmatprep.subr.mxu0 0.0
        %3548 = vmatpush2.msra.mxu0 0.0
        %3549 = vmatprep.subr.mxu0 0.0
        %3550 = vmatpush2.msra.mxu0 0.0
        %3551 = vmatprep.subr.mxu0 0.0
        %3552 = vmatpush2.msra.mxu0 0.0
        %3553 = vmatprep.subr.mxu0 0.0
        %3554 = vmatpush2.msra.mxu0 0.0
        %3555 = vmatprep.subr.mxu0 0.0
        %3556 = vmatpush2.msra.mxu0 0.0
        %3557 = vmatprep.mubr.f32.mxu0 0.0
        %3558 = vmatmul.mubr.f32.gmra.mxu0 %v3443
        %v3559 = vpop.f32.mrf.mxu0
        %v3560 = vadd.f32 %v3364, %v3559
        %v3561 = vpop.f32.mrf.mxu0
        %3562 = vmatprep.mubr.f32.mxu0 0.0
        %3563 = vmatmul.mubr.f32.gmra.mxu0 %v3446
        %v3564 = vpop.f32.mrf.mxu0
        %v3565 = vadd.f32 %v3369, %v3564
        %v3566 = vpop.f32.mrf.mxu0
        %3567 = vmatprep.mubr.f32.mxu0 0.0
        %3568 = vmatmul.mubr.f32.gmra.mxu0 %v3449
        %v3569 = vpop.f32.mrf.mxu0
        %v3570 = vadd.f32 %v3374, %v3569
        %v3571 = vpop.f32.mrf.mxu0
        %3572 = vmatprep.mubr.f32.mxu0 0.0
        %3573 = vmatmul.mubr.f32.gmra.mxu0 %v3452
        %v3574 = vpop.f32.mrf.mxu0
        %v3575 = vadd.f32 %v3379, %v3574
        %v3576 = vpop.f32.mrf.mxu0
        %3577 = vmatprep.mubr.f32.mxu0 0.0
        %3578 = vmatmul.mubr.f32.gmra.mxu0 %v3455
        %v3579 = vpop.f32.mrf.mxu0
        %v3580 = vadd.f32 %v3384, %v3579
        %v3581 = vpop.f32.mrf.mxu0
        %3582 = vmatprep.mubr.f32.mxu0 0.0
        %3583 = vmatmul.mubr.f32.gmra.mxu0 %v3458
        %v3584 = vpop.f32.mrf.mxu0
        %v3585 = vadd.f32 %v3389, %v3584
        %v3586 = vpop.f32.mrf.mxu0
        %3587 = vmatprep.mubr.f32.mxu0 0.0
        %3588 = vmatmul.mubr.f32.gmra.mxu0 %v3461
        %v3589 = vpop.f32.mrf.mxu0
        %v3590 = vadd.f32 %v3394, %v3589
        %v3591 = vpop.f32.mrf.mxu0
        %3592 = vmatprep.mubr.f32.mxu0 0.0
        %3593 = vmatmul.mubr.f32.gmra.mxu0 %v3464
        %v3594 = vpop.f32.mrf.mxu0
        %v3595 = vadd.f32 %v3399, %v3594
        %v3596 = vpop.f32.mrf.mxu0
        %3597 = vmatprep.mubr.f32.mxu0 0.0
        %3598 = vmatmul.mubr.f32.gmra.mxu0 %v3467
        %v3599 = vpop.f32.mrf.mxu0
        %v3600 = vadd.f32 %v3404, %v3599
        %v3601 = vpop.f32.mrf.mxu0
        %3602 = vmatprep.mubr.f32.mxu0 0.0
        %3603 = vmatmul.mubr.f32.gmra.mxu0 %v3470
        %v3604 = vpop.f32.mrf.mxu0
        %v3605 = vadd.f32 %v3409, %v3604
        %v3606 = vpop.f32.mrf.mxu0
        %3607 = vmatprep.mubr.f32.mxu0 0.0
        %3608 = vmatmul.mubr.f32.gmra.mxu0 %v3473
        %v3609 = vpop.f32.mrf.mxu0
        %v3610 = vadd.f32 %v3414, %v3609
        %v3611 = vpop.f32.mrf.mxu0
        %3612 = vmatprep.mubr.f32.mxu0 0.0
        %3613 = vmatmul.mubr.f32.gmra.mxu0 %v3476
        %v3614 = vpop.f32.mrf.mxu0
        %v3615 = vadd.f32 %v3419, %v3614
        %v3616 = vpop.f32.mrf.mxu0
        %3617 = vmatprep.mubr.f32.mxu0 0.0
        %3618 = vmatmul.mubr.f32.gmra.mxu0 %v3479
        %v3619 = vpop.f32.mrf.mxu0
        %v3620 = vadd.f32 %v3424, %v3619
        %v3621 = vpop.f32.mrf.mxu0
        %3622 = vmatprep.mubr.f32.mxu0 0.0
        %3623 = vmatmul.mubr.f32.gmra.mxu0 %v3482
        %v3624 = vpop.f32.mrf.mxu0
        %v3625 = vadd.f32 %v3429, %v3624
        %v3626 = vpop.f32.mrf.mxu0
        %3627 = vmatprep.mubr.f32.mxu0 0.0
        %3628 = vmatmul.mubr.f32.gmra.mxu0 %v3485
        %v3629 = vpop.f32.mrf.mxu0
        %v3630 = vadd.f32 %v3434, %v3629
        %v3631 = vpop.f32.mrf.mxu0
        %3632 = vmatprep.mubr.f32.mxu0 0.0
        %3633 = vmatmul.mubr.f32.gmra.mxu0 %v3488
        %v3634 = vpop.f32.mrf.mxu0
        %v3635 = vadd.f32 %v3439, %v3634
        %v3636 = vpop.f32.mrf.mxu0
        %3637 = vdwg.mxu0
        %v3638 = vld [vmem:[%s2716 + $0x1] sm:$0xff]
        %v3639 = vld [vmem:[%s2716 + $0x9] sm:$0xff]
        %v3640 = vld [vmem:[%s2716 + $0x19] sm:$0xff]
        %v3641 = vld [vmem:[%s2716 + $0x21] sm:$0xff]
        %v3642 = vld [vmem:[%s2716 + $0x31] sm:$0xff]
        %v3643 = vld [vmem:[%s2716 + $0x39] sm:$0xff]
        %v3644 = vld [vmem:[%s2716 + $0x49] sm:$0xff]
        %v3645 = vld [vmem:[%s2716 + $0x51] sm:$0xff]
        %v3646 = vld [vmem:[%s2716 + $0x61] sm:$0xff]
        %v3647 = vld [vmem:[%s2716 + $0x69] sm:$0xff]
        %v3648 = vld [vmem:[%s2716 + $0x79] sm:$0xff]
        %v3649 = vld [vmem:[%s2716 + $0x81] sm:$0xff]
        %v3650 = vld [vmem:[%s2716 + $0x91] sm:$0xff]
        %v3651 = vld [vmem:[%s2716 + $0x99] sm:$0xff]
        %v3652 = vld [vmem:[%s2716 + $0xa9] sm:$0xff]
        %v3653 = vld [vmem:[%s2716 + $0xb1] sm:$0xff]
        %s3654 = scalar_lea.vmem %s3, 56
        %v3655 = vld [vmem:[%s3654] sm:$0xf]
        %v3657 = vsel %vm399, %v3638, 0
        %v3660 = vsel %vm399, %v3639, 0
        %v3663 = vsel %vm399, %v3640, 0
        %v3666 = vsel %vm399, %v3641, 0
        %v3669 = vsel %vm399, %v3642, 0
        %v3672 = vsel %vm399, %v3643, 0
        %v3675 = vsel %vm399, %v3644, 0
        %v3678 = vsel %vm399, %v3645, 0
        %v3681 = vsel %vm399, %v3646, 0
        %v3684 = vsel %vm399, %v3647, 0
        %v3687 = vsel %vm399, %v3648, 0
        %v3690 = vsel %vm399, %v3649, 0
        %v3693 = vsel %vm399, %v3650, 0
        %v3696 = vsel %vm399, %v3651, 0
        %v3699 = vsel %vm399, %v3652, 0
        %v3702 = vsel %vm399, %v3653, 0
        %v3705 = vsel %vm523, %v3655, 0
        %3707 = vmatprep.subr.mxu0 0.0
        %3708 = vmatpush1.msra.mxu0 0.0
        %3709 = vmatprep.subr.mxu0 0.0
        %3710 = vmatpush1.msra.mxu0 0.0
        %3711 = vmatprep.subr.mxu0 0.0
        %3712 = vmatpush1.msra.mxu0 0.0
        %3713 = vmatprep.subr.mxu0 0.0
        %3714 = vmatpush1.msra.mxu0 0.0
        %3715 = vmatprep.subr.mxu0 0.0
        %3716 = vmatpush1.msra.mxu0 0.0
        %3717 = vmatprep.subr.mxu0 0.0
        %3718 = vmatpush1.msra.mxu0 0.0
        %3719 = vmatprep.subr.mxu0 0.0
        %3720 = vmatpush1.msra.mxu0 0.0
        %3721 = vmatprep.subr.mxu0 0.0
        %3722 = vmatpush1.msra.mxu0 0.0
        %3723 = vmatprep.subr.mxu0 0.0
        %3724 = vmatpush1.msra.mxu0 0.0
        %3725 = vmatprep.subr.mxu0 0.0
        %3726 = vmatpush1.msra.mxu0 0.0
        %3727 = vmatprep.subr.mxu0 0.0
        %3728 = vmatpush1.msra.mxu0 0.0
        %3729 = vmatprep.subr.mxu0 0.0
        %3730 = vmatpush1.msra.mxu0 0.0
        %3731 = vmatprep.subr.mxu0 0.0
        %3732 = vmatpush1.msra.mxu0 0.0
        %3733 = vmatprep.subr.mxu0 0.0
        %3734 = vmatpush1.msra.mxu0 0.0
        %3735 = vmatprep.subr.mxu0 0.0
        %3736 = vmatpush1.msra.mxu0 0.0
        %3737 = vmatprep.subr.mxu0 0.0
        %3738 = vmatpush1.msra.mxu0 %v3705
        %3739 = vmatprep.subr.mxu0 0.0
        %3740 = vmatpush2.msra.mxu0 0.0
        %3741 = vmatprep.subr.mxu0 0.0
        %3742 = vmatpush2.msra.mxu0 0.0
        %3743 = vmatprep.subr.mxu0 0.0
        %3744 = vmatpush2.msra.mxu0 0.0
        %3745 = vmatprep.subr.mxu0 0.0
        %3746 = vmatpush2.msra.mxu0 0.0
        %3747 = vmatprep.subr.mxu0 0.0
        %3748 = vmatpush2.msra.mxu0 0.0
        %3749 = vmatprep.subr.mxu0 0.0
        %3750 = vmatpush2.msra.mxu0 0.0
        %3751 = vmatprep.subr.mxu0 0.0
        %3752 = vmatpush2.msra.mxu0 0.0
        %3753 = vmatprep.subr.mxu0 0.0
        %3754 = vmatpush2.msra.mxu0 0.0
        %3755 = vmatprep.subr.mxu0 0.0
        %3756 = vmatpush2.msra.mxu0 0.0
        %3757 = vmatprep.subr.mxu0 0.0
        %3758 = vmatpush2.msra.mxu0 0.0
        %3759 = vmatprep.subr.mxu0 0.0
        %3760 = vmatpush2.msra.mxu0 0.0
        %3761 = vmatprep.subr.mxu0 0.0
        %3762 = vmatpush2.msra.mxu0 0.0
        %3763 = vmatprep.subr.mxu0 0.0
        %3764 = vmatpush2.msra.mxu0 0.0
        %3765 = vmatprep.subr.mxu0 0.0
        %3766 = vmatpush2.msra.mxu0 0.0
        %3767 = vmatprep.subr.mxu0 0.0
        %3768 = vmatpush2.msra.mxu0 0.0
        %3769 = vmatprep.subr.mxu0 0.0
        %3770 = vmatpush2.msra.mxu0 0.0
        %3771 = vmatprep.mubr.f32.mxu0 0.0
        %3772 = vmatmul.mubr.f32.gmra.mxu0 %v3657
        %v3773 = vpop.f32.mrf.mxu0
        %v3774 = vadd.f32 0.0, %v3773
        %v3775 = vpop.f32.mrf.mxu0
        %3776 = vmatprep.mubr.f32.mxu0 0.0
        %3777 = vmatmul.mubr.f32.gmra.mxu0 %v3660
        %v3778 = vpop.f32.mrf.mxu0
        %v3779 = vadd.f32 0.0, %v3778
        %v3780 = vpop.f32.mrf.mxu0
        %3781 = vmatprep.mubr.f32.mxu0 0.0
        %3782 = vmatmul.mubr.f32.gmra.mxu0 %v3663
        %v3783 = vpop.f32.mrf.mxu0
        %v3784 = vadd.f32 0.0, %v3783
        %v3785 = vpop.f32.mrf.mxu0
        %3786 = vmatprep.mubr.f32.mxu0 0.0
        %3787 = vmatmul.mubr.f32.gmra.mxu0 %v3666
        %v3788 = vpop.f32.mrf.mxu0
        %v3789 = vadd.f32 0.0, %v3788
        %v3790 = vpop.f32.mrf.mxu0
        %3791 = vmatprep.mubr.f32.mxu0 0.0
        %3792 = vmatmul.mubr.f32.gmra.mxu0 %v3669
        %v3793 = vpop.f32.mrf.mxu0
        %v3794 = vadd.f32 0.0, %v3793
        %v3795 = vpop.f32.mrf.mxu0
        %3796 = vmatprep.mubr.f32.mxu0 0.0
        %3797 = vmatmul.mubr.f32.gmra.mxu0 %v3672
        %v3798 = vpop.f32.mrf.mxu0
        %v3799 = vadd.f32 0.0, %v3798
        %v3800 = vpop.f32.mrf.mxu0
        %3801 = vmatprep.mubr.f32.mxu0 0.0
        %3802 = vmatmul.mubr.f32.gmra.mxu0 %v3675
        %v3803 = vpop.f32.mrf.mxu0
        %v3804 = vadd.f32 0.0, %v3803
        %v3805 = vpop.f32.mrf.mxu0
        %3806 = vmatprep.mubr.f32.mxu0 0.0
        %3807 = vmatmul.mubr.f32.gmra.mxu0 %v3678
        %v3808 = vpop.f32.mrf.mxu0
        %v3809 = vadd.f32 0.0, %v3808
        %v3810 = vpop.f32.mrf.mxu0
        %3811 = vmatprep.mubr.f32.mxu0 0.0
        %3812 = vmatmul.mubr.f32.gmra.mxu0 %v3681
        %v3813 = vpop.f32.mrf.mxu0
        %v3814 = vadd.f32 0.0, %v3813
        %v3815 = vpop.f32.mrf.mxu0
        %3816 = vmatprep.mubr.f32.mxu0 0.0
        %3817 = vmatmul.mubr.f32.gmra.mxu0 %v3684
        %v3818 = vpop.f32.mrf.mxu0
        %v3819 = vadd.f32 0.0, %v3818
        %v3820 = vpop.f32.mrf.mxu0
        %3821 = vmatprep.mubr.f32.mxu0 0.0
        %3822 = vmatmul.mubr.f32.gmra.mxu0 %v3687
        %v3823 = vpop.f32.mrf.mxu0
        %v3824 = vadd.f32 0.0, %v3823
        %v3825 = vpop.f32.mrf.mxu0
        %3826 = vmatprep.mubr.f32.mxu0 0.0
        %3827 = vmatmul.mubr.f32.gmra.mxu0 %v3690
        %v3828 = vpop.f32.mrf.mxu0
        %v3829 = vadd.f32 0.0, %v3828
        %v3830 = vpop.f32.mrf.mxu0
        %3831 = vmatprep.mubr.f32.mxu0 0.0
        %3832 = vmatmul.mubr.f32.gmra.mxu0 %v3693
        %v3833 = vpop.f32.mrf.mxu0
        %v3834 = vadd.f32 0.0, %v3833
        %v3835 = vpop.f32.mrf.mxu0
        %3836 = vmatprep.mubr.f32.mxu0 0.0
        %3837 = vmatmul.mubr.f32.gmra.mxu0 %v3696
        %v3838 = vpop.f32.mrf.mxu0
        %v3839 = vadd.f32 0.0, %v3838
        %v3840 = vpop.f32.mrf.mxu0
        %3841 = vmatprep.mubr.f32.mxu0 0.0
        %3842 = vmatmul.mubr.f32.gmra.mxu0 %v3699
        %v3843 = vpop.f32.mrf.mxu0
        %v3844 = vadd.f32 0.0, %v3843
        %v3845 = vpop.f32.mrf.mxu0
        %3846 = vmatprep.mubr.f32.mxu0 0.0
        %3847 = vmatmul.mubr.f32.gmra.mxu0 %v3702
        %v3848 = vpop.f32.mrf.mxu0
        %v3849 = vadd.f32 0.0, %v3848
        %v3850 = vpop.f32.mrf.mxu0
        %3851 = vdwg.mxu0
        %v3852 = vadd.f32 %v3560, %v3774
        %v3853 = vadd.f32 %v3565, %v3779
        %v3854 = vadd.f32 %v3570, %v3784
        %v3855 = vadd.f32 %v3575, %v3789
        %v3856 = vadd.f32 %v3580, %v3794
        %v3857 = vadd.f32 %v3585, %v3799
        %v3858 = vadd.f32 %v3590, %v3804
        %v3859 = vadd.f32 %v3595, %v3809
        %v3860 = vadd.f32 %v3600, %v3814
        %v3861 = vadd.f32 %v3605, %v3819
        %v3862 = vadd.f32 %v3610, %v3824
        %v3863 = vadd.f32 %v3615, %v3829
        %v3864 = vadd.f32 %v3620, %v3834
        %v3865 = vadd.f32 %v3625, %v3839
        %v3866 = vadd.f32 %v3630, %v3844
        %v3867 = vadd.f32 %v3635, %v3849
        %v3868 = vld [vmem:[%s2716 + $0x2] sm:$0xff]
        %v3869 = vld [vmem:[%s2716 + $0xa] sm:$0xff]
        %v3870 = vld [vmem:[%s2716 + $0x1a] sm:$0xff]
        %v3871 = vld [vmem:[%s2716 + $0x22] sm:$0xff]
        %v3872 = vld [vmem:[%s2716 + $0x32] sm:$0xff]
        %v3873 = vld [vmem:[%s2716 + $0x3a] sm:$0xff]
        %v3874 = vld [vmem:[%s2716 + $0x4a] sm:$0xff]
        %v3875 = vld [vmem:[%s2716 + $0x52] sm:$0xff]
        %v3876 = vld [vmem:[%s2716 + $0x62] sm:$0xff]
        %v3877 = vld [vmem:[%s2716 + $0x6a] sm:$0xff]
        %v3878 = vld [vmem:[%s2716 + $0x7a] sm:$0xff]
        %v3879 = vld [vmem:[%s2716 + $0x82] sm:$0xff]
        %v3880 = vld [vmem:[%s2716 + $0x92] sm:$0xff]
        %v3881 = vld [vmem:[%s2716 + $0x9a] sm:$0xff]
        %v3882 = vld [vmem:[%s2716 + $0xaa] sm:$0xff]
        %v3883 = vld [vmem:[%s2716 + $0xb2] sm:$0xff]
        %s3884 = scalar_lea.vmem %s3, 60
        %v3885 = vld [vmem:[%s3884] sm:$0xf]
        %v3887 = vsel %vm399, %v3868, 0
        %v3890 = vsel %vm399, %v3869, 0
        %v3893 = vsel %vm399, %v3870, 0
        %v3896 = vsel %vm399, %v3871, 0
        %v3899 = vsel %vm399, %v3872, 0
        %v3902 = vsel %vm399, %v3873, 0
        %v3905 = vsel %vm399, %v3874, 0
        %v3908 = vsel %vm399, %v3875, 0
        %v3911 = vsel %vm399, %v3876, 0
        %v3914 = vsel %vm399, %v3877, 0
        %v3917 = vsel %vm399, %v3878, 0
        %v3920 = vsel %vm399, %v3879, 0
        %v3923 = vsel %vm399, %v3880, 0
        %v3926 = vsel %vm399, %v3881, 0
        %v3929 = vsel %vm399, %v3882, 0
        %v3932 = vsel %vm399, %v3883, 0
        %v3935 = vsel %vm523, %v3885, 0
        %3937 = vmatprep.subr.mxu0 0.0
        %3938 = vmatpush1.msra.mxu0 0.0
        %3939 = vmatprep.subr.mxu0 0.0
        %3940 = vmatpush1.msra.mxu0 0.0
        %3941 = vmatprep.subr.mxu0 0.0
        %3942 = vmatpush1.msra.mxu0 0.0
        %3943 = vmatprep.subr.mxu0 0.0
        %3944 = vmatpush1.msra.mxu0 0.0
        %3945 = vmatprep.subr.mxu0 0.0
        %3946 = vmatpush1.msra.mxu0 0.0
        %3947 = vmatprep.subr.mxu0 0.0
        %3948 = vmatpush1.msra.mxu0 0.0
        %3949 = vmatprep.subr.mxu0 0.0
        %3950 = vmatpush1.msra.mxu0 0.0
        %3951 = vmatprep.subr.mxu0 0.0
        %3952 = vmatpush1.msra.mxu0 0.0
        %3953 = vmatprep.subr.mxu0 0.0
        %3954 = vmatpush1.msra.mxu0 0.0
        %3955 = vmatprep.subr.mxu0 0.0
        %3956 = vmatpush1.msra.mxu0 0.0
        %3957 = vmatprep.subr.mxu0 0.0
        %3958 = vmatpush1.msra.mxu0 0.0
        %3959 = vmatprep.subr.mxu0 0.0
        %3960 = vmatpush1.msra.mxu0 0.0
        %3961 = vmatprep.subr.mxu0 0.0
        %3962 = vmatpush1.msra.mxu0 0.0
        %3963 = vmatprep.subr.mxu0 0.0
        %3964 = vmatpush1.msra.mxu0 0.0
        %3965 = vmatprep.subr.mxu0 0.0
        %3966 = vmatpush1.msra.mxu0 0.0
        %3967 = vmatprep.subr.mxu0 0.0
        %3968 = vmatpush1.msra.mxu0 %v3935
        %3969 = vmatprep.subr.mxu0 0.0
        %3970 = vmatpush2.msra.mxu0 0.0
        %3971 = vmatprep.subr.mxu0 0.0
        %3972 = vmatpush2.msra.mxu0 0.0
        %3973 = vmatprep.subr.mxu0 0.0
        %3974 = vmatpush2.msra.mxu0 0.0
        %3975 = vmatprep.subr.mxu0 0.0
        %3976 = vmatpush2.msra.mxu0 0.0
        %3977 = vmatprep.subr.mxu0 0.0
        %3978 = vmatpush2.msra.mxu0 0.0
        %3979 = vmatprep.subr.mxu0 0.0
        %3980 = vmatpush2.msra.mxu0 0.0
        %3981 = vmatprep.subr.mxu0 0.0
        %3982 = vmatpush2.msra.mxu0 0.0
        %3983 = vmatprep.subr.mxu0 0.0
        %3984 = vmatpush2.msra.mxu0 0.0
        %3985 = vmatprep.subr.mxu0 0.0
        %3986 = vmatpush2.msra.mxu0 0.0
        %3987 = vmatprep.subr.mxu0 0.0
        %3988 = vmatpush2.msra.mxu0 0.0
        %3989 = vmatprep.subr.mxu0 0.0
        %3990 = vmatpush2.msra.mxu0 0.0
        %3991 = vmatprep.subr.mxu0 0.0
        %3992 = vmatpush2.msra.mxu0 0.0
        %3993 = vmatprep.subr.mxu0 0.0
        %3994 = vmatpush2.msra.mxu0 0.0
        %3995 = vmatprep.subr.mxu0 0.0
        %3996 = vmatpush2.msra.mxu0 0.0
        %3997 = vmatprep.subr.mxu0 0.0
        %3998 = vmatpush2.msra.mxu0 0.0
        %3999 = vmatprep.subr.mxu0 0.0
        %4000 = vmatpush2.msra.mxu0 0.0
        %4001 = vmatprep.mubr.f32.mxu0 0.0
        %4002 = vmatmul.mubr.f32.gmra.mxu0 %v3887
        %v4003 = vpop.f32.mrf.mxu0
        %v4004 = vadd.f32 0.0, %v4003
        %v4005 = vpop.f32.mrf.mxu0
        %4006 = vmatprep.mubr.f32.mxu0 0.0
        %4007 = vmatmul.mubr.f32.gmra.mxu0 %v3890
        %v4008 = vpop.f32.mrf.mxu0
        %v4009 = vadd.f32 0.0, %v4008
        %v4010 = vpop.f32.mrf.mxu0
        %4011 = vmatprep.mubr.f32.mxu0 0.0
        %4012 = vmatmul.mubr.f32.gmra.mxu0 %v3893
        %v4013 = vpop.f32.mrf.mxu0
        %v4014 = vadd.f32 0.0, %v4013
        %v4015 = vpop.f32.mrf.mxu0
        %4016 = vmatprep.mubr.f32.mxu0 0.0
        %4017 = vmatmul.mubr.f32.gmra.mxu0 %v3896
        %v4018 = vpop.f32.mrf.mxu0
        %v4019 = vadd.f32 0.0, %v4018
        %v4020 = vpop.f32.mrf.mxu0
        %4021 = vmatprep.mubr.f32.mxu0 0.0
        %4022 = vmatmul.mubr.f32.gmra.mxu0 %v3899
        %v4023 = vpop.f32.mrf.mxu0
        %v4024 = vadd.f32 0.0, %v4023
        %v4025 = vpop.f32.mrf.mxu0
        %4026 = vmatprep.mubr.f32.mxu0 0.0
        %4027 = vmatmul.mubr.f32.gmra.mxu0 %v3902
        %v4028 = vpop.f32.mrf.mxu0
        %v4029 = vadd.f32 0.0, %v4028
        %v4030 = vpop.f32.mrf.mxu0
        %4031 = vmatprep.mubr.f32.mxu0 0.0
        %4032 = vmatmul.mubr.f32.gmra.mxu0 %v3905
        %v4033 = vpop.f32.mrf.mxu0
        %v4034 = vadd.f32 0.0, %v4033
        %v4035 = vpop.f32.mrf.mxu0
        %4036 = vmatprep.mubr.f32.mxu0 0.0
        %4037 = vmatmul.mubr.f32.gmra.mxu0 %v3908
        %v4038 = vpop.f32.mrf.mxu0
        %v4039 = vadd.f32 0.0, %v4038
        %v4040 = vpop.f32.mrf.mxu0
        %4041 = vmatprep.mubr.f32.mxu0 0.0
        %4042 = vmatmul.mubr.f32.gmra.mxu0 %v3911
        %v4043 = vpop.f32.mrf.mxu0
        %v4044 = vadd.f32 0.0, %v4043
        %v4045 = vpop.f32.mrf.mxu0
        %4046 = vmatprep.mubr.f32.mxu0 0.0
        %4047 = vmatmul.mubr.f32.gmra.mxu0 %v3914
        %v4048 = vpop.f32.mrf.mxu0
        %v4049 = vadd.f32 0.0, %v4048
        %v4050 = vpop.f32.mrf.mxu0
        %4051 = vmatprep.mubr.f32.mxu0 0.0
        %4052 = vmatmul.mubr.f32.gmra.mxu0 %v3917
        %v4053 = vpop.f32.mrf.mxu0
        %v4054 = vadd.f32 0.0, %v4053
        %v4055 = vpop.f32.mrf.mxu0
        %4056 = vmatprep.mubr.f32.mxu0 0.0
        %4057 = vmatmul.mubr.f32.gmra.mxu0 %v3920
        %v4058 = vpop.f32.mrf.mxu0
        %v4059 = vadd.f32 0.0, %v4058
        %v4060 = vpop.f32.mrf.mxu0
        %4061 = vmatprep.mubr.f32.mxu0 0.0
        %4062 = vmatmul.mubr.f32.gmra.mxu0 %v3923
        %v4063 = vpop.f32.mrf.mxu0
        %v4064 = vadd.f32 0.0, %v4063
        %v4065 = vpop.f32.mrf.mxu0
        %4066 = vmatprep.mubr.f32.mxu0 0.0
        %4067 = vmatmul.mubr.f32.gmra.mxu0 %v3926
        %v4068 = vpop.f32.mrf.mxu0
        %v4069 = vadd.f32 0.0, %v4068
        %v4070 = vpop.f32.mrf.mxu0
        %4071 = vmatprep.mubr.f32.mxu0 0.0
        %4072 = vmatmul.mubr.f32.gmra.mxu0 %v3929
        %v4073 = vpop.f32.mrf.mxu0
        %v4074 = vadd.f32 0.0, %v4073
        %v4075 = vpop.f32.mrf.mxu0
        %4076 = vmatprep.mubr.f32.mxu0 0.0
        %4077 = vmatmul.mubr.f32.gmra.mxu0 %v3932
        %v4078 = vpop.f32.mrf.mxu0
        %v4079 = vadd.f32 0.0, %v4078
        %v4080 = vpop.f32.mrf.mxu0
        %4081 = vdwg.mxu0
        %v4082 = vadd.f32 %v3852, %v4004
        %v4083 = vadd.f32 %v3853, %v4009
        %v4084 = vadd.f32 %v3854, %v4014
        %v4085 = vadd.f32 %v3855, %v4019
        %v4086 = vadd.f32 %v3856, %v4024
        %v4087 = vadd.f32 %v3857, %v4029
        %v4088 = vadd.f32 %v3858, %v4034
        %v4089 = vadd.f32 %v3859, %v4039
        %v4090 = vadd.f32 %v3860, %v4044
        %v4091 = vadd.f32 %v3861, %v4049
        %v4092 = vadd.f32 %v3862, %v4054
        %v4093 = vadd.f32 %v3863, %v4059
        %v4094 = vadd.f32 %v3864, %v4064
        %v4095 = vadd.f32 %v3865, %v4069
        %v4096 = vadd.f32 %v3866, %v4074
        %v4097 = vadd.f32 %v3867, %v4079
        %v4098 = vadd.f32 %v4082, %v1333
        %v4099 = vadd.f32 %v4083, %v1333
        %v4100 = vadd.f32 %v4084, %v1333
        %v4101 = vadd.f32 %v4085, %v1333
        %v4102 = vadd.f32 %v4086, %v1333
        %v4103 = vadd.f32 %v4087, %v1333
        %v4104 = vadd.f32 %v4088, %v1333
        %v4105 = vadd.f32 %v4089, %v1333
        %v4106 = vadd.f32 %v4090, %v1333
        %v4107 = vadd.f32 %v4091, %v1333
        %v4108 = vadd.f32 %v4092, %v1333
        %v4109 = vadd.f32 %v4093, %v1333
        %v4110 = vadd.f32 %v4094, %v1333
        %v4111 = vadd.f32 %v4095, %v1333
        %v4112 = vadd.f32 %v4096, %v1333
        %v4113 = vadd.f32 %v4097, %v1333
        %s4114 = scalar_lea.vmem %s325, 384 [#allocation3]
        %4115 = vst.msk [vmem:[%s4114] sm:$0xff] %vm399, %v4098
        %4116 = vst.msk [vmem:[%s4114 + $0x8] sm:$0xff] %vm399, %v4099
        %4117 = vst.msk [vmem:[%s4114 + $0x10] sm:$0xff] %vm399, %v4100
        %4118 = vst.msk [vmem:[%s4114 + $0x18] sm:$0xff] %vm399, %v4101
        %4119 = vst.msk [vmem:[%s4114 + $0x20] sm:$0xff] %vm399, %v4102
        %4120 = vst.msk [vmem:[%s4114 + $0x28] sm:$0xff] %vm399, %v4103
        %4121 = vst.msk [vmem:[%s4114 + $0x30] sm:$0xff] %vm399, %v4104
        %4122 = vst.msk [vmem:[%s4114 + $0x38] sm:$0xff] %vm399, %v4105
        %4123 = vst.msk [vmem:[%s4114 + $0x40] sm:$0xff] %vm399, %v4106
        %4124 = vst.msk [vmem:[%s4114 + $0x48] sm:$0xff] %vm399, %v4107
        %4125 = vst.msk [vmem:[%s4114 + $0x50] sm:$0xff] %vm399, %v4108
        %4126 = vst.msk [vmem:[%s4114 + $0x58] sm:$0xff] %vm399, %v4109
        %4127 = vst.msk [vmem:[%s4114 + $0x60] sm:$0xff] %vm399, %v4110
        %4128 = vst.msk [vmem:[%s4114 + $0x68] sm:$0xff] %vm399, %v4111
        %4129 = vst.msk [vmem:[%s4114 + $0x70] sm:$0xff] %vm399, %v4112
        %4130 = vst.msk [vmem:[%s4114 + $0x78] sm:$0xff] %vm399, %v4113
        %s4131 = sand.u32 %s172, 1
        %s4132 = sand.u32 %s172, 1
        %s4133 = smul.addr %s4132, 512
        %s4134 = scalar_lea.vmem [#allocation3], %s4133
        // Predicated region
        $region41: #{tpu_custom_call.1} parent=39 // pred_check
          %p4135 = pneg %p182
        $region42: #{tpu_custom_call.1} parent=39 // pred_check_branch
          %4137 = sbr.rel (%p4135) target = $region44
        $region43: #{tpu_custom_call.1} parent=39 // pred_region
          %s4138 = smul.u32 4, %s20
          %s4139 = smul.u32 8, %s21
          %s4140 = smul.addr %s4139, 2
          %s4141 = smul.addr %s4138, 32
          %s4142 = sadd.s32 %s4140, %s4141
          %s4143 = smul.addr %s4142, 8
          %s4144 = scalar_lea.vmem %s5, %s4143
          // Predicated region
          $region45: #{tpu_custom_call.1} parent=43 // pred_check
            _
          $region46: #{tpu_custom_call.1} parent=43 // pred_check_branch
            %4146 = sbr.rel (0) target = $region48
          $region47: #{tpu_custom_call.1} parent=43 // pred_region
            // Predicated region
            $region49: #{tpu_custom_call.1} parent=47 // pred_check
              _
            $region50: #{tpu_custom_call.1} parent=47 // pred_check_branch
              %4148 = sbr.rel (0) target = $region52
            $region51: #{tpu_custom_call.1} parent=47 // pred_region
              // Predicated region
              $region64: #{tpu_custom_call.1} parent=51 // pred_check
                _
              $region65: #{tpu_custom_call.1} parent=51 // pred_check_branch
                %4290 = sbr.rel (0) target = $region67
              $region66: #{tpu_custom_call.1} parent=51 // pred_region
                loop: start=0, step=1, limit=1
                $region68: #{tpu_custom_call.1} parent=66 // loop_pre_header
                  _
                $region69: #{tpu_custom_call.1} parent=66 // loop_header
                  %s4292 = sphi 0, %s4296
                  %p4293 = scmp.ge.s32.totalorder %s4292, 1
                  %s4297 = sphi %s4134, %s4134
                  %s4298 = sphi %s4144, %s4144
                $region70: #{tpu_custom_call.1} parent=66 // loop_header_branch
                  %4295 = sbr.rel (%p4293) target = $region74
                $region71: #{tpu_custom_call.1} parent=66 // loop_body
                  %v4299 = vld [vmem:[%s4297] sm:$0xff]
                  %4300 = vst [vmem:[%s4298] sm:$0xff] %v4299
                  %v4301 = vld [vmem:[%s4297 + $0x8] sm:$0xff]
                  %4302 = vst [vmem:[%s4298 + $0x8] sm:$0xff] %v4301
                  %v4303 = vld [vmem:[%s4297 + $0x10] sm:$0xff]
                  %4304 = vst [vmem:[%s4298 + $0x10] sm:$0xff] %v4303
                  %v4305 = vld [vmem:[%s4297 + $0x18] sm:$0xff]
                  %4306 = vst [vmem:[%s4298 + $0x18] sm:$0xff] %v4305
                  %v4307 = vld [vmem:[%s4297 + $0x20] sm:$0xff]
                  %4308 = vst [vmem:[%s4298 + $0x20] sm:$0xff] %v4307
                  %v4309 = vld [vmem:[%s4297 + $0x28] sm:$0xff]
                  %4310 = vst [vmem:[%s4298 + $0x28] sm:$0xff] %v4309
                  %v4311 = vld [vmem:[%s4297 + $0x30] sm:$0xff]
                  %4312 = vst [vmem:[%s4298 + $0x30] sm:$0xff] %v4311
                  %v4313 = vld [vmem:[%s4297 + $0x38] sm:$0xff]
                  %4314 = vst [vmem:[%s4298 + $0x38] sm:$0xff] %v4313
                  %v4315 = vld [vmem:[%s4297 + $0x40] sm:$0xff]
                  %4316 = vst [vmem:[%s4298 + $0x40] sm:$0xff] %v4315
                  %v4317 = vld [vmem:[%s4297 + $0x48] sm:$0xff]
                  %4318 = vst [vmem:[%s4298 + $0x48] sm:$0xff] %v4317
                  %v4319 = vld [vmem:[%s4297 + $0x50] sm:$0xff]
                  %4320 = vst [vmem:[%s4298 + $0x50] sm:$0xff] %v4319
                  %v4321 = vld [vmem:[%s4297 + $0x58] sm:$0xff]
                  %4322 = vst [vmem:[%s4298 + $0x58] sm:$0xff] %v4321
                  %v4323 = vld [vmem:[%s4297 + $0x60] sm:$0xff]
                  %4324 = vst [vmem:[%s4298 + $0x60] sm:$0xff] %v4323
                  %v4325 = vld [vmem:[%s4297 + $0x68] sm:$0xff]
                  %4326 = vst [vmem:[%s4298 + $0x68] sm:$0xff] %v4325
                  %v4327 = vld [vmem:[%s4297 + $0x70] sm:$0xff]
                  %4328 = vst [vmem:[%s4298 + $0x70] sm:$0xff] %v4327
                  %v4329 = vld [vmem:[%s4297 + $0x78] sm:$0xff]
                  %4330 = vst [vmem:[%s4298 + $0x78] sm:$0xff] %v4329
                  %v4331 = vld [vmem:[%s4297 + $0x80] sm:$0xff]
                  %4332 = vst [vmem:[%s4298 + $0x100] sm:$0xff] %v4331
                  %v4333 = vld [vmem:[%s4297 + $0x88] sm:$0xff]
                  %4334 = vst [vmem:[%s4298 + $0x108] sm:$0xff] %v4333
                  %v4335 = vld [vmem:[%s4297 + $0x90] sm:$0xff]
                  %4336 = vst [vmem:[%s4298 + $0x110] sm:$0xff] %v4335
                  %v4337 = vld [vmem:[%s4297 + $0x98] sm:$0xff]
                  %4338 = vst [vmem:[%s4298 + $0x118] sm:$0xff] %v4337
                  %v4339 = vld [vmem:[%s4297 + $0xa0] sm:$0xff]
                  %4340 = vst [vmem:[%s4298 + $0x120] sm:$0xff] %v4339
                  %v4341 = vld [vmem:[%s4297 + $0xa8] sm:$0xff]
                  %4342 = vst [vmem:[%s4298 + $0x128] sm:$0xff] %v4341
                  %v4343 = vld [vmem:[%s4297 + $0xb0] sm:$0xff]
                  %4344 = vst [vmem:[%s4298 + $0x130] sm:$0xff] %v4343
                  %v4345 = vld [vmem:[%s4297 + $0xb8] sm:$0xff]
                  %4346 = vst [vmem:[%s4298 + $0x138] sm:$0xff] %v4345
                  %v4347 = vld [vmem:[%s4297 + $0xc0] sm:$0xff]
                  %4348 = vst [vmem:[%s4298 + $0x140] sm:$0xff] %v4347
                  %v4349 = vld [vmem:[%s4297 + $0xc8] sm:$0xff]
                  %4350 = vst [vmem:[%s4298 + $0x148] sm:$0xff] %v4349
                  %v4351 = vld [vmem:[%s4297 + $0xd0] sm:$0xff]
                  %4352 = vst [vmem:[%s4298 + $0x150] sm:$0xff] %v4351
                  %v4353 = vld [vmem:[%s4297 + $0xd8] sm:$0xff]
                  %4354 = vst [vmem:[%s4298 + $0x158] sm:$0xff] %v4353
                  %v4355 = vld [vmem:[%s4297 + $0xe0] sm:$0xff]
                  %4356 = vst [vmem:[%s4298 + $0x160] sm:$0xff] %v4355
                  %v4357 = vld [vmem:[%s4297 + $0xe8] sm:$0xff]
                  %4358 = vst [vmem:[%s4298 + $0x168] sm:$0xff] %v4357
                  %v4359 = vld [vmem:[%s4297 + $0xf0] sm:$0xff]
                  %4360 = vst [vmem:[%s4298 + $0x170] sm:$0xff] %v4359
                  %v4361 = vld [vmem:[%s4297 + $0xf8] sm:$0xff]
                  %4362 = vst [vmem:[%s4298 + $0x178] sm:$0xff] %v4361
                  %v4363 = vld [vmem:[%s4297 + $0x100] sm:$0xff]
                  %4364 = vst [vmem:[%s4298 + $0x200] sm:$0xff] %v4363
                  %v4365 = vld [vmem:[%s4297 + $0x108] sm:$0xff]
                  %4366 = vst [vmem:[%s4298 + $0x208] sm:$0xff] %v4365
                  %v4367 = vld [vmem:[%s4297 + $0x110] sm:$0xff]
                  %4368 = vst [vmem:[%s4298 + $0x210] sm:$0xff] %v4367
                  %v4369 = vld [vmem:[%s4297 + $0x118] sm:$0xff]
                  %4370 = vst [vmem:[%s4298 + $0x218] sm:$0xff] %v4369
                  %v4371 = vld [vmem:[%s4297 + $0x120] sm:$0xff]
                  %4372 = vst [vmem:[%s4298 + $0x220] sm:$0xff] %v4371
                  %v4373 = vld [vmem:[%s4297 + $0x128] sm:$0xff]
                  %4374 = vst [vmem:[%s4298 + $0x228] sm:$0xff] %v4373
                  %v4375 = vld [vmem:[%s4297 + $0x130] sm:$0xff]
                  %4376 = vst [vmem:[%s4298 + $0x230] sm:$0xff] %v4375
                  %v4377 = vld [vmem:[%s4297 + $0x138] sm:$0xff]
                  %4378 = vst [vmem:[%s4298 + $0x238] sm:$0xff] %v4377
                  %v4379 = vld [vmem:[%s4297 + $0x140] sm:$0xff]
                  %4380 = vst [vmem:[%s4298 + $0x240] sm:$0xff] %v4379
                  %v4381 = vld [vmem:[%s4297 + $0x148] sm:$0xff]
                  %4382 = vst [vmem:[%s4298 + $0x248] sm:$0xff] %v4381
                  %v4383 = vld [vmem:[%s4297 + $0x150] sm:$0xff]
                  %4384 = vst [vmem:[%s4298 + $0x250] sm:$0xff] %v4383
                  %v4385 = vld [vmem:[%s4297 + $0x158] sm:$0xff]
                  %4386 = vst [vmem:[%s4298 + $0x258] sm:$0xff] %v4385
                  %v4387 = vld [vmem:[%s4297 + $0x160] sm:$0xff]
                  %4388 = vst [vmem:[%s4298 + $0x260] sm:$0xff] %v4387
                  %v4389 = vld [vmem:[%s4297 + $0x168] sm:$0xff]
                  %4390 = vst [vmem:[%s4298 + $0x268] sm:$0xff] %v4389
                  %v4391 = vld [vmem:[%s4297 + $0x170] sm:$0xff]
                  %4392 = vst [vmem:[%s4298 + $0x270] sm:$0xff] %v4391
                  %v4393 = vld [vmem:[%s4297 + $0x178] sm:$0xff]
                  %4394 = vst [vmem:[%s4298 + $0x278] sm:$0xff] %v4393
                  %v4395 = vld [vmem:[%s4297 + $0x180] sm:$0xff]
                  %4396 = vst [vmem:[%s4298 + $0x300] sm:$0xff] %v4395
                  %v4397 = vld [vmem:[%s4297 + $0x188] sm:$0xff]
                  %4398 = vst [vmem:[%s4298 + $0x308] sm:$0xff] %v4397
                  %v4399 = vld [vmem:[%s4297 + $0x190] sm:$0xff]
                  %4400 = vst [vmem:[%s4298 + $0x310] sm:$0xff] %v4399
                  %v4401 = vld [vmem:[%s4297 + $0x198] sm:$0xff]
                  %4402 = vst [vmem:[%s4298 + $0x318] sm:$0xff] %v4401
                  %v4403 = vld [vmem:[%s4297 + $0x1a0] sm:$0xff]
                  %4404 = vst [vmem:[%s4298 + $0x320] sm:$0xff] %v4403
                  %v4405 = vld [vmem:[%s4297 + $0x1a8] sm:$0xff]
                  %4406 = vst [vmem:[%s4298 + $0x328] sm:$0xff] %v4405
                  %v4407 = vld [vmem:[%s4297 + $0x1b0] sm:$0xff]
                  %4408 = vst [vmem:[%s4298 + $0x330] sm:$0xff] %v4407
                  %v4409 = vld [vmem:[%s4297 + $0x1b8] sm:$0xff]
                  %4410 = vst [vmem:[%s4298 + $0x338] sm:$0xff] %v4409
                  %v4411 = vld [vmem:[%s4297 + $0x1c0] sm:$0xff]
                  %4412 = vst [vmem:[%s4298 + $0x340] sm:$0xff] %v4411
                  %v4413 = vld [vmem:[%s4297 + $0x1c8] sm:$0xff]
                  %4414 = vst [vmem:[%s4298 + $0x348] sm:$0xff] %v4413
                  %v4415 = vld [vmem:[%s4297 + $0x1d0] sm:$0xff]
                  %4416 = vst [vmem:[%s4298 + $0x350] sm:$0xff] %v4415
                  %v4417 = vld [vmem:[%s4297 + $0x1d8] sm:$0xff]
                  %4418 = vst [vmem:[%s4298 + $0x358] sm:$0xff] %v4417
                  %v4419 = vld [vmem:[%s4297 + $0x1e0] sm:$0xff]
                  %4420 = vst [vmem:[%s4298 + $0x360] sm:$0xff] %v4419
                  %v4421 = vld [vmem:[%s4297 + $0x1e8] sm:$0xff]
                  %4422 = vst [vmem:[%s4298 + $0x368] sm:$0xff] %v4421
                  %v4423 = vld [vmem:[%s4297 + $0x1f0] sm:$0xff]
                  %4424 = vst [vmem:[%s4298 + $0x370] sm:$0xff] %v4423
                  %v4425 = vld [vmem:[%s4297 + $0x1f8] sm:$0xff]
                  %4426 = vst [vmem:[%s4298 + $0x378] sm:$0xff] %v4425
                $region72: #{tpu_custom_call.1} parent=66 // loop_footer
                  %s4296 = sadd.s32 1, %s4292
                $region73: #{tpu_custom_call.1} parent=66 // loop_footer_branch
                  %4291 = sbr.rel target = $region69
                $region74: #{tpu_custom_call.1} parent=66 // loop_exit
                  _
              $region67: #{tpu_custom_call.1} parent=51 // pred_fallthru
                _
              // Predicated region
              $region75: #{tpu_custom_call.1} parent=51 // pred_check
                _
              $region76: #{tpu_custom_call.1} parent=51 // pred_check_branch
                %4428 = sbr.rel target = $region78
              $region77: #{tpu_custom_call.1} parent=51 // pred_region
                _
              $region78: #{tpu_custom_call.1} parent=51 // pred_fallthru
                _
            $region52: #{tpu_custom_call.1} parent=47 // pred_fallthru
              _
            // Predicated region
            $region53: #{tpu_custom_call.1} parent=47 // pred_check
              _
            $region54: #{tpu_custom_call.1} parent=47 // pred_check_branch
              %4150 = sbr.rel target = $region56
            $region55: #{tpu_custom_call.1} parent=47 // pred_region
              %s4152 = ssub.s32 256, 1
              loop: start=0, step=1, limit=1
              $region57: #{tpu_custom_call.1} parent=55 // loop_pre_header
                _
              $region58: #{tpu_custom_call.1} parent=55 // loop_header
                %s4154 = sphi 0, %s4158
                %p4155 = scmp.ge.s32.totalorder %s4154, 1
                %s4159 = sphi %s4134, %s4134
                %s4160 = sphi %s4144, %s4144
              $region59: #{tpu_custom_call.1} parent=55 // loop_header_branch
                %4157 = sbr.rel (%p4155) target = $region63
              $region60: #{tpu_custom_call.1} parent=55 // loop_body
                %v4161 = vld [vmem:[%s4159] sm:%s4152]
                %4162 = vst [vmem:[%s4160] sm:%s4152] %v4161
                %v4163 = vld [vmem:[%s4159 + $0x8] sm:%s4152]
                %4164 = vst [vmem:[%s4160 + $0x8] sm:%s4152] %v4163
                %v4165 = vld [vmem:[%s4159 + $0x10] sm:%s4152]
                %4166 = vst [vmem:[%s4160 + $0x10] sm:%s4152] %v4165
                %v4167 = vld [vmem:[%s4159 + $0x18] sm:%s4152]
                %4168 = vst [vmem:[%s4160 + $0x18] sm:%s4152] %v4167
                %v4169 = vld [vmem:[%s4159 + $0x20] sm:%s4152]
                %4170 = vst [vmem:[%s4160 + $0x20] sm:%s4152] %v4169
                %v4171 = vld [vmem:[%s4159 + $0x28] sm:%s4152]
                %4172 = vst [vmem:[%s4160 + $0x28] sm:%s4152] %v4171
                %v4173 = vld [vmem:[%s4159 + $0x30] sm:%s4152]
                %4174 = vst [vmem:[%s4160 + $0x30] sm:%s4152] %v4173
                %v4175 = vld [vmem:[%s4159 + $0x38] sm:%s4152]
                %4176 = vst [vmem:[%s4160 + $0x38] sm:%s4152] %v4175
                %v4177 = vld [vmem:[%s4159 + $0x40] sm:%s4152]
                %4178 = vst [vmem:[%s4160 + $0x40] sm:%s4152] %v4177
                %v4179 = vld [vmem:[%s4159 + $0x48] sm:%s4152]
                %4180 = vst [vmem:[%s4160 + $0x48] sm:%s4152] %v4179
                %v4181 = vld [vmem:[%s4159 + $0x50] sm:%s4152]
                %4182 = vst [vmem:[%s4160 + $0x50] sm:%s4152] %v4181
                %v4183 = vld [vmem:[%s4159 + $0x58] sm:%s4152]
                %4184 = vst [vmem:[%s4160 + $0x58] sm:%s4152] %v4183
                %v4185 = vld [vmem:[%s4159 + $0x60] sm:%s4152]
                %4186 = vst [vmem:[%s4160 + $0x60] sm:%s4152] %v4185
                %v4187 = vld [vmem:[%s4159 + $0x68] sm:%s4152]
                %4188 = vst [vmem:[%s4160 + $0x68] sm:%s4152] %v4187
                %v4189 = vld [vmem:[%s4159 + $0x70] sm:%s4152]
                %4190 = vst [vmem:[%s4160 + $0x70] sm:%s4152] %v4189
                %v4191 = vld [vmem:[%s4159 + $0x78] sm:%s4152]
                %4192 = vst [vmem:[%s4160 + $0x78] sm:%s4152] %v4191
                %v4193 = vld [vmem:[%s4159 + $0x80] sm:%s4152]
                %4194 = vst [vmem:[%s4160 + $0x100] sm:%s4152] %v4193
                %v4195 = vld [vmem:[%s4159 + $0x88] sm:%s4152]
                %4196 = vst [vmem:[%s4160 + $0x108] sm:%s4152] %v4195
                %v4197 = vld [vmem:[%s4159 + $0x90] sm:%s4152]
                %4198 = vst [vmem:[%s4160 + $0x110] sm:%s4152] %v4197
                %v4199 = vld [vmem:[%s4159 + $0x98] sm:%s4152]
                %4200 = vst [vmem:[%s4160 + $0x118] sm:%s4152] %v4199
                %v4201 = vld [vmem:[%s4159 + $0xa0] sm:%s4152]
                %4202 = vst [vmem:[%s4160 + $0x120] sm:%s4152] %v4201
                %v4203 = vld [vmem:[%s4159 + $0xa8] sm:%s4152]
                %4204 = vst [vmem:[%s4160 + $0x128] sm:%s4152] %v4203
                %v4205 = vld [vmem:[%s4159 + $0xb0] sm:%s4152]
                %4206 = vst [vmem:[%s4160 + $0x130] sm:%s4152] %v4205
                %v4207 = vld [vmem:[%s4159 + $0xb8] sm:%s4152]
                %4208 = vst [vmem:[%s4160 + $0x138] sm:%s4152] %v4207
                %v4209 = vld [vmem:[%s4159 + $0xc0] sm:%s4152]
                %4210 = vst [vmem:[%s4160 + $0x140] sm:%s4152] %v4209
                %v4211 = vld [vmem:[%s4159 + $0xc8] sm:%s4152]
                %4212 = vst [vmem:[%s4160 + $0x148] sm:%s4152] %v4211
                %v4213 = vld [vmem:[%s4159 + $0xd0] sm:%s4152]
                %4214 = vst [vmem:[%s4160 + $0x150] sm:%s4152] %v4213
                %v4215 = vld [vmem:[%s4159 + $0xd8] sm:%s4152]
                %4216 = vst [vmem:[%s4160 + $0x158] sm:%s4152] %v4215
                %v4217 = vld [vmem:[%s4159 + $0xe0] sm:%s4152]
                %4218 = vst [vmem:[%s4160 + $0x160] sm:%s4152] %v4217
                %v4219 = vld [vmem:[%s4159 + $0xe8] sm:%s4152]
                %4220 = vst [vmem:[%s4160 + $0x168] sm:%s4152] %v4219
                %v4221 = vld [vmem:[%s4159 + $0xf0] sm:%s4152]
                %4222 = vst [vmem:[%s4160 + $0x170] sm:%s4152] %v4221
                %v4223 = vld [vmem:[%s4159 + $0xf8] sm:%s4152]
                %4224 = vst [vmem:[%s4160 + $0x178] sm:%s4152] %v4223
                %v4225 = vld [vmem:[%s4159 + $0x100] sm:%s4152]
                %4226 = vst [vmem:[%s4160 + $0x200] sm:%s4152] %v4225
                %v4227 = vld [vmem:[%s4159 + $0x108] sm:%s4152]
                %4228 = vst [vmem:[%s4160 + $0x208] sm:%s4152] %v4227
                %v4229 = vld [vmem:[%s4159 + $0x110] sm:%s4152]
                %4230 = vst [vmem:[%s4160 + $0x210] sm:%s4152] %v4229
                %v4231 = vld [vmem:[%s4159 + $0x118] sm:%s4152]
                %4232 = vst [vmem:[%s4160 + $0x218] sm:%s4152] %v4231
                %v4233 = vld [vmem:[%s4159 + $0x120] sm:%s4152]
                %4234 = vst [vmem:[%s4160 + $0x220] sm:%s4152] %v4233
                %v4235 = vld [vmem:[%s4159 + $0x128] sm:%s4152]
                %4236 = vst [vmem:[%s4160 + $0x228] sm:%s4152] %v4235
                %v4237 = vld [vmem:[%s4159 + $0x130] sm:%s4152]
                %4238 = vst [vmem:[%s4160 + $0x230] sm:%s4152] %v4237
                %v4239 = vld [vmem:[%s4159 + $0x138] sm:%s4152]
                %4240 = vst [vmem:[%s4160 + $0x238] sm:%s4152] %v4239
                %v4241 = vld [vmem:[%s4159 + $0x140] sm:%s4152]
                %4242 = vst [vmem:[%s4160 + $0x240] sm:%s4152] %v4241
                %v4243 = vld [vmem:[%s4159 + $0x148] sm:%s4152]
                %4244 = vst [vmem:[%s4160 + $0x248] sm:%s4152] %v4243
                %v4245 = vld [vmem:[%s4159 + $0x150] sm:%s4152]
                %4246 = vst [vmem:[%s4160 + $0x250] sm:%s4152] %v4245
                %v4247 = vld [vmem:[%s4159 + $0x158] sm:%s4152]
                %4248 = vst [vmem:[%s4160 + $0x258] sm:%s4152] %v4247
                %v4249 = vld [vmem:[%s4159 + $0x160] sm:%s4152]
                %4250 = vst [vmem:[%s4160 + $0x260] sm:%s4152] %v4249
                %v4251 = vld [vmem:[%s4159 + $0x168] sm:%s4152]
                %4252 = vst [vmem:[%s4160 + $0x268] sm:%s4152] %v4251
                %v4253 = vld [vmem:[%s4159 + $0x170] sm:%s4152]
                %4254 = vst [vmem:[%s4160 + $0x270] sm:%s4152] %v4253
                %v4255 = vld [vmem:[%s4159 + $0x178] sm:%s4152]
                %4256 = vst [vmem:[%s4160 + $0x278] sm:%s4152] %v4255
                %v4257 = vld [vmem:[%s4159 + $0x180] sm:%s4152]
                %4258 = vst [vmem:[%s4160 + $0x300] sm:%s4152] %v4257
                %v4259 = vld [vmem:[%s4159 + $0x188] sm:%s4152]
                %4260 = vst [vmem:[%s4160 + $0x308] sm:%s4152] %v4259
                %v4261 = vld [vmem:[%s4159 + $0x190] sm:%s4152]
                %4262 = vst [vmem:[%s4160 + $0x310] sm:%s4152] %v4261
                %v4263 = vld [vmem:[%s4159 + $0x198] sm:%s4152]
                %4264 = vst [vmem:[%s4160 + $0x318] sm:%s4152] %v4263
                %v4265 = vld [vmem:[%s4159 + $0x1a0] sm:%s4152]
                %4266 = vst [vmem:[%s4160 + $0x320] sm:%s4152] %v4265
                %v4267 = vld [vmem:[%s4159 + $0x1a8] sm:%s4152]
                %4268 = vst [vmem:[%s4160 + $0x328] sm:%s4152] %v4267
                %v4269 = vld [vmem:[%s4159 + $0x1b0] sm:%s4152]
                %4270 = vst [vmem:[%s4160 + $0x330] sm:%s4152] %v4269
                %v4271 = vld [vmem:[%s4159 + $0x1b8] sm:%s4152]
                %4272 = vst [vmem:[%s4160 + $0x338] sm:%s4152] %v4271
                %v4273 = vld [vmem:[%s4159 + $0x1c0] sm:%s4152]
                %4274 = vst [vmem:[%s4160 + $0x340] sm:%s4152] %v4273
                %v4275 = vld [vmem:[%s4159 + $0x1c8] sm:%s4152]
                %4276 = vst [vmem:[%s4160 + $0x348] sm:%s4152] %v4275
                %v4277 = vld [vmem:[%s4159 + $0x1d0] sm:%s4152]
                %4278 = vst [vmem:[%s4160 + $0x350] sm:%s4152] %v4277
                %v4279 = vld [vmem:[%s4159 + $0x1d8] sm:%s4152]
                %4280 = vst [vmem:[%s4160 + $0x358] sm:%s4152] %v4279
                %v4281 = vld [vmem:[%s4159 + $0x1e0] sm:%s4152]
                %4282 = vst [vmem:[%s4160 + $0x360] sm:%s4152] %v4281
                %v4283 = vld [vmem:[%s4159 + $0x1e8] sm:%s4152]
                %4284 = vst [vmem:[%s4160 + $0x368] sm:%s4152] %v4283
                %v4285 = vld [vmem:[%s4159 + $0x1f0] sm:%s4152]
                %4286 = vst [vmem:[%s4160 + $0x370] sm:%s4152] %v4285
                %v4287 = vld [vmem:[%s4159 + $0x1f8] sm:%s4152]
                %4288 = vst [vmem:[%s4160 + $0x378] sm:%s4152] %v4287
              $region61: #{tpu_custom_call.1} parent=55 // loop_footer
                %s4158 = sadd.s32 1, %s4154
              $region62: #{tpu_custom_call.1} parent=55 // loop_footer_branch
                %4153 = sbr.rel target = $region58
              $region63: #{tpu_custom_call.1} parent=55 // loop_exit
                _
            $region56: #{tpu_custom_call.1} parent=47 // pred_fallthru
              _
          $region48: #{tpu_custom_call.1} parent=43 // pred_fallthru
            _
          %4429 = vnop
        $region44: #{tpu_custom_call.1} parent=39 // pred_fallthru
          _
      $region40: #{tpu_custom_call.1} parent=5 // pred_fallthru
        _
      %p4430 = scmp.le.s32.totalorder 2, %s11
      // Predicated region
      $region79: #{tpu_custom_call.1} parent=5 // pred_check
        %p4431 = pneg %p4430
      $region80: #{tpu_custom_call.1} parent=5 // pred_check_branch
        %4433 = sbr.rel (%p4431) target = $region82
      $region81: #{tpu_custom_call.1} parent=5 // pred_region
        %s4434 = ssub.s32 %s11, 2
        // Predicated region
        $region83: #{tpu_custom_call.1} parent=81 // pred_check
          %p4435 = pneg %p188
        $region84: #{tpu_custom_call.1} parent=81 // pred_check_branch
          %4437 = sbr.rel (%p4435) target = $region86
        $region85: #{tpu_custom_call.1} parent=81 // pred_region
          %s4438 = sand.u32 %s173, 1
          %s4439 = sand.u32 %s173, 1
          %s4440 = smul.addr %s4439, 512
          %s4441 = scalar_lea.vmem [#allocation3], %s4440
        $region86: #{tpu_custom_call.1} parent=81 // pred_fallthru
          _
      $region82: #{tpu_custom_call.1} parent=5 // pred_fallthru
        _
    $region6: #{tpu_custom_call.1} parent=1 // loop_footer
      %s15 = sadd.s32 1, %s11
    $region7: #{tpu_custom_call.1} parent=1 // loop_footer_branch
      %10 = sbr.rel target = $region3
    $region8: #{tpu_custom_call.1} parent=1 // loop_exit
      _

</llo_original>
